<compile_context>
chip_gen: v6e
topology: v6e:2x2x1
jax: 0.10.0
libtpu: 0.0.40
codegen_flags: <defaults>
</compile_context>

<pallas_src>
import jax
import jax.numpy as jnp
from jax.experimental import pallas as pl
from jax.experimental.pallas import tpu as pltpu


def _transpose_tile_kernel(x_ref, o_ref):
    # x_ref: (nb, tC, tHW) -> o_ref: (nb, tHW, tC).  Minor-dim XLU transpose.
    o_ref[...] = jnp.swapaxes(x_ref[...], 1, 2)


def _divisors_desc(n):
    small, large = [], []
    d = 1
    while d * d <= n:
        if n % d == 0:
            small.append(d)
            if d != n // d:
                large.append(n // d)
        d += 1
    return sorted(small + large, reverse=True)


def _round_up(v, m):
    return -(-v // m) * m


def data_flatten(x):
    """Pallas equivalent of `x.flatten(2).transpose(1, 2)` for NCHW input."""
    B, C, H, W = x.shape
    HW = H * W

    # Free metadata-only reshape on the contiguous HBM array.
    x2 = x.reshape(B, C, HW)

    itemsize = jnp.dtype(x.dtype).itemsize
    total_bytes = B * C * HW * itemsize

    # Tiny-input fast path: kernel launch + grid-step overhead would dominate.
    if total_bytes <= (1 << 20):
        return jnp.transpose(x2, (0, 2, 1))

    # ---- generation-aware VMEM budgets ------------------------------------
    try:
        vmem_cap = int(getattr(pltpu.get_tpu_info(), "vmem_capacity_bytes",
                               64 * 1024 * 1024))
    except Exception:
        vmem_cap = 64 * 1024 * 1024
    if vmem_cap >= 100 * 1024 * 1024:        # v5e / v6e: 128 MiB physical VMEM
        vmem_limit = 64 * 1024 * 1024
        pipe_budget = 48 * 1024 * 1024       # 2 x (in + out) padded blocks
        blk_target = 8 * 1024 * 1024         # soft per-block target
    else:                                    # v7x: 64 MiB per TensorCore
        vmem_limit = 40 * 1024 * 1024
        pipe_budget = 32 * 1024 * 1024
        blk_target = 4 * 1024 * 1024

    # Padded VMEM footprint of a (rows, cols) tile: last dim pads to 128
    # lanes, second-to-last to 8/16/32 sublanes depending on dtype width.
    sublane = {4: 8, 2: 16, 1: 32}.get(itemsize, 8)

    def padded(rows, cols):
        return _round_up(rows, sublane) * _round_up(cols, 128) * itemsize

    def fits(nb_, thw_, tc_):
        # Double-buffered input (nb, tC, tHW) + output (nb, tHW, tC).
        return 2 * nb_ * (padded(tc_, thw_) + padded(thw_, tc_)) <= pipe_budget

    # Legal tHW values: 128-multiple divisors of HW, or HW itself (descending).
    if HW % 128 == 0:
        hw_cands = [d * 128 for d in _divisors_desc(HW // 128)]
    else:
        hw_cands = [HW]
    min_thw = hw_cands[-1]

    # ---- channel tile: prefer full C (contiguous output writeback) --------
    if fits(1, min_thw, C):
        tC = C
    else:
        tC = None
        if C % 128 == 0:
            for c in (d * 128 for d in _divisors_desc(C // 128)):
                if fits(1, min_thw, c):
                    tC = c
                    break
        if tC is None:
            tC = C   # pathological shape; accept the VMEM pressure

    # ---- spatial tile: largest legal divisor within the padded budget -----
    tHW = None
    for c in hw_cands:
        if fits(1, c, tC) and padded(tC, c) + padded(c, tC) <= 2 * blk_target:
            tHW = c
            break
    if tHW is None:
        for c in hw_cands:
            if fits(1, c, tC):
                tHW = c
                break
    if tHW is None:
        tHW = min_thw

    # ---- batch folding when a whole per-batch slab fits one block ---------
    nb = 1
    if tC == C and tHW == HW:
        per_pair = padded(C, HW) + padded(HW, C)
        for cand in range(min(B, 32), 1, -1):
            if (B % cand == 0 and fits(cand, HW, C)
                    and cand * per_pair <= 2 * blk_target):
                nb = cand
                break

    grid = (HW // tHW, B // nb, C // tC)   # largest independent axis first

    return pl.pallas_call(
        _transpose_tile_kernel,
        out_shape=jax.ShapeDtypeStruct((B, HW, C), x.dtype),
        grid_spec=pltpu.PrefetchScalarGridSpec(
            num_scalar_prefetch=0,
            grid=grid,
            in_specs=[pl.BlockSpec((nb, tC, tHW), lambda i, b, j: (b, j, i))],
            out_specs=pl.BlockSpec((nb, tHW, tC), lambda i, b, j: (b, i, j)),
        ),
        compiler_params=pltpu.CompilerParams(
            # Every block is independent -> all axes parallel.
            dimension_semantics=("parallel", "parallel", "parallel"),
            vmem_limit_bytes=vmem_limit,
        ),
        cost_estimate=pl.CostEstimate(
            flops=0, transcendentals=0, bytes_accessed=2 * total_bytes),
    )(x2)


if __name__ == "__main__":
    key = jax.random.PRNGKey(0)

    # 1) Primary shape implied by the module's usage (B=2, C=4, 16x16).
    #    Small enough to take the fast path (no kernel launch).
    B, C, H, W = 2, 4, 16, 16
    x = jax.random.normal(key, (B, C, H, W), dtype=jnp.float32)
    out = jax.block_until_ready(data_flatten(x))
    ref = jnp.transpose(x.reshape(B, C, H * W), (0, 2, 1))
    assert out.shape == (B, H * W, C), out.shape
    assert out.dtype == x.dtype
    assert jnp.array_equal(out, ref), "mismatch vs reference (fast path)"

    # 2) Pallas path: full-slab blocks with batch folding (B=4, C=256, 32x32).
    k2 = jax.random.PRNGKey(0)
    B2, C2, H2, W2 = 4, 256, 32, 32
    y = jax.random.normal(k2, (B2, C2, H2, W2), dtype=jnp.float32)
    out2 = jax.block_until_ready(data_flatten(y))
    ref2 = jnp.transpose(y.reshape(B2, C2, H2 * W2), (0, 2, 1))
    assert out2.shape == (B2, H2 * W2, C2), out2.shape
    assert out2.dtype == y.dtype
    assert jnp.array_equal(out2, ref2), "mismatch vs reference (folded path)"

    # 3) Pallas path: narrow-C fallback with padded-budget-capped tHW tiling.
    k3 = jax.random.PRNGKey(0)
    B3, C3, H3, W3 = 2, 4, 256, 256
    z = jax.random.normal(k3, (B3, C3, H3, W3), dtype=jnp.float32)
    out3 = jax.block_until_ready(data_flatten(z))
    ref3 = jnp.transpose(z.reshape(B3, C3, H3 * W3), (0, 2, 1))
    assert out3.shape == (B3, H3 * W3, C3), out3.shape
    assert out3.dtype == z.dtype
    assert jnp.array_equal(out3, ref3), "mismatch vs reference (narrow-C path)"

    print("KERNEL_OK")
</pallas_src>

<mosaic_0001>
module attributes {stable_mosaic.version = 11 : i64} {
  func.func @_transpose_tile_kernel(%arg0: i32, %arg1: i32, %arg2: i32, %arg3: memref<4x256x1024xf32, #tpu.memory_space<vmem>>, %arg4: memref<4x1024x256xf32, #tpu.memory_space<vmem>>) attributes {dimension_semantics = [#tpu.dimension_semantics<parallel>, #tpu.dimension_semantics<parallel>, #tpu.dimension_semantics<parallel>], iteration_bounds = array<i64: 1, 1, 1>, scalar_prefetch = 0 : i64, scratch_operands = 0 : i64, tpu.core_type = #tpu.core_type<tc>, window_params = [{transform_indices = @transform_0, window_bounds = array<i64: 4, 256, 1024>}, {transform_indices = @transform_1, window_bounds = array<i64: 4, 1024, 256>}]} {
    %c0 = arith.constant 0 : index
    %c0_0 = arith.constant 0 : index
    %c0_1 = arith.constant 0 : index
    %0 = vector.load %arg3[%c0, %c0_0, %c0_1] : memref<4x256x1024xf32, #tpu.memory_space<vmem>>, vector<4x256x1024xf32>
    %1 = tpu.transpose %0, [0, 2, 1] : vector<4x256x1024xf32> -> vector<4x1024x256xf32>
    %c0_2 = arith.constant 0 : index
    %c0_3 = arith.constant 0 : index
    %c0_4 = arith.constant 0 : index
    %2 = vector.load %arg4[%c0_2, %c0_3, %c0_4] : memref<4x1024x256xf32, #tpu.memory_space<vmem>>, vector<4x1024x256xf32>
    tpu.vector_store %arg4[%c0_2, %c0_3, %c0_4], %1 {strides = array<i32>} : memref<4x1024x256xf32, #tpu.memory_space<vmem>>, vector<4x1024x256xf32>,
    return
  }
  func.func @transform_0(%arg0: i32, %arg1: i32, %arg2: i32) -> (i32, i32, i32) {
    %c0_i32 = arith.constant 0 : i32
    return %arg1, %arg2, %arg0 : i32, i32, i32
  }
  func.func @transform_1(%arg0: i32, %arg1: i32, %arg2: i32) -> (i32, i32, i32) {
    %c0_i32 = arith.constant 0 : i32
    return %arg1, %arg0, %arg2 : i32, i32, i32
  }
}

</mosaic_0001>

<llo_original>
// kernel: tpu_custom_call.1
$region0: #{tpu_custom_call.1}
  #allocation0 [shape = 'u32[]', space=smem, size = 0x4, offset = 0x4, fixed_abs, tag = 'smem constant byte address 0x4 - core index']
  #allocation1 [shape = 'u32[144,128]{1,0:T(1,128)}', space=vmem, size = 0x12000, scoped, tag = 'internal scratch']
  %s0 = inlined_call_operand.hbm [shape: f32[4,256,1024], index: 0, kind: input, shape index: {}]
  %s1 = inlined_call_operand.hbm [shape: f32[4,1024,256], index: 1, kind: output, shape index: {}]
  %s2 = sld [smem:[#allocation0]]
  $region18: #{tpu_custom_call.1} parent=0
    _
  %s4 = ssub.s32 1, %s2
  %s5 = scalar_select 0, %s4, %s2
  $region1: #{tpu_custom_call.1} parent=0
    #allocation2 [shape = 'u8[4194304]{0}', space=vmem, size = 0x400000, scoped, tag = 'input window, operand 0, single buffered']
    #allocation3 [shape = 's32[1]{0}', space=sflag, size = 0x4, scoped, tag = 'scoped memory for tpu_custom_call.1']
    #allocation4 [shape = 's32[1]{0}', space=sflag, size = 0x4, scoped, tag = 'scoped memory for tpu_custom_call.1']
    #allocation5 [shape = 'u8[4194304]{0}', space=vmem, size = 0x400000, scoped, tag = 'output window, operand 0, single buffered']
    %6 = vsyncpa [#allocation3], 0
    %7 = vsyncpa [#allocation4], 0
    // Predicated region
    $region2: #{tpu_custom_call.1} parent=1 // pred_check
      _
    $region3: #{tpu_custom_call.1} parent=1 // pred_check_branch
      %9 = sbr.rel (0) target = $region5
    $region4: #{tpu_custom_call.1} parent=1 // pred_region
      %s11 = ssub.s32 131072, 131072
      %12 = vsyncadd [#allocation3], %s11
      %s13 = sshll.u32 [#allocation2], 4
      %s14 = int_to_ptr.vmem [resolvable:$true] %s13
      %19 = dma.hbm_to_vmem [thread:$0]  %s0, 131072, %s14, [#allocation3], 1024, 1024, 64
    $region5: #{tpu_custom_call.1} parent=1 // pred_fallthru
      _
    // Predicated region
    $region6: #{tpu_custom_call.1} parent=1 // pred_check
      _
    $region7: #{tpu_custom_call.1} parent=1 // pred_check_branch
      %21 = sbr.rel (0) target = $region9
    $region8: #{tpu_custom_call.1} parent=1 // pred_region
      %22 = dma.done [#allocation3], 131072
    $region9: #{tpu_custom_call.1} parent=1 // pred_fallthru
      _
    %v23 = vld [vmem:[#allocation2] sm:$0xff]
    %v24 = vld [vmem:[#allocation2 + $0x8] sm:$0xff]
    %v25 = vld [vmem:[#allocation2 + $0x10] sm:$0xff]
    %v26 = vld [vmem:[#allocation2 + $0x18] sm:$0xff]
    %v27 = vld [vmem:[#allocation2 + $0x20] sm:$0xff]
    %v28 = vld [vmem:[#allocation2 + $0x28] sm:$0xff]
    %v29 = vld [vmem:[#allocation2 + $0x30] sm:$0xff]
    %v30 = vld [vmem:[#allocation2 + $0x38] sm:$0xff]
    %v31 = vld [vmem:[#allocation2 + $0x40] sm:$0xff]
    %v32 = vld [vmem:[#allocation2 + $0x48] sm:$0xff]
    %v33 = vld [vmem:[#allocation2 + $0x50] sm:$0xff]
    %v34 = vld [vmem:[#allocation2 + $0x58] sm:$0xff]
    %v35 = vld [vmem:[#allocation2 + $0x60] sm:$0xff]
    %v36 = vld [vmem:[#allocation2 + $0x68] sm:$0xff]
    %v37 = vld [vmem:[#allocation2 + $0x70] sm:$0xff]
    %v38 = vld [vmem:[#allocation2 + $0x78] sm:$0xff]
    %v39 = vld [vmem:[#allocation2 + $0x80] sm:$0xff]
    %v40 = vld [vmem:[#allocation2 + $0x88] sm:$0xff]
    %v41 = vld [vmem:[#allocation2 + $0x90] sm:$0xff]
    %v42 = vld [vmem:[#allocation2 + $0x98] sm:$0xff]
    %v43 = vld [vmem:[#allocation2 + $0xa0] sm:$0xff]
    %v44 = vld [vmem:[#allocation2 + $0xa8] sm:$0xff]
    %v45 = vld [vmem:[#allocation2 + $0xb0] sm:$0xff]
    %v46 = vld [vmem:[#allocation2 + $0xb8] sm:$0xff]
    %v47 = vld [vmem:[#allocation2 + $0xc0] sm:$0xff]
    %v48 = vld [vmem:[#allocation2 + $0xc8] sm:$0xff]
    %v49 = vld [vmem:[#allocation2 + $0xd0] sm:$0xff]
    %v50 = vld [vmem:[#allocation2 + $0xd8] sm:$0xff]
    %v51 = vld [vmem:[#allocation2 + $0xe0] sm:$0xff]
    %v52 = vld [vmem:[#allocation2 + $0xe8] sm:$0xff]
    %v53 = vld [vmem:[#allocation2 + $0xf0] sm:$0xff]
    %v54 = vld [vmem:[#allocation2 + $0xf8] sm:$0xff]
    %v55 = vld [vmem:[#allocation2 + $0x100] sm:$0xff]
    %v56 = vld [vmem:[#allocation2 + $0x108] sm:$0xff]
    %v57 = vld [vmem:[#allocation2 + $0x110] sm:$0xff]
    %v58 = vld [vmem:[#allocation2 + $0x118] sm:$0xff]
    %v59 = vld [vmem:[#allocation2 + $0x120] sm:$0xff]
    %v60 = vld [vmem:[#allocation2 + $0x128] sm:$0xff]
    %v61 = vld [vmem:[#allocation2 + $0x130] sm:$0xff]
    %v62 = vld [vmem:[#allocation2 + $0x138] sm:$0xff]
    %v63 = vld [vmem:[#allocation2 + $0x140] sm:$0xff]
    %v64 = vld [vmem:[#allocation2 + $0x148] sm:$0xff]
    %v65 = vld [vmem:[#allocation2 + $0x150] sm:$0xff]
    %v66 = vld [vmem:[#allocation2 + $0x158] sm:$0xff]
    %v67 = vld [vmem:[#allocation2 + $0x160] sm:$0xff]
    %v68 = vld [vmem:[#allocation2 + $0x168] sm:$0xff]
    %v69 = vld [vmem:[#allocation2 + $0x170] sm:$0xff]
    %v70 = vld [vmem:[#allocation2 + $0x178] sm:$0xff]
    %v71 = vld [vmem:[#allocation2 + $0x180] sm:$0xff]
    %v72 = vld [vmem:[#allocation2 + $0x188] sm:$0xff]
    %v73 = vld [vmem:[#allocation2 + $0x190] sm:$0xff]
    %v74 = vld [vmem:[#allocation2 + $0x198] sm:$0xff]
    %v75 = vld [vmem:[#allocation2 + $0x1a0] sm:$0xff]
    %v76 = vld [vmem:[#allocation2 + $0x1a8] sm:$0xff]
    %v77 = vld [vmem:[#allocation2 + $0x1b0] sm:$0xff]
    %v78 = vld [vmem:[#allocation2 + $0x1b8] sm:$0xff]
    %v79 = vld [vmem:[#allocation2 + $0x1c0] sm:$0xff]
    %v80 = vld [vmem:[#allocation2 + $0x1c8] sm:$0xff]
    %v81 = vld [vmem:[#allocation2 + $0x1d0] sm:$0xff]
    %v82 = vld [vmem:[#allocation2 + $0x1d8] sm:$0xff]
    %v83 = vld [vmem:[#allocation2 + $0x1e0] sm:$0xff]
    %v84 = vld [vmem:[#allocation2 + $0x1e8] sm:$0xff]
    %v85 = vld [vmem:[#allocation2 + $0x1f0] sm:$0xff]
    %v86 = vld [vmem:[#allocation2 + $0x1f8] sm:$0xff]
    %v87 = vld [vmem:[#allocation2 + $0x200] sm:$0xff]
    %v88 = vld [vmem:[#allocation2 + $0x208] sm:$0xff]
    %v89 = vld [vmem:[#allocation2 + $0x210] sm:$0xff]
    %v90 = vld [vmem:[#allocation2 + $0x218] sm:$0xff]
    %v91 = vld [vmem:[#allocation2 + $0x220] sm:$0xff]
    %v92 = vld [vmem:[#allocation2 + $0x228] sm:$0xff]
    %v93 = vld [vmem:[#allocation2 + $0x230] sm:$0xff]
    %v94 = vld [vmem:[#allocation2 + $0x238] sm:$0xff]
    %v95 = vld [vmem:[#allocation2 + $0x240] sm:$0xff]
    %v96 = vld [vmem:[#allocation2 + $0x248] sm:$0xff]
    %v97 = vld [vmem:[#allocation2 + $0x250] sm:$0xff]
    %v98 = vld [vmem:[#allocation2 + $0x258] sm:$0xff]
    %v99 = vld [vmem:[#allocation2 + $0x260] sm:$0xff]
    %v100 = vld [vmem:[#allocation2 + $0x268] sm:$0xff]
    %v101 = vld [vmem:[#allocation2 + $0x270] sm:$0xff]
    %v102 = vld [vmem:[#allocation2 + $0x278] sm:$0xff]
    %v103 = vld [vmem:[#allocation2 + $0x280] sm:$0xff]
    %v104 = vld [vmem:[#allocation2 + $0x288] sm:$0xff]
    %v105 = vld [vmem:[#allocation2 + $0x290] sm:$0xff]
    %v106 = vld [vmem:[#allocation2 + $0x298] sm:$0xff]
    %v107 = vld [vmem:[#allocation2 + $0x2a0] sm:$0xff]
    %v108 = vld [vmem:[#allocation2 + $0x2a8] sm:$0xff]
    %v109 = vld [vmem:[#allocation2 + $0x2b0] sm:$0xff]
    %v110 = vld [vmem:[#allocation2 + $0x2b8] sm:$0xff]
    %v111 = vld [vmem:[#allocation2 + $0x2c0] sm:$0xff]
    %v112 = vld [vmem:[#allocation2 + $0x2c8] sm:$0xff]
    %v113 = vld [vmem:[#allocation2 + $0x2d0] sm:$0xff]
    %v114 = vld [vmem:[#allocation2 + $0x2d8] sm:$0xff]
    %v115 = vld [vmem:[#allocation2 + $0x2e0] sm:$0xff]
    %v116 = vld [vmem:[#allocation2 + $0x2e8] sm:$0xff]
    %v117 = vld [vmem:[#allocation2 + $0x2f0] sm:$0xff]
    %v118 = vld [vmem:[#allocation2 + $0x2f8] sm:$0xff]
    %v119 = vld [vmem:[#allocation2 + $0x300] sm:$0xff]
    %v120 = vld [vmem:[#allocation2 + $0x308] sm:$0xff]
    %v121 = vld [vmem:[#allocation2 + $0x310] sm:$0xff]
    %v122 = vld [vmem:[#allocation2 + $0x318] sm:$0xff]
    %v123 = vld [vmem:[#allocation2 + $0x320] sm:$0xff]
    %v124 = vld [vmem:[#allocation2 + $0x328] sm:$0xff]
    %v125 = vld [vmem:[#allocation2 + $0x330] sm:$0xff]
    %v126 = vld [vmem:[#allocation2 + $0x338] sm:$0xff]
    %v127 = vld [vmem:[#allocation2 + $0x340] sm:$0xff]
    %v128 = vld [vmem:[#allocation2 + $0x348] sm:$0xff]
    %v129 = vld [vmem:[#allocation2 + $0x350] sm:$0xff]
    %v130 = vld [vmem:[#allocation2 + $0x358] sm:$0xff]
    %v131 = vld [vmem:[#allocation2 + $0x360] sm:$0xff]
    %v132 = vld [vmem:[#allocation2 + $0x368] sm:$0xff]
    %v133 = vld [vmem:[#allocation2 + $0x370] sm:$0xff]
    %v134 = vld [vmem:[#allocation2 + $0x378] sm:$0xff]
    %v135 = vld [vmem:[#allocation2 + $0x380] sm:$0xff]
    %v136 = vld [vmem:[#allocation2 + $0x388] sm:$0xff]
    %v137 = vld [vmem:[#allocation2 + $0x390] sm:$0xff]
    %v138 = vld [vmem:[#allocation2 + $0x398] sm:$0xff]
    %v139 = vld [vmem:[#allocation2 + $0x3a0] sm:$0xff]
    %v140 = vld [vmem:[#allocation2 + $0x3a8] sm:$0xff]
    %v141 = vld [vmem:[#allocation2 + $0x3b0] sm:$0xff]
    %v142 = vld [vmem:[#allocation2 + $0x3b8] sm:$0xff]
    %v143 = vld [vmem:[#allocation2 + $0x3c0] sm:$0xff]
    %v144 = vld [vmem:[#allocation2 + $0x3c8] sm:$0xff]
    %v145 = vld [vmem:[#allocation2 + $0x3d0] sm:$0xff]
    %v146 = vld [vmem:[#allocation2 + $0x3d8] sm:$0xff]
    %v147 = vld [vmem:[#allocation2 + $0x3e0] sm:$0xff]
    %v148 = vld [vmem:[#allocation2 + $0x3e8] sm:$0xff]
    %v149 = vld [vmem:[#allocation2 + $0x3f0] sm:$0xff]
    %v150 = vld [vmem:[#allocation2 + $0x3f8] sm:$0xff]
    %v151 = vld [vmem:[#allocation2 + $0x400] sm:$0xff]
    %v152 = vld [vmem:[#allocation2 + $0x408] sm:$0xff]
    %v153 = vld [vmem:[#allocation2 + $0x410] sm:$0xff]
    %v154 = vld [vmem:[#allocation2 + $0x418] sm:$0xff]
    %v155 = vld [vmem:[#allocation2 + $0x420] sm:$0xff]
    %v156 = vld [vmem:[#allocation2 + $0x428] sm:$0xff]
    %v157 = vld [vmem:[#allocation2 + $0x430] sm:$0xff]
    %v158 = vld [vmem:[#allocation2 + $0x438] sm:$0xff]
    %v159 = vld [vmem:[#allocation2 + $0x440] sm:$0xff]
    %v160 = vld [vmem:[#allocation2 + $0x448] sm:$0xff]
    %v161 = vld [vmem:[#allocation2 + $0x450] sm:$0xff]
    %v162 = vld [vmem:[#allocation2 + $0x458] sm:$0xff]
    %v163 = vld [vmem:[#allocation2 + $0x460] sm:$0xff]
    %v164 = vld [vmem:[#allocation2 + $0x468] sm:$0xff]
    %v165 = vld [vmem:[#allocation2 + $0x470] sm:$0xff]
    %v166 = vld [vmem:[#allocation2 + $0x478] sm:$0xff]
    %v167 = vld [vmem:[#allocation2 + $0x480] sm:$0xff]
    %v168 = vld [vmem:[#allocation2 + $0x488] sm:$0xff]
    %v169 = vld [vmem:[#allocation2 + $0x490] sm:$0xff]
    %v170 = vld [vmem:[#allocation2 + $0x498] sm:$0xff]
    %v171 = vld [vmem:[#allocation2 + $0x4a0] sm:$0xff]
    %v172 = vld [vmem:[#allocation2 + $0x4a8] sm:$0xff]
    %v173 = vld [vmem:[#allocation2 + $0x4b0] sm:$0xff]
    %v174 = vld [vmem:[#allocation2 + $0x4b8] sm:$0xff]
    %v175 = vld [vmem:[#allocation2 + $0x4c0] sm:$0xff]
    %v176 = vld [vmem:[#allocation2 + $0x4c8] sm:$0xff]
    %v177 = vld [vmem:[#allocation2 + $0x4d0] sm:$0xff]
    %v178 = vld [vmem:[#allocation2 + $0x4d8] sm:$0xff]
    %v179 = vld [vmem:[#allocation2 + $0x4e0] sm:$0xff]
    %v180 = vld [vmem:[#allocation2 + $0x4e8] sm:$0xff]
    %v181 = vld [vmem:[#allocation2 + $0x4f0] sm:$0xff]
    %v182 = vld [vmem:[#allocation2 + $0x4f8] sm:$0xff]
    %v183 = vld [vmem:[#allocation2 + $0x500] sm:$0xff]
    %v184 = vld [vmem:[#allocation2 + $0x508] sm:$0xff]
    %v185 = vld [vmem:[#allocation2 + $0x510] sm:$0xff]
    %v186 = vld [vmem:[#allocation2 + $0x518] sm:$0xff]
    %v187 = vld [vmem:[#allocation2 + $0x520] sm:$0xff]
    %v188 = vld [vmem:[#allocation2 + $0x528] sm:$0xff]
    %v189 = vld [vmem:[#allocation2 + $0x530] sm:$0xff]
    %v190 = vld [vmem:[#allocation2 + $0x538] sm:$0xff]
    %v191 = vld [vmem:[#allocation2 + $0x540] sm:$0xff]
    %v192 = vld [vmem:[#allocation2 + $0x548] sm:$0xff]
    %v193 = vld [vmem:[#allocation2 + $0x550] sm:$0xff]
    %v194 = vld [vmem:[#allocation2 + $0x558] sm:$0xff]
    %v195 = vld [vmem:[#allocation2 + $0x560] sm:$0xff]
    %v196 = vld [vmem:[#allocation2 + $0x568] sm:$0xff]
    %v197 = vld [vmem:[#allocation2 + $0x570] sm:$0xff]
    %v198 = vld [vmem:[#allocation2 + $0x578] sm:$0xff]
    %v199 = vld [vmem:[#allocation2 + $0x580] sm:$0xff]
    %v200 = vld [vmem:[#allocation2 + $0x588] sm:$0xff]
    %v201 = vld [vmem:[#allocation2 + $0x590] sm:$0xff]
    %v202 = vld [vmem:[#allocation2 + $0x598] sm:$0xff]
    %v203 = vld [vmem:[#allocation2 + $0x5a0] sm:$0xff]
    %v204 = vld [vmem:[#allocation2 + $0x5a8] sm:$0xff]
    %v205 = vld [vmem:[#allocation2 + $0x5b0] sm:$0xff]
    %v206 = vld [vmem:[#allocation2 + $0x5b8] sm:$0xff]
    %v207 = vld [vmem:[#allocation2 + $0x5c0] sm:$0xff]
    %v208 = vld [vmem:[#allocation2 + $0x5c8] sm:$0xff]
    %v209 = vld [vmem:[#allocation2 + $0x5d0] sm:$0xff]
    %v210 = vld [vmem:[#allocation2 + $0x5d8] sm:$0xff]
    %v211 = vld [vmem:[#allocation2 + $0x5e0] sm:$0xff]
    %v212 = vld [vmem:[#allocation2 + $0x5e8] sm:$0xff]
    %v213 = vld [vmem:[#allocation2 + $0x5f0] sm:$0xff]
    %v214 = vld [vmem:[#allocation2 + $0x5f8] sm:$0xff]
    %v215 = vld [vmem:[#allocation2 + $0x600] sm:$0xff]
    %v216 = vld [vmem:[#allocation2 + $0x608] sm:$0xff]
    %v217 = vld [vmem:[#allocation2 + $0x610] sm:$0xff]
    %v218 = vld [vmem:[#allocation2 + $0x618] sm:$0xff]
    %v219 = vld [vmem:[#allocation2 + $0x620] sm:$0xff]
    %v220 = vld [vmem:[#allocation2 + $0x628] sm:$0xff]
    %v221 = vld [vmem:[#allocation2 + $0x630] sm:$0xff]
    %v222 = vld [vmem:[#allocation2 + $0x638] sm:$0xff]
    %v223 = vld [vmem:[#allocation2 + $0x640] sm:$0xff]
    %v224 = vld [vmem:[#allocation2 + $0x648] sm:$0xff]
    %v225 = vld [vmem:[#allocation2 + $0x650] sm:$0xff]
    %v226 = vld [vmem:[#allocation2 + $0x658] sm:$0xff]
    %v227 = vld [vmem:[#allocation2 + $0x660] sm:$0xff]
    %v228 = vld [vmem:[#allocation2 + $0x668] sm:$0xff]
    %v229 = vld [vmem:[#allocation2 + $0x670] sm:$0xff]
    %v230 = vld [vmem:[#allocation2 + $0x678] sm:$0xff]
    %v231 = vld [vmem:[#allocation2 + $0x680] sm:$0xff]
    %v232 = vld [vmem:[#allocation2 + $0x688] sm:$0xff]
    %v233 = vld [vmem:[#allocation2 + $0x690] sm:$0xff]
    %v234 = vld [vmem:[#allocation2 + $0x698] sm:$0xff]
    %v235 = vld [vmem:[#allocation2 + $0x6a0] sm:$0xff]
    %v236 = vld [vmem:[#allocation2 + $0x6a8] sm:$0xff]
    %v237 = vld [vmem:[#allocation2 + $0x6b0] sm:$0xff]
    %v238 = vld [vmem:[#allocation2 + $0x6b8] sm:$0xff]
    %v239 = vld [vmem:[#allocation2 + $0x6c0] sm:$0xff]
    %v240 = vld [vmem:[#allocation2 + $0x6c8] sm:$0xff]
    %v241 = vld [vmem:[#allocation2 + $0x6d0] sm:$0xff]
    %v242 = vld [vmem:[#allocation2 + $0x6d8] sm:$0xff]
    %v243 = vld [vmem:[#allocation2 + $0x6e0] sm:$0xff]
    %v244 = vld [vmem:[#allocation2 + $0x6e8] sm:$0xff]
    %v245 = vld [vmem:[#allocation2 + $0x6f0] sm:$0xff]
    %v246 = vld [vmem:[#allocation2 + $0x6f8] sm:$0xff]
    %v247 = vld [vmem:[#allocation2 + $0x700] sm:$0xff]
    %v248 = vld [vmem:[#allocation2 + $0x708] sm:$0xff]
    %v249 = vld [vmem:[#allocation2 + $0x710] sm:$0xff]
    %v250 = vld [vmem:[#allocation2 + $0x718] sm:$0xff]
    %v251 = vld [vmem:[#allocation2 + $0x720] sm:$0xff]
    %v252 = vld [vmem:[#allocation2 + $0x728] sm:$0xff]
    %v253 = vld [vmem:[#allocation2 + $0x730] sm:$0xff]
    %v254 = vld [vmem:[#allocation2 + $0x738] sm:$0xff]
    %v255 = vld [vmem:[#allocation2 + $0x740] sm:$0xff]
    %v256 = vld [vmem:[#allocation2 + $0x748] sm:$0xff]
    %v257 = vld [vmem:[#allocation2 + $0x750] sm:$0xff]
    %v258 = vld [vmem:[#allocation2 + $0x758] sm:$0xff]
    %v259 = vld [vmem:[#allocation2 + $0x760] sm:$0xff]
    %v260 = vld [vmem:[#allocation2 + $0x768] sm:$0xff]
    %v261 = vld [vmem:[#allocation2 + $0x770] sm:$0xff]
    %v262 = vld [vmem:[#allocation2 + $0x778] sm:$0xff]
    %v263 = vld [vmem:[#allocation2 + $0x780] sm:$0xff]
    %v264 = vld [vmem:[#allocation2 + $0x788] sm:$0xff]
    %v265 = vld [vmem:[#allocation2 + $0x790] sm:$0xff]
    %v266 = vld [vmem:[#allocation2 + $0x798] sm:$0xff]
    %v267 = vld [vmem:[#allocation2 + $0x7a0] sm:$0xff]
    %v268 = vld [vmem:[#allocation2 + $0x7a8] sm:$0xff]
    %v269 = vld [vmem:[#allocation2 + $0x7b0] sm:$0xff]
    %v270 = vld [vmem:[#allocation2 + $0x7b8] sm:$0xff]
    %v271 = vld [vmem:[#allocation2 + $0x7c0] sm:$0xff]
    %v272 = vld [vmem:[#allocation2 + $0x7c8] sm:$0xff]
    %v273 = vld [vmem:[#allocation2 + $0x7d0] sm:$0xff]
    %v274 = vld [vmem:[#allocation2 + $0x7d8] sm:$0xff]
    %v275 = vld [vmem:[#allocation2 + $0x7e0] sm:$0xff]
    %v276 = vld [vmem:[#allocation2 + $0x7e8] sm:$0xff]
    %v277 = vld [vmem:[#allocation2 + $0x7f0] sm:$0xff]
    %v278 = vld [vmem:[#allocation2 + $0x7f8] sm:$0xff]
    %v279 = vld [vmem:[#allocation2 + $0x800] sm:$0xff]
    %v280 = vld [vmem:[#allocation2 + $0x808] sm:$0xff]
    %v281 = vld [vmem:[#allocation2 + $0x810] sm:$0xff]
    %v282 = vld [vmem:[#allocation2 + $0x818] sm:$0xff]
    %v283 = vld [vmem:[#allocation2 + $0x820] sm:$0xff]
    %v284 = vld [vmem:[#allocation2 + $0x828] sm:$0xff]
    %v285 = vld [vmem:[#allocation2 + $0x830] sm:$0xff]
    %v286 = vld [vmem:[#allocation2 + $0x838] sm:$0xff]
    %v287 = vld [vmem:[#allocation2 + $0x840] sm:$0xff]
    %v288 = vld [vmem:[#allocation2 + $0x848] sm:$0xff]
    %v289 = vld [vmem:[#allocation2 + $0x850] sm:$0xff]
    %v290 = vld [vmem:[#allocation2 + $0x858] sm:$0xff]
    %v291 = vld [vmem:[#allocation2 + $0x860] sm:$0xff]
    %v292 = vld [vmem:[#allocation2 + $0x868] sm:$0xff]
    %v293 = vld [vmem:[#allocation2 + $0x870] sm:$0xff]
    %v294 = vld [vmem:[#allocation2 + $0x878] sm:$0xff]
    %v295 = vld [vmem:[#allocation2 + $0x880] sm:$0xff]
    %v296 = vld [vmem:[#allocation2 + $0x888] sm:$0xff]
    %v297 = vld [vmem:[#allocation2 + $0x890] sm:$0xff]
    %v298 = vld [vmem:[#allocation2 + $0x898] sm:$0xff]
    %v299 = vld [vmem:[#allocation2 + $0x8a0] sm:$0xff]
    %v300 = vld [vmem:[#allocation2 + $0x8a8] sm:$0xff]
    %v301 = vld [vmem:[#allocation2 + $0x8b0] sm:$0xff]
    %v302 = vld [vmem:[#allocation2 + $0x8b8] sm:$0xff]
    %v303 = vld [vmem:[#allocation2 + $0x8c0] sm:$0xff]
    %v304 = vld [vmem:[#allocation2 + $0x8c8] sm:$0xff]
    %v305 = vld [vmem:[#allocation2 + $0x8d0] sm:$0xff]
    %v306 = vld [vmem:[#allocation2 + $0x8d8] sm:$0xff]
    %v307 = vld [vmem:[#allocation2 + $0x8e0] sm:$0xff]
    %v308 = vld [vmem:[#allocation2 + $0x8e8] sm:$0xff]
    %v309 = vld [vmem:[#allocation2 + $0x8f0] sm:$0xff]
    %v310 = vld [vmem:[#allocation2 + $0x8f8] sm:$0xff]
    %v311 = vld [vmem:[#allocation2 + $0x900] sm:$0xff]
    %v312 = vld [vmem:[#allocation2 + $0x908] sm:$0xff]
    %v313 = vld [vmem:[#allocation2 + $0x910] sm:$0xff]
    %v314 = vld [vmem:[#allocation2 + $0x918] sm:$0xff]
    %v315 = vld [vmem:[#allocation2 + $0x920] sm:$0xff]
    %v316 = vld [vmem:[#allocation2 + $0x928] sm:$0xff]
    %v317 = vld [vmem:[#allocation2 + $0x930] sm:$0xff]
    %v318 = vld [vmem:[#allocation2 + $0x938] sm:$0xff]
    %v319 = vld [vmem:[#allocation2 + $0x940] sm:$0xff]
    %v320 = vld [vmem:[#allocation2 + $0x948] sm:$0xff]
    %v321 = vld [vmem:[#allocation2 + $0x950] sm:$0xff]
    %v322 = vld [vmem:[#allocation2 + $0x958] sm:$0xff]
    %v323 = vld [vmem:[#allocation2 + $0x960] sm:$0xff]
    %v324 = vld [vmem:[#allocation2 + $0x968] sm:$0xff]
    %v325 = vld [vmem:[#allocation2 + $0x970] sm:$0xff]
    %v326 = vld [vmem:[#allocation2 + $0x978] sm:$0xff]
    %v327 = vld [vmem:[#allocation2 + $0x980] sm:$0xff]
    %v328 = vld [vmem:[#allocation2 + $0x988] sm:$0xff]
    %v329 = vld [vmem:[#allocation2 + $0x990] sm:$0xff]
    %v330 = vld [vmem:[#allocation2 + $0x998] sm:$0xff]
    %v331 = vld [vmem:[#allocation2 + $0x9a0] sm:$0xff]
    %v332 = vld [vmem:[#allocation2 + $0x9a8] sm:$0xff]
    %v333 = vld [vmem:[#allocation2 + $0x9b0] sm:$0xff]
    %v334 = vld [vmem:[#allocation2 + $0x9b8] sm:$0xff]
    %v335 = vld [vmem:[#allocation2 + $0x9c0] sm:$0xff]
    %v336 = vld [vmem:[#allocation2 + $0x9c8] sm:$0xff]
    %v337 = vld [vmem:[#allocation2 + $0x9d0] sm:$0xff]
    %v338 = vld [vmem:[#allocation2 + $0x9d8] sm:$0xff]
    %v339 = vld [vmem:[#allocation2 + $0x9e0] sm:$0xff]
    %v340 = vld [vmem:[#allocation2 + $0x9e8] sm:$0xff]
    %v341 = vld [vmem:[#allocation2 + $0x9f0] sm:$0xff]
    %v342 = vld [vmem:[#allocation2 + $0x9f8] sm:$0xff]
    %v343 = vld [vmem:[#allocation2 + $0xa00] sm:$0xff]
    %v344 = vld [vmem:[#allocation2 + $0xa08] sm:$0xff]
    %v345 = vld [vmem:[#allocation2 + $0xa10] sm:$0xff]
    %v346 = vld [vmem:[#allocation2 + $0xa18] sm:$0xff]
    %v347 = vld [vmem:[#allocation2 + $0xa20] sm:$0xff]
    %v348 = vld [vmem:[#allocation2 + $0xa28] sm:$0xff]
    %v349 = vld [vmem:[#allocation2 + $0xa30] sm:$0xff]
    %v350 = vld [vmem:[#allocation2 + $0xa38] sm:$0xff]
    %v351 = vld [vmem:[#allocation2 + $0xa40] sm:$0xff]
    %v352 = vld [vmem:[#allocation2 + $0xa48] sm:$0xff]
    %v353 = vld [vmem:[#allocation2 + $0xa50] sm:$0xff]
    %v354 = vld [vmem:[#allocation2 + $0xa58] sm:$0xff]
    %v355 = vld [vmem:[#allocation2 + $0xa60] sm:$0xff]
    %v356 = vld [vmem:[#allocation2 + $0xa68] sm:$0xff]
    %v357 = vld [vmem:[#allocation2 + $0xa70] sm:$0xff]
    %v358 = vld [vmem:[#allocation2 + $0xa78] sm:$0xff]
    %v359 = vld [vmem:[#allocation2 + $0xa80] sm:$0xff]
    %v360 = vld [vmem:[#allocation2 + $0xa88] sm:$0xff]
    %v361 = vld [vmem:[#allocation2 + $0xa90] sm:$0xff]
    %v362 = vld [vmem:[#allocation2 + $0xa98] sm:$0xff]
    %v363 = vld [vmem:[#allocation2 + $0xaa0] sm:$0xff]
    %v364 = vld [vmem:[#allocation2 + $0xaa8] sm:$0xff]
    %v365 = vld [vmem:[#allocation2 + $0xab0] sm:$0xff]
    %v366 = vld [vmem:[#allocation2 + $0xab8] sm:$0xff]
    %v367 = vld [vmem:[#allocation2 + $0xac0] sm:$0xff]
    %v368 = vld [vmem:[#allocation2 + $0xac8] sm:$0xff]
    %v369 = vld [vmem:[#allocation2 + $0xad0] sm:$0xff]
    %v370 = vld [vmem:[#allocation2 + $0xad8] sm:$0xff]
    %v371 = vld [vmem:[#allocation2 + $0xae0] sm:$0xff]
    %v372 = vld [vmem:[#allocation2 + $0xae8] sm:$0xff]
    %v373 = vld [vmem:[#allocation2 + $0xaf0] sm:$0xff]
    %v374 = vld [vmem:[#allocation2 + $0xaf8] sm:$0xff]
    %v375 = vld [vmem:[#allocation2 + $0xb00] sm:$0xff]
    %v376 = vld [vmem:[#allocation2 + $0xb08] sm:$0xff]
    %v377 = vld [vmem:[#allocation2 + $0xb10] sm:$0xff]
    %v378 = vld [vmem:[#allocation2 + $0xb18] sm:$0xff]
    %v379 = vld [vmem:[#allocation2 + $0xb20] sm:$0xff]
    %v380 = vld [vmem:[#allocation2 + $0xb28] sm:$0xff]
    %v381 = vld [vmem:[#allocation2 + $0xb30] sm:$0xff]
    %v382 = vld [vmem:[#allocation2 + $0xb38] sm:$0xff]
    %v383 = vld [vmem:[#allocation2 + $0xb40] sm:$0xff]
    %v384 = vld [vmem:[#allocation2 + $0xb48] sm:$0xff]
    %v385 = vld [vmem:[#allocation2 + $0xb50] sm:$0xff]
    %v386 = vld [vmem:[#allocation2 + $0xb58] sm:$0xff]
    %v387 = vld [vmem:[#allocation2 + $0xb60] sm:$0xff]
    %v388 = vld [vmem:[#allocation2 + $0xb68] sm:$0xff]
    %v389 = vld [vmem:[#allocation2 + $0xb70] sm:$0xff]
    %v390 = vld [vmem:[#allocation2 + $0xb78] sm:$0xff]
    %v391 = vld [vmem:[#allocation2 + $0xb80] sm:$0xff]
    %v392 = vld [vmem:[#allocation2 + $0xb88] sm:$0xff]
    %v393 = vld [vmem:[#allocation2 + $0xb90] sm:$0xff]
    %v394 = vld [vmem:[#allocation2 + $0xb98] sm:$0xff]
    %v395 = vld [vmem:[#allocation2 + $0xba0] sm:$0xff]
    %v396 = vld [vmem:[#allocation2 + $0xba8] sm:$0xff]
    %v397 = vld [vmem:[#allocation2 + $0xbb0] sm:$0xff]
    %v398 = vld [vmem:[#allocation2 + $0xbb8] sm:$0xff]
    %v399 = vld [vmem:[#allocation2 + $0xbc0] sm:$0xff]
    %v400 = vld [vmem:[#allocation2 + $0xbc8] sm:$0xff]
    %v401 = vld [vmem:[#allocation2 + $0xbd0] sm:$0xff]
    %v402 = vld [vmem:[#allocation2 + $0xbd8] sm:$0xff]
    %v403 = vld [vmem:[#allocation2 + $0xbe0] sm:$0xff]
    %v404 = vld [vmem:[#allocation2 + $0xbe8] sm:$0xff]
    %v405 = vld [vmem:[#allocation2 + $0xbf0] sm:$0xff]
    %v406 = vld [vmem:[#allocation2 + $0xbf8] sm:$0xff]
    %v407 = vld [vmem:[#allocation2 + $0xc00] sm:$0xff]
    %v408 = vld [vmem:[#allocation2 + $0xc08] sm:$0xff]
    %v409 = vld [vmem:[#allocation2 + $0xc10] sm:$0xff]
    %v410 = vld [vmem:[#allocation2 + $0xc18] sm:$0xff]
    %v411 = vld [vmem:[#allocation2 + $0xc20] sm:$0xff]
    %v412 = vld [vmem:[#allocation2 + $0xc28] sm:$0xff]
    %v413 = vld [vmem:[#allocation2 + $0xc30] sm:$0xff]
    %v414 = vld [vmem:[#allocation2 + $0xc38] sm:$0xff]
    %v415 = vld [vmem:[#allocation2 + $0xc40] sm:$0xff]
    %v416 = vld [vmem:[#allocation2 + $0xc48] sm:$0xff]
    %v417 = vld [vmem:[#allocation2 + $0xc50] sm:$0xff]
    %v418 = vld [vmem:[#allocation2 + $0xc58] sm:$0xff]
    %v419 = vld [vmem:[#allocation2 + $0xc60] sm:$0xff]
    %v420 = vld [vmem:[#allocation2 + $0xc68] sm:$0xff]
    %v421 = vld [vmem:[#allocation2 + $0xc70] sm:$0xff]
    %v422 = vld [vmem:[#allocation2 + $0xc78] sm:$0xff]
    %v423 = vld [vmem:[#allocation2 + $0xc80] sm:$0xff]
    %v424 = vld [vmem:[#allocation2 + $0xc88] sm:$0xff]
    %v425 = vld [vmem:[#allocation2 + $0xc90] sm:$0xff]
    %v426 = vld [vmem:[#allocation2 + $0xc98] sm:$0xff]
    %v427 = vld [vmem:[#allocation2 + $0xca0] sm:$0xff]
    %v428 = vld [vmem:[#allocation2 + $0xca8] sm:$0xff]
    %v429 = vld [vmem:[#allocation2 + $0xcb0] sm:$0xff]
    %v430 = vld [vmem:[#allocation2 + $0xcb8] sm:$0xff]
    %v431 = vld [vmem:[#allocation2 + $0xcc0] sm:$0xff]
    %v432 = vld [vmem:[#allocation2 + $0xcc8] sm:$0xff]
    %v433 = vld [vmem:[#allocation2 + $0xcd0] sm:$0xff]
    %v434 = vld [vmem:[#allocation2 + $0xcd8] sm:$0xff]
    %v435 = vld [vmem:[#allocation2 + $0xce0] sm:$0xff]
    %v436 = vld [vmem:[#allocation2 + $0xce8] sm:$0xff]
    %v437 = vld [vmem:[#allocation2 + $0xcf0] sm:$0xff]
    %v438 = vld [vmem:[#allocation2 + $0xcf8] sm:$0xff]
    %v439 = vld [vmem:[#allocation2 + $0xd00] sm:$0xff]
    %v440 = vld [vmem:[#allocation2 + $0xd08] sm:$0xff]
    %v441 = vld [vmem:[#allocation2 + $0xd10] sm:$0xff]
    %v442 = vld [vmem:[#allocation2 + $0xd18] sm:$0xff]
    %v443 = vld [vmem:[#allocation2 + $0xd20] sm:$0xff]
    %v444 = vld [vmem:[#allocation2 + $0xd28] sm:$0xff]
    %v445 = vld [vmem:[#allocation2 + $0xd30] sm:$0xff]
    %v446 = vld [vmem:[#allocation2 + $0xd38] sm:$0xff]
    %v447 = vld [vmem:[#allocation2 + $0xd40] sm:$0xff]
    %v448 = vld [vmem:[#allocation2 + $0xd48] sm:$0xff]
    %v449 = vld [vmem:[#allocation2 + $0xd50] sm:$0xff]
    %v450 = vld [vmem:[#allocation2 + $0xd58] sm:$0xff]
    %v451 = vld [vmem:[#allocation2 + $0xd60] sm:$0xff]
    %v452 = vld [vmem:[#allocation2 + $0xd68] sm:$0xff]
    %v453 = vld [vmem:[#allocation2 + $0xd70] sm:$0xff]
    %v454 = vld [vmem:[#allocation2 + $0xd78] sm:$0xff]
    %v455 = vld [vmem:[#allocation2 + $0xd80] sm:$0xff]
    %v456 = vld [vmem:[#allocation2 + $0xd88] sm:$0xff]
    %v457 = vld [vmem:[#allocation2 + $0xd90] sm:$0xff]
    %v458 = vld [vmem:[#allocation2 + $0xd98] sm:$0xff]
    %v459 = vld [vmem:[#allocation2 + $0xda0] sm:$0xff]
    %v460 = vld [vmem:[#allocation2 + $0xda8] sm:$0xff]
    %v461 = vld [vmem:[#allocation2 + $0xdb0] sm:$0xff]
    %v462 = vld [vmem:[#allocation2 + $0xdb8] sm:$0xff]
    %v463 = vld [vmem:[#allocation2 + $0xdc0] sm:$0xff]
    %v464 = vld [vmem:[#allocation2 + $0xdc8] sm:$0xff]
    %v465 = vld [vmem:[#allocation2 + $0xdd0] sm:$0xff]
    %v466 = vld [vmem:[#allocation2 + $0xdd8] sm:$0xff]
    %v467 = vld [vmem:[#allocation2 + $0xde0] sm:$0xff]
    %v468 = vld [vmem:[#allocation2 + $0xde8] sm:$0xff]
    %v469 = vld [vmem:[#allocation2 + $0xdf0] sm:$0xff]
    %v470 = vld [vmem:[#allocation2 + $0xdf8] sm:$0xff]
    %v471 = vld [vmem:[#allocation2 + $0xe00] sm:$0xff]
    %v472 = vld [vmem:[#allocation2 + $0xe08] sm:$0xff]
    %v473 = vld [vmem:[#allocation2 + $0xe10] sm:$0xff]
    %v474 = vld [vmem:[#allocation2 + $0xe18] sm:$0xff]
    %v475 = vld [vmem:[#allocation2 + $0xe20] sm:$0xff]
    %v476 = vld [vmem:[#allocation2 + $0xe28] sm:$0xff]
    %v477 = vld [vmem:[#allocation2 + $0xe30] sm:$0xff]
    %v478 = vld [vmem:[#allocation2 + $0xe38] sm:$0xff]
    %v479 = vld [vmem:[#allocation2 + $0xe40] sm:$0xff]
    %v480 = vld [vmem:[#allocation2 + $0xe48] sm:$0xff]
    %v481 = vld [vmem:[#allocation2 + $0xe50] sm:$0xff]
    %v482 = vld [vmem:[#allocation2 + $0xe58] sm:$0xff]
    %v483 = vld [vmem:[#allocation2 + $0xe60] sm:$0xff]
    %v484 = vld [vmem:[#allocation2 + $0xe68] sm:$0xff]
    %v485 = vld [vmem:[#allocation2 + $0xe70] sm:$0xff]
    %v486 = vld [vmem:[#allocation2 + $0xe78] sm:$0xff]
    %v487 = vld [vmem:[#allocation2 + $0xe80] sm:$0xff]
    %v488 = vld [vmem:[#allocation2 + $0xe88] sm:$0xff]
    %v489 = vld [vmem:[#allocation2 + $0xe90] sm:$0xff]
    %v490 = vld [vmem:[#allocation2 + $0xe98] sm:$0xff]
    %v491 = vld [vmem:[#allocation2 + $0xea0] sm:$0xff]
    %v492 = vld [vmem:[#allocation2 + $0xea8] sm:$0xff]
    %v493 = vld [vmem:[#allocation2 + $0xeb0] sm:$0xff]
    %v494 = vld [vmem:[#allocation2 + $0xeb8] sm:$0xff]
    %v495 = vld [vmem:[#allocation2 + $0xec0] sm:$0xff]
    %v496 = vld [vmem:[#allocation2 + $0xec8] sm:$0xff]
    %v497 = vld [vmem:[#allocation2 + $0xed0] sm:$0xff]
    %v498 = vld [vmem:[#allocation2 + $0xed8] sm:$0xff]
    %v499 = vld [vmem:[#allocation2 + $0xee0] sm:$0xff]
    %v500 = vld [vmem:[#allocation2 + $0xee8] sm:$0xff]
    %v501 = vld [vmem:[#allocation2 + $0xef0] sm:$0xff]
    %v502 = vld [vmem:[#allocation2 + $0xef8] sm:$0xff]
    %v503 = vld [vmem:[#allocation2 + $0xf00] sm:$0xff]
    %v504 = vld [vmem:[#allocation2 + $0xf08] sm:$0xff]
    %v505 = vld [vmem:[#allocation2 + $0xf10] sm:$0xff]
    %v506 = vld [vmem:[#allocation2 + $0xf18] sm:$0xff]
    %v507 = vld [vmem:[#allocation2 + $0xf20] sm:$0xff]
    %v508 = vld [vmem:[#allocation2 + $0xf28] sm:$0xff]
    %v509 = vld [vmem:[#allocation2 + $0xf30] sm:$0xff]
    %v510 = vld [vmem:[#allocation2 + $0xf38] sm:$0xff]
    %v511 = vld [vmem:[#allocation2 + $0xf40] sm:$0xff]
    %v512 = vld [vmem:[#allocation2 + $0xf48] sm:$0xff]
    %v513 = vld [vmem:[#allocation2 + $0xf50] sm:$0xff]
    %v514 = vld [vmem:[#allocation2 + $0xf58] sm:$0xff]
    %v515 = vld [vmem:[#allocation2 + $0xf60] sm:$0xff]
    %v516 = vld [vmem:[#allocation2 + $0xf68] sm:$0xff]
    %v517 = vld [vmem:[#allocation2 + $0xf70] sm:$0xff]
    %v518 = vld [vmem:[#allocation2 + $0xf78] sm:$0xff]
    %v519 = vld [vmem:[#allocation2 + $0xf80] sm:$0xff]
    %v520 = vld [vmem:[#allocation2 + $0xf88] sm:$0xff]
    %v521 = vld [vmem:[#allocation2 + $0xf90] sm:$0xff]
    %v522 = vld [vmem:[#allocation2 + $0xf98] sm:$0xff]
    %v523 = vld [vmem:[#allocation2 + $0xfa0] sm:$0xff]
    %v524 = vld [vmem:[#allocation2 + $0xfa8] sm:$0xff]
    %v525 = vld [vmem:[#allocation2 + $0xfb0] sm:$0xff]
    %v526 = vld [vmem:[#allocation2 + $0xfb8] sm:$0xff]
    %v527 = vld [vmem:[#allocation2 + $0xfc0] sm:$0xff]
    %v528 = vld [vmem:[#allocation2 + $0xfc8] sm:$0xff]
    %v529 = vld [vmem:[#allocation2 + $0xfd0] sm:$0xff]
    %v530 = vld [vmem:[#allocation2 + $0xfd8] sm:$0xff]
    %v531 = vld [vmem:[#allocation2 + $0xfe0] sm:$0xff]
    %v532 = vld [vmem:[#allocation2 + $0xfe8] sm:$0xff]
    %v533 = vld [vmem:[#allocation2 + $0xff0] sm:$0xff]
    %v534 = vld [vmem:[#allocation2 + $0xff8] sm:$0xff]
    %v535 = vld [vmem:[#allocation2 + $0x1000] sm:$0xff]
    %v536 = vld [vmem:[#allocation2 + $0x1008] sm:$0xff]
    %v537 = vld [vmem:[#allocation2 + $0x1010] sm:$0xff]
    %v538 = vld [vmem:[#allocation2 + $0x1018] sm:$0xff]
    %v539 = vld [vmem:[#allocation2 + $0x1020] sm:$0xff]
    %v540 = vld [vmem:[#allocation2 + $0x1028] sm:$0xff]
    %v541 = vld [vmem:[#allocation2 + $0x1030] sm:$0xff]
    %v542 = vld [vmem:[#allocation2 + $0x1038] sm:$0xff]
    %v543 = vld [vmem:[#allocation2 + $0x1040] sm:$0xff]
    %v544 = vld [vmem:[#allocation2 + $0x1048] sm:$0xff]
    %v545 = vld [vmem:[#allocation2 + $0x1050] sm:$0xff]
    %v546 = vld [vmem:[#allocation2 + $0x1058] sm:$0xff]
    %v547 = vld [vmem:[#allocation2 + $0x1060] sm:$0xff]
    %v548 = vld [vmem:[#allocation2 + $0x1068] sm:$0xff]
    %v549 = vld [vmem:[#allocation2 + $0x1070] sm:$0xff]
    %v550 = vld [vmem:[#allocation2 + $0x1078] sm:$0xff]
    %v551 = vld [vmem:[#allocation2 + $0x1080] sm:$0xff]
    %v552 = vld [vmem:[#allocation2 + $0x1088] sm:$0xff]
    %v553 = vld [vmem:[#allocation2 + $0x1090] sm:$0xff]
    %v554 = vld [vmem:[#allocation2 + $0x1098] sm:$0xff]
    %v555 = vld [vmem:[#allocation2 + $0x10a0] sm:$0xff]
    %v556 = vld [vmem:[#allocation2 + $0x10a8] sm:$0xff]
    %v557 = vld [vmem:[#allocation2 + $0x10b0] sm:$0xff]
    %v558 = vld [vmem:[#allocation2 + $0x10b8] sm:$0xff]
    %v559 = vld [vmem:[#allocation2 + $0x10c0] sm:$0xff]
    %v560 = vld [vmem:[#allocation2 + $0x10c8] sm:$0xff]
    %v561 = vld [vmem:[#allocation2 + $0x10d0] sm:$0xff]
    %v562 = vld [vmem:[#allocation2 + $0x10d8] sm:$0xff]
    %v563 = vld [vmem:[#allocation2 + $0x10e0] sm:$0xff]
    %v564 = vld [vmem:[#allocation2 + $0x10e8] sm:$0xff]
    %v565 = vld [vmem:[#allocation2 + $0x10f0] sm:$0xff]
    %v566 = vld [vmem:[#allocation2 + $0x10f8] sm:$0xff]
    %v567 = vld [vmem:[#allocation2 + $0x1100] sm:$0xff]
    %v568 = vld [vmem:[#allocation2 + $0x1108] sm:$0xff]
    %v569 = vld [vmem:[#allocation2 + $0x1110] sm:$0xff]
    %v570 = vld [vmem:[#allocation2 + $0x1118] sm:$0xff]
    %v571 = vld [vmem:[#allocation2 + $0x1120] sm:$0xff]
    %v572 = vld [vmem:[#allocation2 + $0x1128] sm:$0xff]
    %v573 = vld [vmem:[#allocation2 + $0x1130] sm:$0xff]
    %v574 = vld [vmem:[#allocation2 + $0x1138] sm:$0xff]
    %v575 = vld [vmem:[#allocation2 + $0x1140] sm:$0xff]
    %v576 = vld [vmem:[#allocation2 + $0x1148] sm:$0xff]
    %v577 = vld [vmem:[#allocation2 + $0x1150] sm:$0xff]
    %v578 = vld [vmem:[#allocation2 + $0x1158] sm:$0xff]
    %v579 = vld [vmem:[#allocation2 + $0x1160] sm:$0xff]
    %v580 = vld [vmem:[#allocation2 + $0x1168] sm:$0xff]
    %v581 = vld [vmem:[#allocation2 + $0x1170] sm:$0xff]
    %v582 = vld [vmem:[#allocation2 + $0x1178] sm:$0xff]
    %v583 = vld [vmem:[#allocation2 + $0x1180] sm:$0xff]
    %v584 = vld [vmem:[#allocation2 + $0x1188] sm:$0xff]
    %v585 = vld [vmem:[#allocation2 + $0x1190] sm:$0xff]
    %v586 = vld [vmem:[#allocation2 + $0x1198] sm:$0xff]
    %v587 = vld [vmem:[#allocation2 + $0x11a0] sm:$0xff]
    %v588 = vld [vmem:[#allocation2 + $0x11a8] sm:$0xff]
    %v589 = vld [vmem:[#allocation2 + $0x11b0] sm:$0xff]
    %v590 = vld [vmem:[#allocation2 + $0x11b8] sm:$0xff]
    %v591 = vld [vmem:[#allocation2 + $0x11c0] sm:$0xff]
    %v592 = vld [vmem:[#allocation2 + $0x11c8] sm:$0xff]
    %v593 = vld [vmem:[#allocation2 + $0x11d0] sm:$0xff]
    %v594 = vld [vmem:[#allocation2 + $0x11d8] sm:$0xff]
    %v595 = vld [vmem:[#allocation2 + $0x11e0] sm:$0xff]
    %v596 = vld [vmem:[#allocation2 + $0x11e8] sm:$0xff]
    %v597 = vld [vmem:[#allocation2 + $0x11f0] sm:$0xff]
    %v598 = vld [vmem:[#allocation2 + $0x11f8] sm:$0xff]
    %v599 = vld [vmem:[#allocation2 + $0x1200] sm:$0xff]
    %v600 = vld [vmem:[#allocation2 + $0x1208] sm:$0xff]
    %v601 = vld [vmem:[#allocation2 + $0x1210] sm:$0xff]
    %v602 = vld [vmem:[#allocation2 + $0x1218] sm:$0xff]
    %v603 = vld [vmem:[#allocation2 + $0x1220] sm:$0xff]
    %v604 = vld [vmem:[#allocation2 + $0x1228] sm:$0xff]
    %v605 = vld [vmem:[#allocation2 + $0x1230] sm:$0xff]
    %v606 = vld [vmem:[#allocation2 + $0x1238] sm:$0xff]
    %v607 = vld [vmem:[#allocation2 + $0x1240] sm:$0xff]
    %v608 = vld [vmem:[#allocation2 + $0x1248] sm:$0xff]
    %v609 = vld [vmem:[#allocation2 + $0x1250] sm:$0xff]
    %v610 = vld [vmem:[#allocation2 + $0x1258] sm:$0xff]
    %v611 = vld [vmem:[#allocation2 + $0x1260] sm:$0xff]
    %v612 = vld [vmem:[#allocation2 + $0x1268] sm:$0xff]
    %v613 = vld [vmem:[#allocation2 + $0x1270] sm:$0xff]
    %v614 = vld [vmem:[#allocation2 + $0x1278] sm:$0xff]
    %v615 = vld [vmem:[#allocation2 + $0x1280] sm:$0xff]
    %v616 = vld [vmem:[#allocation2 + $0x1288] sm:$0xff]
    %v617 = vld [vmem:[#allocation2 + $0x1290] sm:$0xff]
    %v618 = vld [vmem:[#allocation2 + $0x1298] sm:$0xff]
    %v619 = vld [vmem:[#allocation2 + $0x12a0] sm:$0xff]
    %v620 = vld [vmem:[#allocation2 + $0x12a8] sm:$0xff]
    %v621 = vld [vmem:[#allocation2 + $0x12b0] sm:$0xff]
    %v622 = vld [vmem:[#allocation2 + $0x12b8] sm:$0xff]
    %v623 = vld [vmem:[#allocation2 + $0x12c0] sm:$0xff]
    %v624 = vld [vmem:[#allocation2 + $0x12c8] sm:$0xff]
    %v625 = vld [vmem:[#allocation2 + $0x12d0] sm:$0xff]
    %v626 = vld [vmem:[#allocation2 + $0x12d8] sm:$0xff]
    %v627 = vld [vmem:[#allocation2 + $0x12e0] sm:$0xff]
    %v628 = vld [vmem:[#allocation2 + $0x12e8] sm:$0xff]
    %v629 = vld [vmem:[#allocation2 + $0x12f0] sm:$0xff]
    %v630 = vld [vmem:[#allocation2 + $0x12f8] sm:$0xff]
    %v631 = vld [vmem:[#allocation2 + $0x1300] sm:$0xff]
    %v632 = vld [vmem:[#allocation2 + $0x1308] sm:$0xff]
    %v633 = vld [vmem:[#allocation2 + $0x1310] sm:$0xff]
    %v634 = vld [vmem:[#allocation2 + $0x1318] sm:$0xff]
    %v635 = vld [vmem:[#allocation2 + $0x1320] sm:$0xff]
    %v636 = vld [vmem:[#allocation2 + $0x1328] sm:$0xff]
    %v637 = vld [vmem:[#allocation2 + $0x1330] sm:$0xff]
    %v638 = vld [vmem:[#allocation2 + $0x1338] sm:$0xff]
    %v639 = vld [vmem:[#allocation2 + $0x1340] sm:$0xff]
    %v640 = vld [vmem:[#allocation2 + $0x1348] sm:$0xff]
    %v641 = vld [vmem:[#allocation2 + $0x1350] sm:$0xff]
    %v642 = vld [vmem:[#allocation2 + $0x1358] sm:$0xff]
    %v643 = vld [vmem:[#allocation2 + $0x1360] sm:$0xff]
    %v644 = vld [vmem:[#allocation2 + $0x1368] sm:$0xff]
    %v645 = vld [vmem:[#allocation2 + $0x1370] sm:$0xff]
    %v646 = vld [vmem:[#allocation2 + $0x1378] sm:$0xff]
    %v647 = vld [vmem:[#allocation2 + $0x1380] sm:$0xff]
    %v648 = vld [vmem:[#allocation2 + $0x1388] sm:$0xff]
    %v649 = vld [vmem:[#allocation2 + $0x1390] sm:$0xff]
    %v650 = vld [vmem:[#allocation2 + $0x1398] sm:$0xff]
    %v651 = vld [vmem:[#allocation2 + $0x13a0] sm:$0xff]
    %v652 = vld [vmem:[#allocation2 + $0x13a8] sm:$0xff]
    %v653 = vld [vmem:[#allocation2 + $0x13b0] sm:$0xff]
    %v654 = vld [vmem:[#allocation2 + $0x13b8] sm:$0xff]
    %v655 = vld [vmem:[#allocation2 + $0x13c0] sm:$0xff]
    %v656 = vld [vmem:[#allocation2 + $0x13c8] sm:$0xff]
    %v657 = vld [vmem:[#allocation2 + $0x13d0] sm:$0xff]
    %v658 = vld [vmem:[#allocation2 + $0x13d8] sm:$0xff]
    %v659 = vld [vmem:[#allocation2 + $0x13e0] sm:$0xff]
    %v660 = vld [vmem:[#allocation2 + $0x13e8] sm:$0xff]
    %v661 = vld [vmem:[#allocation2 + $0x13f0] sm:$0xff]
    %v662 = vld [vmem:[#allocation2 + $0x13f8] sm:$0xff]
    %v663 = vld [vmem:[#allocation2 + $0x1400] sm:$0xff]
    %v664 = vld [vmem:[#allocation2 + $0x1408] sm:$0xff]
    %v665 = vld [vmem:[#allocation2 + $0x1410] sm:$0xff]
    %v666 = vld [vmem:[#allocation2 + $0x1418] sm:$0xff]
    %v667 = vld [vmem:[#allocation2 + $0x1420] sm:$0xff]
    %v668 = vld [vmem:[#allocation2 + $0x1428] sm:$0xff]
    %v669 = vld [vmem:[#allocation2 + $0x1430] sm:$0xff]
    %v670 = vld [vmem:[#allocation2 + $0x1438] sm:$0xff]
    %v671 = vld [vmem:[#allocation2 + $0x1440] sm:$0xff]
    %v672 = vld [vmem:[#allocation2 + $0x1448] sm:$0xff]
    %v673 = vld [vmem:[#allocation2 + $0x1450] sm:$0xff]
    %v674 = vld [vmem:[#allocation2 + $0x1458] sm:$0xff]
    %v675 = vld [vmem:[#allocation2 + $0x1460] sm:$0xff]
    %v676 = vld [vmem:[#allocation2 + $0x1468] sm:$0xff]
    %v677 = vld [vmem:[#allocation2 + $0x1470] sm:$0xff]
    %v678 = vld [vmem:[#allocation2 + $0x1478] sm:$0xff]
    %v679 = vld [vmem:[#allocation2 + $0x1480] sm:$0xff]
    %v680 = vld [vmem:[#allocation2 + $0x1488] sm:$0xff]
    %v681 = vld [vmem:[#allocation2 + $0x1490] sm:$0xff]
    %v682 = vld [vmem:[#allocation2 + $0x1498] sm:$0xff]
    %v683 = vld [vmem:[#allocation2 + $0x14a0] sm:$0xff]
    %v684 = vld [vmem:[#allocation2 + $0x14a8] sm:$0xff]
    %v685 = vld [vmem:[#allocation2 + $0x14b0] sm:$0xff]
    %v686 = vld [vmem:[#allocation2 + $0x14b8] sm:$0xff]
    %v687 = vld [vmem:[#allocation2 + $0x14c0] sm:$0xff]
    %v688 = vld [vmem:[#allocation2 + $0x14c8] sm:$0xff]
    %v689 = vld [vmem:[#allocation2 + $0x14d0] sm:$0xff]
    %v690 = vld [vmem:[#allocation2 + $0x14d8] sm:$0xff]
    %v691 = vld [vmem:[#allocation2 + $0x14e0] sm:$0xff]
    %v692 = vld [vmem:[#allocation2 + $0x14e8] sm:$0xff]
    %v693 = vld [vmem:[#allocation2 + $0x14f0] sm:$0xff]
    %v694 = vld [vmem:[#allocation2 + $0x14f8] sm:$0xff]
    %v695 = vld [vmem:[#allocation2 + $0x1500] sm:$0xff]
    %v696 = vld [vmem:[#allocation2 + $0x1508] sm:$0xff]
    %v697 = vld [vmem:[#allocation2 + $0x1510] sm:$0xff]
    %v698 = vld [vmem:[#allocation2 + $0x1518] sm:$0xff]
    %v699 = vld [vmem:[#allocation2 + $0x1520] sm:$0xff]
    %v700 = vld [vmem:[#allocation2 + $0x1528] sm:$0xff]
    %v701 = vld [vmem:[#allocation2 + $0x1530] sm:$0xff]
    %v702 = vld [vmem:[#allocation2 + $0x1538] sm:$0xff]
    %v703 = vld [vmem:[#allocation2 + $0x1540] sm:$0xff]
    %v704 = vld [vmem:[#allocation2 + $0x1548] sm:$0xff]
    %v705 = vld [vmem:[#allocation2 + $0x1550] sm:$0xff]
    %v706 = vld [vmem:[#allocation2 + $0x1558] sm:$0xff]
    %v707 = vld [vmem:[#allocation2 + $0x1560] sm:$0xff]
    %v708 = vld [vmem:[#allocation2 + $0x1568] sm:$0xff]
    %v709 = vld [vmem:[#allocation2 + $0x1570] sm:$0xff]
    %v710 = vld [vmem:[#allocation2 + $0x1578] sm:$0xff]
    %v711 = vld [vmem:[#allocation2 + $0x1580] sm:$0xff]
    %v712 = vld [vmem:[#allocation2 + $0x1588] sm:$0xff]
    %v713 = vld [vmem:[#allocation2 + $0x1590] sm:$0xff]
    %v714 = vld [vmem:[#allocation2 + $0x1598] sm:$0xff]
    %v715 = vld [vmem:[#allocation2 + $0x15a0] sm:$0xff]
    %v716 = vld [vmem:[#allocation2 + $0x15a8] sm:$0xff]
    %v717 = vld [vmem:[#allocation2 + $0x15b0] sm:$0xff]
    %v718 = vld [vmem:[#allocation2 + $0x15b8] sm:$0xff]
    %v719 = vld [vmem:[#allocation2 + $0x15c0] sm:$0xff]
    %v720 = vld [vmem:[#allocation2 + $0x15c8] sm:$0xff]
    %v721 = vld [vmem:[#allocation2 + $0x15d0] sm:$0xff]
    %v722 = vld [vmem:[#allocation2 + $0x15d8] sm:$0xff]
    %v723 = vld [vmem:[#allocation2 + $0x15e0] sm:$0xff]
    %v724 = vld [vmem:[#allocation2 + $0x15e8] sm:$0xff]
    %v725 = vld [vmem:[#allocation2 + $0x15f0] sm:$0xff]
    %v726 = vld [vmem:[#allocation2 + $0x15f8] sm:$0xff]
    %v727 = vld [vmem:[#allocation2 + $0x1600] sm:$0xff]
    %v728 = vld [vmem:[#allocation2 + $0x1608] sm:$0xff]
    %v729 = vld [vmem:[#allocation2 + $0x1610] sm:$0xff]
    %v730 = vld [vmem:[#allocation2 + $0x1618] sm:$0xff]
    %v731 = vld [vmem:[#allocation2 + $0x1620] sm:$0xff]
    %v732 = vld [vmem:[#allocation2 + $0x1628] sm:$0xff]
    %v733 = vld [vmem:[#allocation2 + $0x1630] sm:$0xff]
    %v734 = vld [vmem:[#allocation2 + $0x1638] sm:$0xff]
    %v735 = vld [vmem:[#allocation2 + $0x1640] sm:$0xff]
    %v736 = vld [vmem:[#allocation2 + $0x1648] sm:$0xff]
    %v737 = vld [vmem:[#allocation2 + $0x1650] sm:$0xff]
    %v738 = vld [vmem:[#allocation2 + $0x1658] sm:$0xff]
    %v739 = vld [vmem:[#allocation2 + $0x1660] sm:$0xff]
    %v740 = vld [vmem:[#allocation2 + $0x1668] sm:$0xff]
    %v741 = vld [vmem:[#allocation2 + $0x1670] sm:$0xff]
    %v742 = vld [vmem:[#allocation2 + $0x1678] sm:$0xff]
    %v743 = vld [vmem:[#allocation2 + $0x1680] sm:$0xff]
    %v744 = vld [vmem:[#allocation2 + $0x1688] sm:$0xff]
    %v745 = vld [vmem:[#allocation2 + $0x1690] sm:$0xff]
    %v746 = vld [vmem:[#allocation2 + $0x1698] sm:$0xff]
    %v747 = vld [vmem:[#allocation2 + $0x16a0] sm:$0xff]
    %v748 = vld [vmem:[#allocation2 + $0x16a8] sm:$0xff]
    %v749 = vld [vmem:[#allocation2 + $0x16b0] sm:$0xff]
    %v750 = vld [vmem:[#allocation2 + $0x16b8] sm:$0xff]
    %v751 = vld [vmem:[#allocation2 + $0x16c0] sm:$0xff]
    %v752 = vld [vmem:[#allocation2 + $0x16c8] sm:$0xff]
    %v753 = vld [vmem:[#allocation2 + $0x16d0] sm:$0xff]
    %v754 = vld [vmem:[#allocation2 + $0x16d8] sm:$0xff]
    %v755 = vld [vmem:[#allocation2 + $0x16e0] sm:$0xff]
    %v756 = vld [vmem:[#allocation2 + $0x16e8] sm:$0xff]
    %v757 = vld [vmem:[#allocation2 + $0x16f0] sm:$0xff]
    %v758 = vld [vmem:[#allocation2 + $0x16f8] sm:$0xff]
    %v759 = vld [vmem:[#allocation2 + $0x1700] sm:$0xff]
    %v760 = vld [vmem:[#allocation2 + $0x1708] sm:$0xff]
    %v761 = vld [vmem:[#allocation2 + $0x1710] sm:$0xff]
    %v762 = vld [vmem:[#allocation2 + $0x1718] sm:$0xff]
    %v763 = vld [vmem:[#allocation2 + $0x1720] sm:$0xff]
    %v764 = vld [vmem:[#allocation2 + $0x1728] sm:$0xff]
    %v765 = vld [vmem:[#allocation2 + $0x1730] sm:$0xff]
    %v766 = vld [vmem:[#allocation2 + $0x1738] sm:$0xff]
    %v767 = vld [vmem:[#allocation2 + $0x1740] sm:$0xff]
    %v768 = vld [vmem:[#allocation2 + $0x1748] sm:$0xff]
    %v769 = vld [vmem:[#allocation2 + $0x1750] sm:$0xff]
    %v770 = vld [vmem:[#allocation2 + $0x1758] sm:$0xff]
    %v771 = vld [vmem:[#allocation2 + $0x1760] sm:$0xff]
    %v772 = vld [vmem:[#allocation2 + $0x1768] sm:$0xff]
    %v773 = vld [vmem:[#allocation2 + $0x1770] sm:$0xff]
    %v774 = vld [vmem:[#allocation2 + $0x1778] sm:$0xff]
    %v775 = vld [vmem:[#allocation2 + $0x1780] sm:$0xff]
    %v776 = vld [vmem:[#allocation2 + $0x1788] sm:$0xff]
    %v777 = vld [vmem:[#allocation2 + $0x1790] sm:$0xff]
    %v778 = vld [vmem:[#allocation2 + $0x1798] sm:$0xff]
    %v779 = vld [vmem:[#allocation2 + $0x17a0] sm:$0xff]
    %v780 = vld [vmem:[#allocation2 + $0x17a8] sm:$0xff]
    %v781 = vld [vmem:[#allocation2 + $0x17b0] sm:$0xff]
    %v782 = vld [vmem:[#allocation2 + $0x17b8] sm:$0xff]
    %v783 = vld [vmem:[#allocation2 + $0x17c0] sm:$0xff]
    %v784 = vld [vmem:[#allocation2 + $0x17c8] sm:$0xff]
    %v785 = vld [vmem:[#allocation2 + $0x17d0] sm:$0xff]
    %v786 = vld [vmem:[#allocation2 + $0x17d8] sm:$0xff]
    %v787 = vld [vmem:[#allocation2 + $0x17e0] sm:$0xff]
    %v788 = vld [vmem:[#allocation2 + $0x17e8] sm:$0xff]
    %v789 = vld [vmem:[#allocation2 + $0x17f0] sm:$0xff]
    %v790 = vld [vmem:[#allocation2 + $0x17f8] sm:$0xff]
    %v791 = vld [vmem:[#allocation2 + $0x1800] sm:$0xff]
    %v792 = vld [vmem:[#allocation2 + $0x1808] sm:$0xff]
    %v793 = vld [vmem:[#allocation2 + $0x1810] sm:$0xff]
    %v794 = vld [vmem:[#allocation2 + $0x1818] sm:$0xff]
    %v795 = vld [vmem:[#allocation2 + $0x1820] sm:$0xff]
    %v796 = vld [vmem:[#allocation2 + $0x1828] sm:$0xff]
    %v797 = vld [vmem:[#allocation2 + $0x1830] sm:$0xff]
    %v798 = vld [vmem:[#allocation2 + $0x1838] sm:$0xff]
    %v799 = vld [vmem:[#allocation2 + $0x1840] sm:$0xff]
    %v800 = vld [vmem:[#allocation2 + $0x1848] sm:$0xff]
    %v801 = vld [vmem:[#allocation2 + $0x1850] sm:$0xff]
    %v802 = vld [vmem:[#allocation2 + $0x1858] sm:$0xff]
    %v803 = vld [vmem:[#allocation2 + $0x1860] sm:$0xff]
    %v804 = vld [vmem:[#allocation2 + $0x1868] sm:$0xff]
    %v805 = vld [vmem:[#allocation2 + $0x1870] sm:$0xff]
    %v806 = vld [vmem:[#allocation2 + $0x1878] sm:$0xff]
    %v807 = vld [vmem:[#allocation2 + $0x1880] sm:$0xff]
    %v808 = vld [vmem:[#allocation2 + $0x1888] sm:$0xff]
    %v809 = vld [vmem:[#allocation2 + $0x1890] sm:$0xff]
    %v810 = vld [vmem:[#allocation2 + $0x1898] sm:$0xff]
    %v811 = vld [vmem:[#allocation2 + $0x18a0] sm:$0xff]
    %v812 = vld [vmem:[#allocation2 + $0x18a8] sm:$0xff]
    %v813 = vld [vmem:[#allocation2 + $0x18b0] sm:$0xff]
    %v814 = vld [vmem:[#allocation2 + $0x18b8] sm:$0xff]
    %v815 = vld [vmem:[#allocation2 + $0x18c0] sm:$0xff]
    %v816 = vld [vmem:[#allocation2 + $0x18c8] sm:$0xff]
    %v817 = vld [vmem:[#allocation2 + $0x18d0] sm:$0xff]
    %v818 = vld [vmem:[#allocation2 + $0x18d8] sm:$0xff]
    %v819 = vld [vmem:[#allocation2 + $0x18e0] sm:$0xff]
    %v820 = vld [vmem:[#allocation2 + $0x18e8] sm:$0xff]
    %v821 = vld [vmem:[#allocation2 + $0x18f0] sm:$0xff]
    %v822 = vld [vmem:[#allocation2 + $0x18f8] sm:$0xff]
    %v823 = vld [vmem:[#allocation2 + $0x1900] sm:$0xff]
    %v824 = vld [vmem:[#allocation2 + $0x1908] sm:$0xff]
    %v825 = vld [vmem:[#allocation2 + $0x1910] sm:$0xff]
    %v826 = vld [vmem:[#allocation2 + $0x1918] sm:$0xff]
    %v827 = vld [vmem:[#allocation2 + $0x1920] sm:$0xff]
    %v828 = vld [vmem:[#allocation2 + $0x1928] sm:$0xff]
    %v829 = vld [vmem:[#allocation2 + $0x1930] sm:$0xff]
    %v830 = vld [vmem:[#allocation2 + $0x1938] sm:$0xff]
    %v831 = vld [vmem:[#allocation2 + $0x1940] sm:$0xff]
    %v832 = vld [vmem:[#allocation2 + $0x1948] sm:$0xff]
    %v833 = vld [vmem:[#allocation2 + $0x1950] sm:$0xff]
    %v834 = vld [vmem:[#allocation2 + $0x1958] sm:$0xff]
    %v835 = vld [vmem:[#allocation2 + $0x1960] sm:$0xff]
    %v836 = vld [vmem:[#allocation2 + $0x1968] sm:$0xff]
    %v837 = vld [vmem:[#allocation2 + $0x1970] sm:$0xff]
    %v838 = vld [vmem:[#allocation2 + $0x1978] sm:$0xff]
    %v839 = vld [vmem:[#allocation2 + $0x1980] sm:$0xff]
    %v840 = vld [vmem:[#allocation2 + $0x1988] sm:$0xff]
    %v841 = vld [vmem:[#allocation2 + $0x1990] sm:$0xff]
    %v842 = vld [vmem:[#allocation2 + $0x1998] sm:$0xff]
    %v843 = vld [vmem:[#allocation2 + $0x19a0] sm:$0xff]
    %v844 = vld [vmem:[#allocation2 + $0x19a8] sm:$0xff]
    %v845 = vld [vmem:[#allocation2 + $0x19b0] sm:$0xff]
    %v846 = vld [vmem:[#allocation2 + $0x19b8] sm:$0xff]
    %v847 = vld [vmem:[#allocation2 + $0x19c0] sm:$0xff]
    %v848 = vld [vmem:[#allocation2 + $0x19c8] sm:$0xff]
    %v849 = vld [vmem:[#allocation2 + $0x19d0] sm:$0xff]
    %v850 = vld [vmem:[#allocation2 + $0x19d8] sm:$0xff]
    %v851 = vld [vmem:[#allocation2 + $0x19e0] sm:$0xff]
    %v852 = vld [vmem:[#allocation2 + $0x19e8] sm:$0xff]
    %v853 = vld [vmem:[#allocation2 + $0x19f0] sm:$0xff]
    %v854 = vld [vmem:[#allocation2 + $0x19f8] sm:$0xff]
    %v855 = vld [vmem:[#allocation2 + $0x1a00] sm:$0xff]
    %v856 = vld [vmem:[#allocation2 + $0x1a08] sm:$0xff]
    %v857 = vld [vmem:[#allocation2 + $0x1a10] sm:$0xff]
    %v858 = vld [vmem:[#allocation2 + $0x1a18] sm:$0xff]
    %v859 = vld [vmem:[#allocation2 + $0x1a20] sm:$0xff]
    %v860 = vld [vmem:[#allocation2 + $0x1a28] sm:$0xff]
    %v861 = vld [vmem:[#allocation2 + $0x1a30] sm:$0xff]
    %v862 = vld [vmem:[#allocation2 + $0x1a38] sm:$0xff]
    %v863 = vld [vmem:[#allocation2 + $0x1a40] sm:$0xff]
    %v864 = vld [vmem:[#allocation2 + $0x1a48] sm:$0xff]
    %v865 = vld [vmem:[#allocation2 + $0x1a50] sm:$0xff]
    %v866 = vld [vmem:[#allocation2 + $0x1a58] sm:$0xff]
    %v867 = vld [vmem:[#allocation2 + $0x1a60] sm:$0xff]
    %v868 = vld [vmem:[#allocation2 + $0x1a68] sm:$0xff]
    %v869 = vld [vmem:[#allocation2 + $0x1a70] sm:$0xff]
    %v870 = vld [vmem:[#allocation2 + $0x1a78] sm:$0xff]
    %v871 = vld [vmem:[#allocation2 + $0x1a80] sm:$0xff]
    %v872 = vld [vmem:[#allocation2 + $0x1a88] sm:$0xff]
    %v873 = vld [vmem:[#allocation2 + $0x1a90] sm:$0xff]
    %v874 = vld [vmem:[#allocation2 + $0x1a98] sm:$0xff]
    %v875 = vld [vmem:[#allocation2 + $0x1aa0] sm:$0xff]
    %v876 = vld [vmem:[#allocation2 + $0x1aa8] sm:$0xff]
    %v877 = vld [vmem:[#allocation2 + $0x1ab0] sm:$0xff]
    %v878 = vld [vmem:[#allocation2 + $0x1ab8] sm:$0xff]
    %v879 = vld [vmem:[#allocation2 + $0x1ac0] sm:$0xff]
    %v880 = vld [vmem:[#allocation2 + $0x1ac8] sm:$0xff]
    %v881 = vld [vmem:[#allocation2 + $0x1ad0] sm:$0xff]
    %v882 = vld [vmem:[#allocation2 + $0x1ad8] sm:$0xff]
    %v883 = vld [vmem:[#allocation2 + $0x1ae0] sm:$0xff]
    %v884 = vld [vmem:[#allocation2 + $0x1ae8] sm:$0xff]
    %v885 = vld [vmem:[#allocation2 + $0x1af0] sm:$0xff]
    %v886 = vld [vmem:[#allocation2 + $0x1af8] sm:$0xff]
    %v887 = vld [vmem:[#allocation2 + $0x1b00] sm:$0xff]
    %v888 = vld [vmem:[#allocation2 + $0x1b08] sm:$0xff]
    %v889 = vld [vmem:[#allocation2 + $0x1b10] sm:$0xff]
    %v890 = vld [vmem:[#allocation2 + $0x1b18] sm:$0xff]
    %v891 = vld [vmem:[#allocation2 + $0x1b20] sm:$0xff]
    %v892 = vld [vmem:[#allocation2 + $0x1b28] sm:$0xff]
    %v893 = vld [vmem:[#allocation2 + $0x1b30] sm:$0xff]
    %v894 = vld [vmem:[#allocation2 + $0x1b38] sm:$0xff]
    %v895 = vld [vmem:[#allocation2 + $0x1b40] sm:$0xff]
    %v896 = vld [vmem:[#allocation2 + $0x1b48] sm:$0xff]
    %v897 = vld [vmem:[#allocation2 + $0x1b50] sm:$0xff]
    %v898 = vld [vmem:[#allocation2 + $0x1b58] sm:$0xff]
    %v899 = vld [vmem:[#allocation2 + $0x1b60] sm:$0xff]
    %v900 = vld [vmem:[#allocation2 + $0x1b68] sm:$0xff]
    %v901 = vld [vmem:[#allocation2 + $0x1b70] sm:$0xff]
    %v902 = vld [vmem:[#allocation2 + $0x1b78] sm:$0xff]
    %v903 = vld [vmem:[#allocation2 + $0x1b80] sm:$0xff]
    %v904 = vld [vmem:[#allocation2 + $0x1b88] sm:$0xff]
    %v905 = vld [vmem:[#allocation2 + $0x1b90] sm:$0xff]
    %v906 = vld [vmem:[#allocation2 + $0x1b98] sm:$0xff]
    %v907 = vld [vmem:[#allocation2 + $0x1ba0] sm:$0xff]
    %v908 = vld [vmem:[#allocation2 + $0x1ba8] sm:$0xff]
    %v909 = vld [vmem:[#allocation2 + $0x1bb0] sm:$0xff]
    %v910 = vld [vmem:[#allocation2 + $0x1bb8] sm:$0xff]
    %v911 = vld [vmem:[#allocation2 + $0x1bc0] sm:$0xff]
    %v912 = vld [vmem:[#allocation2 + $0x1bc8] sm:$0xff]
    %v913 = vld [vmem:[#allocation2 + $0x1bd0] sm:$0xff]
    %v914 = vld [vmem:[#allocation2 + $0x1bd8] sm:$0xff]
    %v915 = vld [vmem:[#allocation2 + $0x1be0] sm:$0xff]
    %v916 = vld [vmem:[#allocation2 + $0x1be8] sm:$0xff]
    %v917 = vld [vmem:[#allocation2 + $0x1bf0] sm:$0xff]
    %v918 = vld [vmem:[#allocation2 + $0x1bf8] sm:$0xff]
    %v919 = vld [vmem:[#allocation2 + $0x1c00] sm:$0xff]
    %v920 = vld [vmem:[#allocation2 + $0x1c08] sm:$0xff]
    %v921 = vld [vmem:[#allocation2 + $0x1c10] sm:$0xff]
    %v922 = vld [vmem:[#allocation2 + $0x1c18] sm:$0xff]
    %v923 = vld [vmem:[#allocation2 + $0x1c20] sm:$0xff]
    %v924 = vld [vmem:[#allocation2 + $0x1c28] sm:$0xff]
    %v925 = vld [vmem:[#allocation2 + $0x1c30] sm:$0xff]
    %v926 = vld [vmem:[#allocation2 + $0x1c38] sm:$0xff]
    %v927 = vld [vmem:[#allocation2 + $0x1c40] sm:$0xff]
    %v928 = vld [vmem:[#allocation2 + $0x1c48] sm:$0xff]
    %v929 = vld [vmem:[#allocation2 + $0x1c50] sm:$0xff]
    %v930 = vld [vmem:[#allocation2 + $0x1c58] sm:$0xff]
    %v931 = vld [vmem:[#allocation2 + $0x1c60] sm:$0xff]
    %v932 = vld [vmem:[#allocation2 + $0x1c68] sm:$0xff]
    %v933 = vld [vmem:[#allocation2 + $0x1c70] sm:$0xff]
    %v934 = vld [vmem:[#allocation2 + $0x1c78] sm:$0xff]
    %v935 = vld [vmem:[#allocation2 + $0x1c80] sm:$0xff]
    %v936 = vld [vmem:[#allocation2 + $0x1c88] sm:$0xff]
    %v937 = vld [vmem:[#allocation2 + $0x1c90] sm:$0xff]
    %v938 = vld [vmem:[#allocation2 + $0x1c98] sm:$0xff]
    %v939 = vld [vmem:[#allocation2 + $0x1ca0] sm:$0xff]
    %v940 = vld [vmem:[#allocation2 + $0x1ca8] sm:$0xff]
    %v941 = vld [vmem:[#allocation2 + $0x1cb0] sm:$0xff]
    %v942 = vld [vmem:[#allocation2 + $0x1cb8] sm:$0xff]
    %v943 = vld [vmem:[#allocation2 + $0x1cc0] sm:$0xff]
    %v944 = vld [vmem:[#allocation2 + $0x1cc8] sm:$0xff]
    %v945 = vld [vmem:[#allocation2 + $0x1cd0] sm:$0xff]
    %v946 = vld [vmem:[#allocation2 + $0x1cd8] sm:$0xff]
    %v947 = vld [vmem:[#allocation2 + $0x1ce0] sm:$0xff]
    %v948 = vld [vmem:[#allocation2 + $0x1ce8] sm:$0xff]
    %v949 = vld [vmem:[#allocation2 + $0x1cf0] sm:$0xff]
    %v950 = vld [vmem:[#allocation2 + $0x1cf8] sm:$0xff]
    %v951 = vld [vmem:[#allocation2 + $0x1d00] sm:$0xff]
    %v952 = vld [vmem:[#allocation2 + $0x1d08] sm:$0xff]
    %v953 = vld [vmem:[#allocation2 + $0x1d10] sm:$0xff]
    %v954 = vld [vmem:[#allocation2 + $0x1d18] sm:$0xff]
    %v955 = vld [vmem:[#allocation2 + $0x1d20] sm:$0xff]
    %v956 = vld [vmem:[#allocation2 + $0x1d28] sm:$0xff]
    %v957 = vld [vmem:[#allocation2 + $0x1d30] sm:$0xff]
    %v958 = vld [vmem:[#allocation2 + $0x1d38] sm:$0xff]
    %v959 = vld [vmem:[#allocation2 + $0x1d40] sm:$0xff]
    %v960 = vld [vmem:[#allocation2 + $0x1d48] sm:$0xff]
    %v961 = vld [vmem:[#allocation2 + $0x1d50] sm:$0xff]
    %v962 = vld [vmem:[#allocation2 + $0x1d58] sm:$0xff]
    %v963 = vld [vmem:[#allocation2 + $0x1d60] sm:$0xff]
    %v964 = vld [vmem:[#allocation2 + $0x1d68] sm:$0xff]
    %v965 = vld [vmem:[#allocation2 + $0x1d70] sm:$0xff]
    %v966 = vld [vmem:[#allocation2 + $0x1d78] sm:$0xff]
    %v967 = vld [vmem:[#allocation2 + $0x1d80] sm:$0xff]
    %v968 = vld [vmem:[#allocation2 + $0x1d88] sm:$0xff]
    %v969 = vld [vmem:[#allocation2 + $0x1d90] sm:$0xff]
    %v970 = vld [vmem:[#allocation2 + $0x1d98] sm:$0xff]
    %v971 = vld [vmem:[#allocation2 + $0x1da0] sm:$0xff]
    %v972 = vld [vmem:[#allocation2 + $0x1da8] sm:$0xff]
    %v973 = vld [vmem:[#allocation2 + $0x1db0] sm:$0xff]
    %v974 = vld [vmem:[#allocation2 + $0x1db8] sm:$0xff]
    %v975 = vld [vmem:[#allocation2 + $0x1dc0] sm:$0xff]
    %v976 = vld [vmem:[#allocation2 + $0x1dc8] sm:$0xff]
    %v977 = vld [vmem:[#allocation2 + $0x1dd0] sm:$0xff]
    %v978 = vld [vmem:[#allocation2 + $0x1dd8] sm:$0xff]
    %v979 = vld [vmem:[#allocation2 + $0x1de0] sm:$0xff]
    %v980 = vld [vmem:[#allocation2 + $0x1de8] sm:$0xff]
    %v981 = vld [vmem:[#allocation2 + $0x1df0] sm:$0xff]
    %v982 = vld [vmem:[#allocation2 + $0x1df8] sm:$0xff]
    %v983 = vld [vmem:[#allocation2 + $0x1e00] sm:$0xff]
    %v984 = vld [vmem:[#allocation2 + $0x1e08] sm:$0xff]
    %v985 = vld [vmem:[#allocation2 + $0x1e10] sm:$0xff]
    %v986 = vld [vmem:[#allocation2 + $0x1e18] sm:$0xff]
    %v987 = vld [vmem:[#allocation2 + $0x1e20] sm:$0xff]
    %v988 = vld [vmem:[#allocation2 + $0x1e28] sm:$0xff]
    %v989 = vld [vmem:[#allocation2 + $0x1e30] sm:$0xff]
    %v990 = vld [vmem:[#allocation2 + $0x1e38] sm:$0xff]
    %v991 = vld [vmem:[#allocation2 + $0x1e40] sm:$0xff]
    %v992 = vld [vmem:[#allocation2 + $0x1e48] sm:$0xff]
    %v993 = vld [vmem:[#allocation2 + $0x1e50] sm:$0xff]
    %v994 = vld [vmem:[#allocation2 + $0x1e58] sm:$0xff]
    %v995 = vld [vmem:[#allocation2 + $0x1e60] sm:$0xff]
    %v996 = vld [vmem:[#allocation2 + $0x1e68] sm:$0xff]
    %v997 = vld [vmem:[#allocation2 + $0x1e70] sm:$0xff]
    %v998 = vld [vmem:[#allocation2 + $0x1e78] sm:$0xff]
    %v999 = vld [vmem:[#allocation2 + $0x1e80] sm:$0xff]
    %v1000 = vld [vmem:[#allocation2 + $0x1e88] sm:$0xff]
    %v1001 = vld [vmem:[#allocation2 + $0x1e90] sm:$0xff]
    %v1002 = vld [vmem:[#allocation2 + $0x1e98] sm:$0xff]
    %v1003 = vld [vmem:[#allocation2 + $0x1ea0] sm:$0xff]
    %v1004 = vld [vmem:[#allocation2 + $0x1ea8] sm:$0xff]
    %v1005 = vld [vmem:[#allocation2 + $0x1eb0] sm:$0xff]
    %v1006 = vld [vmem:[#allocation2 + $0x1eb8] sm:$0xff]
    %v1007 = vld [vmem:[#allocation2 + $0x1ec0] sm:$0xff]
    %v1008 = vld [vmem:[#allocation2 + $0x1ec8] sm:$0xff]
    %v1009 = vld [vmem:[#allocation2 + $0x1ed0] sm:$0xff]
    %v1010 = vld [vmem:[#allocation2 + $0x1ed8] sm:$0xff]
    %v1011 = vld [vmem:[#allocation2 + $0x1ee0] sm:$0xff]
    %v1012 = vld [vmem:[#allocation2 + $0x1ee8] sm:$0xff]
    %v1013 = vld [vmem:[#allocation2 + $0x1ef0] sm:$0xff]
    %v1014 = vld [vmem:[#allocation2 + $0x1ef8] sm:$0xff]
    %v1015 = vld [vmem:[#allocation2 + $0x1f00] sm:$0xff]
    %v1016 = vld [vmem:[#allocation2 + $0x1f08] sm:$0xff]
    %v1017 = vld [vmem:[#allocation2 + $0x1f10] sm:$0xff]
    %v1018 = vld [vmem:[#allocation2 + $0x1f18] sm:$0xff]
    %v1019 = vld [vmem:[#allocation2 + $0x1f20] sm:$0xff]
    %v1020 = vld [vmem:[#allocation2 + $0x1f28] sm:$0xff]
    %v1021 = vld [vmem:[#allocation2 + $0x1f30] sm:$0xff]
    %v1022 = vld [vmem:[#allocation2 + $0x1f38] sm:$0xff]
    %v1023 = vld [vmem:[#allocation2 + $0x1f40] sm:$0xff]
    %v1024 = vld [vmem:[#allocation2 + $0x1f48] sm:$0xff]
    %v1025 = vld [vmem:[#allocation2 + $0x1f50] sm:$0xff]
    %v1026 = vld [vmem:[#allocation2 + $0x1f58] sm:$0xff]
    %v1027 = vld [vmem:[#allocation2 + $0x1f60] sm:$0xff]
    %v1028 = vld [vmem:[#allocation2 + $0x1f68] sm:$0xff]
    %v1029 = vld [vmem:[#allocation2 + $0x1f70] sm:$0xff]
    %v1030 = vld [vmem:[#allocation2 + $0x1f78] sm:$0xff]
    %v1031 = vld [vmem:[#allocation2 + $0x1f80] sm:$0xff]
    %v1032 = vld [vmem:[#allocation2 + $0x1f88] sm:$0xff]
    %v1033 = vld [vmem:[#allocation2 + $0x1f90] sm:$0xff]
    %v1034 = vld [vmem:[#allocation2 + $0x1f98] sm:$0xff]
    %v1035 = vld [vmem:[#allocation2 + $0x1fa0] sm:$0xff]
    %v1036 = vld [vmem:[#allocation2 + $0x1fa8] sm:$0xff]
    %v1037 = vld [vmem:[#allocation2 + $0x1fb0] sm:$0xff]
    %v1038 = vld [vmem:[#allocation2 + $0x1fb8] sm:$0xff]
    %v1039 = vld [vmem:[#allocation2 + $0x1fc0] sm:$0xff]
    %v1040 = vld [vmem:[#allocation2 + $0x1fc8] sm:$0xff]
    %v1041 = vld [vmem:[#allocation2 + $0x1fd0] sm:$0xff]
    %v1042 = vld [vmem:[#allocation2 + $0x1fd8] sm:$0xff]
    %v1043 = vld [vmem:[#allocation2 + $0x1fe0] sm:$0xff]
    %v1044 = vld [vmem:[#allocation2 + $0x1fe8] sm:$0xff]
    %v1045 = vld [vmem:[#allocation2 + $0x1ff0] sm:$0xff]
    %v1046 = vld [vmem:[#allocation2 + $0x1ff8] sm:$0xff]
    %1047 = vxpose.xlu0.b32.start [1/16] %v23, 128
    %1048 = vxpose.xlu0.b32.cont [2/16] %v31, 128
    %1049 = vxpose.xlu0.b32.cont [3/16] %v39, 128
    %1050 = vxpose.xlu0.b32.cont [4/16] %v47, 128
    %1051 = vxpose.xlu0.b32.cont [5/16] %v55, 128
    %1052 = vxpose.xlu0.b32.cont [6/16] %v63, 128
    %1053 = vxpose.xlu0.b32.cont [7/16] %v71, 128
    %1054 = vxpose.xlu0.b32.cont [8/16] %v79, 128
    %1055 = vxpose.xlu0.b32.cont [9/16] %v87, 128
    %1056 = vxpose.xlu0.b32.cont [10/16] %v95, 128
    %1057 = vxpose.xlu0.b32.cont [11/16] %v103, 128
    %1058 = vxpose.xlu0.b32.cont [12/16] %v111, 128
    %1059 = vxpose.xlu0.b32.cont [13/16] %v119, 128
    %1060 = vxpose.xlu0.b32.cont [14/16] %v127, 128
    %1061 = vxpose.xlu0.b32.cont [15/16] %v135, 128
    %1062 = vxpose.xlu0.b32.end [16/16] %v143, 128
    %v1063 = vpop.trf.xlu0
    %v1064 = vpop.trf.xlu0
    %v1065 = vpop.trf.xlu0
    %v1066 = vpop.trf.xlu0
    %v1067 = vpop.trf.xlu0
    %v1068 = vpop.trf.xlu0
    %v1069 = vpop.trf.xlu0
    %v1070 = vpop.trf.xlu0
    %v1071 = vpop.trf.xlu0
    %v1072 = vpop.trf.xlu0
    %v1073 = vpop.trf.xlu0
    %v1074 = vpop.trf.xlu0
    %v1075 = vpop.trf.xlu0
    %v1076 = vpop.trf.xlu0
    %v1077 = vpop.trf.xlu0
    %v1078 = vpop.trf.xlu0
    %1079 = vxpose.xlu0.b32.start [1/16] %v24, 128
    %1080 = vxpose.xlu0.b32.cont [2/16] %v32, 128
    %1081 = vxpose.xlu0.b32.cont [3/16] %v40, 128
    %1082 = vxpose.xlu0.b32.cont [4/16] %v48, 128
    %1083 = vxpose.xlu0.b32.cont [5/16] %v56, 128
    %1084 = vxpose.xlu0.b32.cont [6/16] %v64, 128
    %1085 = vxpose.xlu0.b32.cont [7/16] %v72, 128
    %1086 = vxpose.xlu0.b32.cont [8/16] %v80, 128
    %1087 = vxpose.xlu0.b32.cont [9/16] %v88, 128
    %1088 = vxpose.xlu0.b32.cont [10/16] %v96, 128
    %1089 = vxpose.xlu0.b32.cont [11/16] %v104, 128
    %1090 = vxpose.xlu0.b32.cont [12/16] %v112, 128
    %1091 = vxpose.xlu0.b32.cont [13/16] %v120, 128
    %1092 = vxpose.xlu0.b32.cont [14/16] %v128, 128
    %1093 = vxpose.xlu0.b32.cont [15/16] %v136, 128
    %1094 = vxpose.xlu0.b32.end [16/16] %v144, 128
    %v1095 = vpop.trf.xlu0
    %v1096 = vpop.trf.xlu0
    %v1097 = vpop.trf.xlu0
    %v1098 = vpop.trf.xlu0
    %v1099 = vpop.trf.xlu0
    %v1100 = vpop.trf.xlu0
    %v1101 = vpop.trf.xlu0
    %v1102 = vpop.trf.xlu0
    %v1103 = vpop.trf.xlu0
    %v1104 = vpop.trf.xlu0
    %v1105 = vpop.trf.xlu0
    %v1106 = vpop.trf.xlu0
    %v1107 = vpop.trf.xlu0
    %v1108 = vpop.trf.xlu0
    %v1109 = vpop.trf.xlu0
    %v1110 = vpop.trf.xlu0
    %1111 = vxpose.xlu0.b32.start [1/16] %v25, 128
    %1112 = vxpose.xlu0.b32.cont [2/16] %v33, 128
    %1113 = vxpose.xlu0.b32.cont [3/16] %v41, 128
    %1114 = vxpose.xlu0.b32.cont [4/16] %v49, 128
    %1115 = vxpose.xlu0.b32.cont [5/16] %v57, 128
    %1116 = vxpose.xlu0.b32.cont [6/16] %v65, 128
    %1117 = vxpose.xlu0.b32.cont [7/16] %v73, 128
    %1118 = vxpose.xlu0.b32.cont [8/16] %v81, 128
    %1119 = vxpose.xlu0.b32.cont [9/16] %v89, 128
    %1120 = vxpose.xlu0.b32.cont [10/16] %v97, 128
    %1121 = vxpose.xlu0.b32.cont [11/16] %v105, 128
    %1122 = vxpose.xlu0.b32.cont [12/16] %v113, 128
    %1123 = vxpose.xlu0.b32.cont [13/16] %v121, 128
    %1124 = vxpose.xlu0.b32.cont [14/16] %v129, 128
    %1125 = vxpose.xlu0.b32.cont [15/16] %v137, 128
    %1126 = vxpose.xlu0.b32.end [16/16] %v145, 128
    %v1127 = vpop.trf.xlu0
    %v1128 = vpop.trf.xlu0
    %v1129 = vpop.trf.xlu0
    %v1130 = vpop.trf.xlu0
    %v1131 = vpop.trf.xlu0
    %v1132 = vpop.trf.xlu0
    %v1133 = vpop.trf.xlu0
    %v1134 = vpop.trf.xlu0
    %v1135 = vpop.trf.xlu0
    %v1136 = vpop.trf.xlu0
    %v1137 = vpop.trf.xlu0
    %v1138 = vpop.trf.xlu0
    %v1139 = vpop.trf.xlu0
    %v1140 = vpop.trf.xlu0
    %v1141 = vpop.trf.xlu0
    %v1142 = vpop.trf.xlu0
    %1143 = vxpose.xlu0.b32.start [1/16] %v26, 128
    %1144 = vxpose.xlu0.b32.cont [2/16] %v34, 128
    %1145 = vxpose.xlu0.b32.cont [3/16] %v42, 128
    %1146 = vxpose.xlu0.b32.cont [4/16] %v50, 128
    %1147 = vxpose.xlu0.b32.cont [5/16] %v58, 128
    %1148 = vxpose.xlu0.b32.cont [6/16] %v66, 128
    %1149 = vxpose.xlu0.b32.cont [7/16] %v74, 128
    %1150 = vxpose.xlu0.b32.cont [8/16] %v82, 128
    %1151 = vxpose.xlu0.b32.cont [9/16] %v90, 128
    %1152 = vxpose.xlu0.b32.cont [10/16] %v98, 128
    %1153 = vxpose.xlu0.b32.cont [11/16] %v106, 128
    %1154 = vxpose.xlu0.b32.cont [12/16] %v114, 128
    %1155 = vxpose.xlu0.b32.cont [13/16] %v122, 128
    %1156 = vxpose.xlu0.b32.cont [14/16] %v130, 128
    %1157 = vxpose.xlu0.b32.cont [15/16] %v138, 128
    %1158 = vxpose.xlu0.b32.end [16/16] %v146, 128
    %v1159 = vpop.trf.xlu0
    %v1160 = vpop.trf.xlu0
    %v1161 = vpop.trf.xlu0
    %v1162 = vpop.trf.xlu0
    %v1163 = vpop.trf.xlu0
    %v1164 = vpop.trf.xlu0
    %v1165 = vpop.trf.xlu0
    %v1166 = vpop.trf.xlu0
    %v1167 = vpop.trf.xlu0
    %v1168 = vpop.trf.xlu0
    %v1169 = vpop.trf.xlu0
    %v1170 = vpop.trf.xlu0
    %v1171 = vpop.trf.xlu0
    %v1172 = vpop.trf.xlu0
    %v1173 = vpop.trf.xlu0
    %v1174 = vpop.trf.xlu0
    %1175 = vxpose.xlu0.b32.start [1/16] %v27, 128
    %1176 = vxpose.xlu0.b32.cont [2/16] %v35, 128
    %1177 = vxpose.xlu0.b32.cont [3/16] %v43, 128
    %1178 = vxpose.xlu0.b32.cont [4/16] %v51, 128
    %1179 = vxpose.xlu0.b32.cont [5/16] %v59, 128
    %1180 = vxpose.xlu0.b32.cont [6/16] %v67, 128
    %1181 = vxpose.xlu0.b32.cont [7/16] %v75, 128
    %1182 = vxpose.xlu0.b32.cont [8/16] %v83, 128
    %1183 = vxpose.xlu0.b32.cont [9/16] %v91, 128
    %1184 = vxpose.xlu0.b32.cont [10/16] %v99, 128
    %1185 = vxpose.xlu0.b32.cont [11/16] %v107, 128
    %1186 = vxpose.xlu0.b32.cont [12/16] %v115, 128
    %1187 = vxpose.xlu0.b32.cont [13/16] %v123, 128
    %1188 = vxpose.xlu0.b32.cont [14/16] %v131, 128
    %1189 = vxpose.xlu0.b32.cont [15/16] %v139, 128
    %1190 = vxpose.xlu0.b32.end [16/16] %v147, 128
    %v1191 = vpop.trf.xlu0
    %v1192 = vpop.trf.xlu0
    %v1193 = vpop.trf.xlu0
    %v1194 = vpop.trf.xlu0
    %v1195 = vpop.trf.xlu0
    %v1196 = vpop.trf.xlu0
    %v1197 = vpop.trf.xlu0
    %v1198 = vpop.trf.xlu0
    %v1199 = vpop.trf.xlu0
    %v1200 = vpop.trf.xlu0
    %v1201 = vpop.trf.xlu0
    %v1202 = vpop.trf.xlu0
    %v1203 = vpop.trf.xlu0
    %v1204 = vpop.trf.xlu0
    %v1205 = vpop.trf.xlu0
    %v1206 = vpop.trf.xlu0
    %1207 = vxpose.xlu0.b32.start [1/16] %v28, 128
    %1208 = vxpose.xlu0.b32.cont [2/16] %v36, 128
    %1209 = vxpose.xlu0.b32.cont [3/16] %v44, 128
    %1210 = vxpose.xlu0.b32.cont [4/16] %v52, 128
    %1211 = vxpose.xlu0.b32.cont [5/16] %v60, 128
    %1212 = vxpose.xlu0.b32.cont [6/16] %v68, 128
    %1213 = vxpose.xlu0.b32.cont [7/16] %v76, 128
    %1214 = vxpose.xlu0.b32.cont [8/16] %v84, 128
    %1215 = vxpose.xlu0.b32.cont [9/16] %v92, 128
    %1216 = vxpose.xlu0.b32.cont [10/16] %v100, 128
    %1217 = vxpose.xlu0.b32.cont [11/16] %v108, 128
    %1218 = vxpose.xlu0.b32.cont [12/16] %v116, 128
    %1219 = vxpose.xlu0.b32.cont [13/16] %v124, 128
    %1220 = vxpose.xlu0.b32.cont [14/16] %v132, 128
    %1221 = vxpose.xlu0.b32.cont [15/16] %v140, 128
    %1222 = vxpose.xlu0.b32.end [16/16] %v148, 128
    %v1223 = vpop.trf.xlu0
    %v1224 = vpop.trf.xlu0
    %v1225 = vpop.trf.xlu0
    %v1226 = vpop.trf.xlu0
    %v1227 = vpop.trf.xlu0
    %v1228 = vpop.trf.xlu0
    %v1229 = vpop.trf.xlu0
    %v1230 = vpop.trf.xlu0
    %v1231 = vpop.trf.xlu0
    %v1232 = vpop.trf.xlu0
    %v1233 = vpop.trf.xlu0
    %v1234 = vpop.trf.xlu0
    %v1235 = vpop.trf.xlu0
    %v1236 = vpop.trf.xlu0
    %v1237 = vpop.trf.xlu0
    %v1238 = vpop.trf.xlu0
    %1239 = vxpose.xlu0.b32.start [1/16] %v29, 128
    %1240 = vxpose.xlu0.b32.cont [2/16] %v37, 128
    %1241 = vxpose.xlu0.b32.cont [3/16] %v45, 128
    %1242 = vxpose.xlu0.b32.cont [4/16] %v53, 128
    %1243 = vxpose.xlu0.b32.cont [5/16] %v61, 128
    %1244 = vxpose.xlu0.b32.cont [6/16] %v69, 128
    %1245 = vxpose.xlu0.b32.cont [7/16] %v77, 128
    %1246 = vxpose.xlu0.b32.cont [8/16] %v85, 128
    %1247 = vxpose.xlu0.b32.cont [9/16] %v93, 128
    %1248 = vxpose.xlu0.b32.cont [10/16] %v101, 128
    %1249 = vxpose.xlu0.b32.cont [11/16] %v109, 128
    %1250 = vxpose.xlu0.b32.cont [12/16] %v117, 128
    %1251 = vxpose.xlu0.b32.cont [13/16] %v125, 128
    %1252 = vxpose.xlu0.b32.cont [14/16] %v133, 128
    %1253 = vxpose.xlu0.b32.cont [15/16] %v141, 128
    %1254 = vxpose.xlu0.b32.end [16/16] %v149, 128
    %v1255 = vpop.trf.xlu0
    %v1256 = vpop.trf.xlu0
    %v1257 = vpop.trf.xlu0
    %v1258 = vpop.trf.xlu0
    %v1259 = vpop.trf.xlu0
    %v1260 = vpop.trf.xlu0
    %v1261 = vpop.trf.xlu0
    %v1262 = vpop.trf.xlu0
    %v1263 = vpop.trf.xlu0
    %v1264 = vpop.trf.xlu0
    %v1265 = vpop.trf.xlu0
    %v1266 = vpop.trf.xlu0
    %v1267 = vpop.trf.xlu0
    %v1268 = vpop.trf.xlu0
    %v1269 = vpop.trf.xlu0
    %v1270 = vpop.trf.xlu0
    %1271 = vxpose.xlu0.b32.start [1/16] %v30, 128
    %1272 = vxpose.xlu0.b32.cont [2/16] %v38, 128
    %1273 = vxpose.xlu0.b32.cont [3/16] %v46, 128
    %1274 = vxpose.xlu0.b32.cont [4/16] %v54, 128
    %1275 = vxpose.xlu0.b32.cont [5/16] %v62, 128
    %1276 = vxpose.xlu0.b32.cont [6/16] %v70, 128
    %1277 = vxpose.xlu0.b32.cont [7/16] %v78, 128
    %1278 = vxpose.xlu0.b32.cont [8/16] %v86, 128
    %1279 = vxpose.xlu0.b32.cont [9/16] %v94, 128
    %1280 = vxpose.xlu0.b32.cont [10/16] %v102, 128
    %1281 = vxpose.xlu0.b32.cont [11/16] %v110, 128
    %1282 = vxpose.xlu0.b32.cont [12/16] %v118, 128
    %1283 = vxpose.xlu0.b32.cont [13/16] %v126, 128
    %1284 = vxpose.xlu0.b32.cont [14/16] %v134, 128
    %1285 = vxpose.xlu0.b32.cont [15/16] %v142, 128
    %1286 = vxpose.xlu0.b32.end [16/16] %v150, 128
    %v1287 = vpop.trf.xlu0
    %v1288 = vpop.trf.xlu0
    %v1289 = vpop.trf.xlu0
    %v1290 = vpop.trf.xlu0
    %v1291 = vpop.trf.xlu0
    %v1292 = vpop.trf.xlu0
    %v1293 = vpop.trf.xlu0
    %v1294 = vpop.trf.xlu0
    %v1295 = vpop.trf.xlu0
    %v1296 = vpop.trf.xlu0
    %v1297 = vpop.trf.xlu0
    %v1298 = vpop.trf.xlu0
    %v1299 = vpop.trf.xlu0
    %v1300 = vpop.trf.xlu0
    %v1301 = vpop.trf.xlu0
    %v1302 = vpop.trf.xlu0
    %1303 = vxpose.xlu0.b32.start [1/16] %v151, 128
    %1304 = vxpose.xlu0.b32.cont [2/16] %v159, 128
    %1305 = vxpose.xlu0.b32.cont [3/16] %v167, 128
    %1306 = vxpose.xlu0.b32.cont [4/16] %v175, 128
    %1307 = vxpose.xlu0.b32.cont [5/16] %v183, 128
    %1308 = vxpose.xlu0.b32.cont [6/16] %v191, 128
    %1309 = vxpose.xlu0.b32.cont [7/16] %v199, 128
    %1310 = vxpose.xlu0.b32.cont [8/16] %v207, 128
    %1311 = vxpose.xlu0.b32.cont [9/16] %v215, 128
    %1312 = vxpose.xlu0.b32.cont [10/16] %v223, 128
    %1313 = vxpose.xlu0.b32.cont [11/16] %v231, 128
    %1314 = vxpose.xlu0.b32.cont [12/16] %v239, 128
    %1315 = vxpose.xlu0.b32.cont [13/16] %v247, 128
    %1316 = vxpose.xlu0.b32.cont [14/16] %v255, 128
    %1317 = vxpose.xlu0.b32.cont [15/16] %v263, 128
    %1318 = vxpose.xlu0.b32.end [16/16] %v271, 128
    %v1319 = vpop.trf.xlu0
    %v1320 = vpop.trf.xlu0
    %v1321 = vpop.trf.xlu0
    %v1322 = vpop.trf.xlu0
    %v1323 = vpop.trf.xlu0
    %v1324 = vpop.trf.xlu0
    %v1325 = vpop.trf.xlu0
    %v1326 = vpop.trf.xlu0
    %v1327 = vpop.trf.xlu0
    %v1328 = vpop.trf.xlu0
    %v1329 = vpop.trf.xlu0
    %v1330 = vpop.trf.xlu0
    %v1331 = vpop.trf.xlu0
    %v1332 = vpop.trf.xlu0
    %v1333 = vpop.trf.xlu0
    %v1334 = vpop.trf.xlu0
    %1335 = vxpose.xlu0.b32.start [1/16] %v152, 128
    %1336 = vxpose.xlu0.b32.cont [2/16] %v160, 128
    %1337 = vxpose.xlu0.b32.cont [3/16] %v168, 128
    %1338 = vxpose.xlu0.b32.cont [4/16] %v176, 128
    %1339 = vxpose.xlu0.b32.cont [5/16] %v184, 128
    %1340 = vxpose.xlu0.b32.cont [6/16] %v192, 128
    %1341 = vxpose.xlu0.b32.cont [7/16] %v200, 128
    %1342 = vxpose.xlu0.b32.cont [8/16] %v208, 128
    %1343 = vxpose.xlu0.b32.cont [9/16] %v216, 128
    %1344 = vxpose.xlu0.b32.cont [10/16] %v224, 128
    %1345 = vxpose.xlu0.b32.cont [11/16] %v232, 128
    %1346 = vxpose.xlu0.b32.cont [12/16] %v240, 128
    %1347 = vxpose.xlu0.b32.cont [13/16] %v248, 128
    %1348 = vxpose.xlu0.b32.cont [14/16] %v256, 128
    %1349 = vxpose.xlu0.b32.cont [15/16] %v264, 128
    %1350 = vxpose.xlu0.b32.end [16/16] %v272, 128
    %v1351 = vpop.trf.xlu0
    %v1352 = vpop.trf.xlu0
    %v1353 = vpop.trf.xlu0
    %v1354 = vpop.trf.xlu0
    %v1355 = vpop.trf.xlu0
    %v1356 = vpop.trf.xlu0
    %v1357 = vpop.trf.xlu0
    %v1358 = vpop.trf.xlu0
    %v1359 = vpop.trf.xlu0
    %v1360 = vpop.trf.xlu0
    %v1361 = vpop.trf.xlu0
    %v1362 = vpop.trf.xlu0
    %v1363 = vpop.trf.xlu0
    %v1364 = vpop.trf.xlu0
    %v1365 = vpop.trf.xlu0
    %v1366 = vpop.trf.xlu0
    %1367 = vxpose.xlu0.b32.start [1/16] %v153, 128
    %1368 = vxpose.xlu0.b32.cont [2/16] %v161, 128
    %1369 = vxpose.xlu0.b32.cont [3/16] %v169, 128
    %1370 = vxpose.xlu0.b32.cont [4/16] %v177, 128
    %1371 = vxpose.xlu0.b32.cont [5/16] %v185, 128
    %1372 = vxpose.xlu0.b32.cont [6/16] %v193, 128
    %1373 = vxpose.xlu0.b32.cont [7/16] %v201, 128
    %1374 = vxpose.xlu0.b32.cont [8/16] %v209, 128
    %1375 = vxpose.xlu0.b32.cont [9/16] %v217, 128
    %1376 = vxpose.xlu0.b32.cont [10/16] %v225, 128
    %1377 = vxpose.xlu0.b32.cont [11/16] %v233, 128
    %1378 = vxpose.xlu0.b32.cont [12/16] %v241, 128
    %1379 = vxpose.xlu0.b32.cont [13/16] %v249, 128
    %1380 = vxpose.xlu0.b32.cont [14/16] %v257, 128
    %1381 = vxpose.xlu0.b32.cont [15/16] %v265, 128
    %1382 = vxpose.xlu0.b32.end [16/16] %v273, 128
    %v1383 = vpop.trf.xlu0
    %v1384 = vpop.trf.xlu0
    %v1385 = vpop.trf.xlu0
    %v1386 = vpop.trf.xlu0
    %v1387 = vpop.trf.xlu0
    %v1388 = vpop.trf.xlu0
    %v1389 = vpop.trf.xlu0
    %v1390 = vpop.trf.xlu0
    %v1391 = vpop.trf.xlu0
    %v1392 = vpop.trf.xlu0
    %v1393 = vpop.trf.xlu0
    %v1394 = vpop.trf.xlu0
    %v1395 = vpop.trf.xlu0
    %v1396 = vpop.trf.xlu0
    %v1397 = vpop.trf.xlu0
    %v1398 = vpop.trf.xlu0
    %1399 = vxpose.xlu0.b32.start [1/16] %v154, 128
    %1400 = vxpose.xlu0.b32.cont [2/16] %v162, 128
    %1401 = vxpose.xlu0.b32.cont [3/16] %v170, 128
    %1402 = vxpose.xlu0.b32.cont [4/16] %v178, 128
    %1403 = vxpose.xlu0.b32.cont [5/16] %v186, 128
    %1404 = vxpose.xlu0.b32.cont [6/16] %v194, 128
    %1405 = vxpose.xlu0.b32.cont [7/16] %v202, 128
    %1406 = vxpose.xlu0.b32.cont [8/16] %v210, 128
    %1407 = vxpose.xlu0.b32.cont [9/16] %v218, 128
    %1408 = vxpose.xlu0.b32.cont [10/16] %v226, 128
    %1409 = vxpose.xlu0.b32.cont [11/16] %v234, 128
    %1410 = vxpose.xlu0.b32.cont [12/16] %v242, 128
    %1411 = vxpose.xlu0.b32.cont [13/16] %v250, 128
    %1412 = vxpose.xlu0.b32.cont [14/16] %v258, 128
    %1413 = vxpose.xlu0.b32.cont [15/16] %v266, 128
    %1414 = vxpose.xlu0.b32.end [16/16] %v274, 128
    %v1415 = vpop.trf.xlu0
    %v1416 = vpop.trf.xlu0
    %v1417 = vpop.trf.xlu0
    %v1418 = vpop.trf.xlu0
    %v1419 = vpop.trf.xlu0
    %v1420 = vpop.trf.xlu0
    %v1421 = vpop.trf.xlu0
    %v1422 = vpop.trf.xlu0
    %v1423 = vpop.trf.xlu0
    %v1424 = vpop.trf.xlu0
    %v1425 = vpop.trf.xlu0
    %v1426 = vpop.trf.xlu0
    %v1427 = vpop.trf.xlu0
    %v1428 = vpop.trf.xlu0
    %v1429 = vpop.trf.xlu0
    %v1430 = vpop.trf.xlu0
    %1431 = vxpose.xlu0.b32.start [1/16] %v155, 128
    %1432 = vxpose.xlu0.b32.cont [2/16] %v163, 128
    %1433 = vxpose.xlu0.b32.cont [3/16] %v171, 128
    %1434 = vxpose.xlu0.b32.cont [4/16] %v179, 128
    %1435 = vxpose.xlu0.b32.cont [5/16] %v187, 128
    %1436 = vxpose.xlu0.b32.cont [6/16] %v195, 128
    %1437 = vxpose.xlu0.b32.cont [7/16] %v203, 128
    %1438 = vxpose.xlu0.b32.cont [8/16] %v211, 128
    %1439 = vxpose.xlu0.b32.cont [9/16] %v219, 128
    %1440 = vxpose.xlu0.b32.cont [10/16] %v227, 128
    %1441 = vxpose.xlu0.b32.cont [11/16] %v235, 128
    %1442 = vxpose.xlu0.b32.cont [12/16] %v243, 128
    %1443 = vxpose.xlu0.b32.cont [13/16] %v251, 128
    %1444 = vxpose.xlu0.b32.cont [14/16] %v259, 128
    %1445 = vxpose.xlu0.b32.cont [15/16] %v267, 128
    %1446 = vxpose.xlu0.b32.end [16/16] %v275, 128
    %v1447 = vpop.trf.xlu0
    %v1448 = vpop.trf.xlu0
    %v1449 = vpop.trf.xlu0
    %v1450 = vpop.trf.xlu0
    %v1451 = vpop.trf.xlu0
    %v1452 = vpop.trf.xlu0
    %v1453 = vpop.trf.xlu0
    %v1454 = vpop.trf.xlu0
    %v1455 = vpop.trf.xlu0
    %v1456 = vpop.trf.xlu0
    %v1457 = vpop.trf.xlu0
    %v1458 = vpop.trf.xlu0
    %v1459 = vpop.trf.xlu0
    %v1460 = vpop.trf.xlu0
    %v1461 = vpop.trf.xlu0
    %v1462 = vpop.trf.xlu0
    %1463 = vxpose.xlu0.b32.start [1/16] %v156, 128
    %1464 = vxpose.xlu0.b32.cont [2/16] %v164, 128
    %1465 = vxpose.xlu0.b32.cont [3/16] %v172, 128
    %1466 = vxpose.xlu0.b32.cont [4/16] %v180, 128
    %1467 = vxpose.xlu0.b32.cont [5/16] %v188, 128
    %1468 = vxpose.xlu0.b32.cont [6/16] %v196, 128
    %1469 = vxpose.xlu0.b32.cont [7/16] %v204, 128
    %1470 = vxpose.xlu0.b32.cont [8/16] %v212, 128
    %1471 = vxpose.xlu0.b32.cont [9/16] %v220, 128
    %1472 = vxpose.xlu0.b32.cont [10/16] %v228, 128
    %1473 = vxpose.xlu0.b32.cont [11/16] %v236, 128
    %1474 = vxpose.xlu0.b32.cont [12/16] %v244, 128
    %1475 = vxpose.xlu0.b32.cont [13/16] %v252, 128
    %1476 = vxpose.xlu0.b32.cont [14/16] %v260, 128
    %1477 = vxpose.xlu0.b32.cont [15/16] %v268, 128
    %1478 = vxpose.xlu0.b32.end [16/16] %v276, 128
    %v1479 = vpop.trf.xlu0
    %v1480 = vpop.trf.xlu0
    %v1481 = vpop.trf.xlu0
    %v1482 = vpop.trf.xlu0
    %v1483 = vpop.trf.xlu0
    %v1484 = vpop.trf.xlu0
    %v1485 = vpop.trf.xlu0
    %v1486 = vpop.trf.xlu0
    %v1487 = vpop.trf.xlu0
    %v1488 = vpop.trf.xlu0
    %v1489 = vpop.trf.xlu0
    %v1490 = vpop.trf.xlu0
    %v1491 = vpop.trf.xlu0
    %v1492 = vpop.trf.xlu0
    %v1493 = vpop.trf.xlu0
    %v1494 = vpop.trf.xlu0
    %1495 = vxpose.xlu0.b32.start [1/16] %v157, 128
    %1496 = vxpose.xlu0.b32.cont [2/16] %v165, 128
    %1497 = vxpose.xlu0.b32.cont [3/16] %v173, 128
    %1498 = vxpose.xlu0.b32.cont [4/16] %v181, 128
    %1499 = vxpose.xlu0.b32.cont [5/16] %v189, 128
    %1500 = vxpose.xlu0.b32.cont [6/16] %v197, 128
    %1501 = vxpose.xlu0.b32.cont [7/16] %v205, 128
    %1502 = vxpose.xlu0.b32.cont [8/16] %v213, 128
    %1503 = vxpose.xlu0.b32.cont [9/16] %v221, 128
    %1504 = vxpose.xlu0.b32.cont [10/16] %v229, 128
    %1505 = vxpose.xlu0.b32.cont [11/16] %v237, 128
    %1506 = vxpose.xlu0.b32.cont [12/16] %v245, 128
    %1507 = vxpose.xlu0.b32.cont [13/16] %v253, 128
    %1508 = vxpose.xlu0.b32.cont [14/16] %v261, 128
    %1509 = vxpose.xlu0.b32.cont [15/16] %v269, 128
    %1510 = vxpose.xlu0.b32.end [16/16] %v277, 128
    %v1511 = vpop.trf.xlu0
    %v1512 = vpop.trf.xlu0
    %v1513 = vpop.trf.xlu0
    %v1514 = vpop.trf.xlu0
    %v1515 = vpop.trf.xlu0
    %v1516 = vpop.trf.xlu0
    %v1517 = vpop.trf.xlu0
    %v1518 = vpop.trf.xlu0
    %v1519 = vpop.trf.xlu0
    %v1520 = vpop.trf.xlu0
    %v1521 = vpop.trf.xlu0
    %v1522 = vpop.trf.xlu0
    %v1523 = vpop.trf.xlu0
    %v1524 = vpop.trf.xlu0
    %v1525 = vpop.trf.xlu0
    %v1526 = vpop.trf.xlu0
    %1527 = vxpose.xlu0.b32.start [1/16] %v158, 128
    %1528 = vxpose.xlu0.b32.cont [2/16] %v166, 128
    %1529 = vxpose.xlu0.b32.cont [3/16] %v174, 128
    %1530 = vxpose.xlu0.b32.cont [4/16] %v182, 128
    %1531 = vxpose.xlu0.b32.cont [5/16] %v190, 128
    %1532 = vxpose.xlu0.b32.cont [6/16] %v198, 128
    %1533 = vxpose.xlu0.b32.cont [7/16] %v206, 128
    %1534 = vxpose.xlu0.b32.cont [8/16] %v214, 128
    %1535 = vxpose.xlu0.b32.cont [9/16] %v222, 128
    %1536 = vxpose.xlu0.b32.cont [10/16] %v230, 128
    %1537 = vxpose.xlu0.b32.cont [11/16] %v238, 128
    %1538 = vxpose.xlu0.b32.cont [12/16] %v246, 128
    %1539 = vxpose.xlu0.b32.cont [13/16] %v254, 128
    %1540 = vxpose.xlu0.b32.cont [14/16] %v262, 128
    %1541 = vxpose.xlu0.b32.cont [15/16] %v270, 128
    %1542 = vxpose.xlu0.b32.end [16/16] %v278, 128
    %v1543 = vpop.trf.xlu0
    %v1544 = vpop.trf.xlu0
    %v1545 = vpop.trf.xlu0
    %v1546 = vpop.trf.xlu0
    %v1547 = vpop.trf.xlu0
    %v1548 = vpop.trf.xlu0
    %v1549 = vpop.trf.xlu0
    %v1550 = vpop.trf.xlu0
    %v1551 = vpop.trf.xlu0
    %v1552 = vpop.trf.xlu0
    %v1553 = vpop.trf.xlu0
    %v1554 = vpop.trf.xlu0
    %v1555 = vpop.trf.xlu0
    %v1556 = vpop.trf.xlu0
    %v1557 = vpop.trf.xlu0
    %v1558 = vpop.trf.xlu0
    %1559 = vxpose.xlu0.b32.start [1/16] %v279, 128
    %1560 = vxpose.xlu0.b32.cont [2/16] %v287, 128
    %1561 = vxpose.xlu0.b32.cont [3/16] %v295, 128
    %1562 = vxpose.xlu0.b32.cont [4/16] %v303, 128
    %1563 = vxpose.xlu0.b32.cont [5/16] %v311, 128
    %1564 = vxpose.xlu0.b32.cont [6/16] %v319, 128
    %1565 = vxpose.xlu0.b32.cont [7/16] %v327, 128
    %1566 = vxpose.xlu0.b32.cont [8/16] %v335, 128
    %1567 = vxpose.xlu0.b32.cont [9/16] %v343, 128
    %1568 = vxpose.xlu0.b32.cont [10/16] %v351, 128
    %1569 = vxpose.xlu0.b32.cont [11/16] %v359, 128
    %1570 = vxpose.xlu0.b32.cont [12/16] %v367, 128
    %1571 = vxpose.xlu0.b32.cont [13/16] %v375, 128
    %1572 = vxpose.xlu0.b32.cont [14/16] %v383, 128
    %1573 = vxpose.xlu0.b32.cont [15/16] %v391, 128
    %1574 = vxpose.xlu0.b32.end [16/16] %v399, 128
    %v1575 = vpop.trf.xlu0
    %v1576 = vpop.trf.xlu0
    %v1577 = vpop.trf.xlu0
    %v1578 = vpop.trf.xlu0
    %v1579 = vpop.trf.xlu0
    %v1580 = vpop.trf.xlu0
    %v1581 = vpop.trf.xlu0
    %v1582 = vpop.trf.xlu0
    %v1583 = vpop.trf.xlu0
    %v1584 = vpop.trf.xlu0
    %v1585 = vpop.trf.xlu0
    %v1586 = vpop.trf.xlu0
    %v1587 = vpop.trf.xlu0
    %v1588 = vpop.trf.xlu0
    %v1589 = vpop.trf.xlu0
    %v1590 = vpop.trf.xlu0
    %1591 = vxpose.xlu0.b32.start [1/16] %v280, 128
    %1592 = vxpose.xlu0.b32.cont [2/16] %v288, 128
    %1593 = vxpose.xlu0.b32.cont [3/16] %v296, 128
    %1594 = vxpose.xlu0.b32.cont [4/16] %v304, 128
    %1595 = vxpose.xlu0.b32.cont [5/16] %v312, 128
    %1596 = vxpose.xlu0.b32.cont [6/16] %v320, 128
    %1597 = vxpose.xlu0.b32.cont [7/16] %v328, 128
    %1598 = vxpose.xlu0.b32.cont [8/16] %v336, 128
    %1599 = vxpose.xlu0.b32.cont [9/16] %v344, 128
    %1600 = vxpose.xlu0.b32.cont [10/16] %v352, 128
    %1601 = vxpose.xlu0.b32.cont [11/16] %v360, 128
    %1602 = vxpose.xlu0.b32.cont [12/16] %v368, 128
    %1603 = vxpose.xlu0.b32.cont [13/16] %v376, 128
    %1604 = vxpose.xlu0.b32.cont [14/16] %v384, 128
    %1605 = vxpose.xlu0.b32.cont [15/16] %v392, 128
    %1606 = vxpose.xlu0.b32.end [16/16] %v400, 128
    %v1607 = vpop.trf.xlu0
    %v1608 = vpop.trf.xlu0
    %v1609 = vpop.trf.xlu0
    %v1610 = vpop.trf.xlu0
    %v1611 = vpop.trf.xlu0
    %v1612 = vpop.trf.xlu0
    %v1613 = vpop.trf.xlu0
    %v1614 = vpop.trf.xlu0
    %v1615 = vpop.trf.xlu0
    %v1616 = vpop.trf.xlu0
    %v1617 = vpop.trf.xlu0
    %v1618 = vpop.trf.xlu0
    %v1619 = vpop.trf.xlu0
    %v1620 = vpop.trf.xlu0
    %v1621 = vpop.trf.xlu0
    %v1622 = vpop.trf.xlu0
    %1623 = vxpose.xlu0.b32.start [1/16] %v281, 128
    %1624 = vxpose.xlu0.b32.cont [2/16] %v289, 128
    %1625 = vxpose.xlu0.b32.cont [3/16] %v297, 128
    %1626 = vxpose.xlu0.b32.cont [4/16] %v305, 128
    %1627 = vxpose.xlu0.b32.cont [5/16] %v313, 128
    %1628 = vxpose.xlu0.b32.cont [6/16] %v321, 128
    %1629 = vxpose.xlu0.b32.cont [7/16] %v329, 128
    %1630 = vxpose.xlu0.b32.cont [8/16] %v337, 128
    %1631 = vxpose.xlu0.b32.cont [9/16] %v345, 128
    %1632 = vxpose.xlu0.b32.cont [10/16] %v353, 128
    %1633 = vxpose.xlu0.b32.cont [11/16] %v361, 128
    %1634 = vxpose.xlu0.b32.cont [12/16] %v369, 128
    %1635 = vxpose.xlu0.b32.cont [13/16] %v377, 128
    %1636 = vxpose.xlu0.b32.cont [14/16] %v385, 128
    %1637 = vxpose.xlu0.b32.cont [15/16] %v393, 128
    %1638 = vxpose.xlu0.b32.end [16/16] %v401, 128
    %v1639 = vpop.trf.xlu0
    %v1640 = vpop.trf.xlu0
    %v1641 = vpop.trf.xlu0
    %v1642 = vpop.trf.xlu0
    %v1643 = vpop.trf.xlu0
    %v1644 = vpop.trf.xlu0
    %v1645 = vpop.trf.xlu0
    %v1646 = vpop.trf.xlu0
    %v1647 = vpop.trf.xlu0
    %v1648 = vpop.trf.xlu0
    %v1649 = vpop.trf.xlu0
    %v1650 = vpop.trf.xlu0
    %v1651 = vpop.trf.xlu0
    %v1652 = vpop.trf.xlu0
    %v1653 = vpop.trf.xlu0
    %v1654 = vpop.trf.xlu0
    %1655 = vxpose.xlu0.b32.start [1/16] %v282, 128
    %1656 = vxpose.xlu0.b32.cont [2/16] %v290, 128
    %1657 = vxpose.xlu0.b32.cont [3/16] %v298, 128
    %1658 = vxpose.xlu0.b32.cont [4/16] %v306, 128
    %1659 = vxpose.xlu0.b32.cont [5/16] %v314, 128
    %1660 = vxpose.xlu0.b32.cont [6/16] %v322, 128
    %1661 = vxpose.xlu0.b32.cont [7/16] %v330, 128
    %1662 = vxpose.xlu0.b32.cont [8/16] %v338, 128
    %1663 = vxpose.xlu0.b32.cont [9/16] %v346, 128
    %1664 = vxpose.xlu0.b32.cont [10/16] %v354, 128
    %1665 = vxpose.xlu0.b32.cont [11/16] %v362, 128
    %1666 = vxpose.xlu0.b32.cont [12/16] %v370, 128
    %1667 = vxpose.xlu0.b32.cont [13/16] %v378, 128
    %1668 = vxpose.xlu0.b32.cont [14/16] %v386, 128
    %1669 = vxpose.xlu0.b32.cont [15/16] %v394, 128
    %1670 = vxpose.xlu0.b32.end [16/16] %v402, 128
    %v1671 = vpop.trf.xlu0
    %v1672 = vpop.trf.xlu0
    %v1673 = vpop.trf.xlu0
    %v1674 = vpop.trf.xlu0
    %v1675 = vpop.trf.xlu0
    %v1676 = vpop.trf.xlu0
    %v1677 = vpop.trf.xlu0
    %v1678 = vpop.trf.xlu0
    %v1679 = vpop.trf.xlu0
    %v1680 = vpop.trf.xlu0
    %v1681 = vpop.trf.xlu0
    %v1682 = vpop.trf.xlu0
    %v1683 = vpop.trf.xlu0
    %v1684 = vpop.trf.xlu0
    %v1685 = vpop.trf.xlu0
    %v1686 = vpop.trf.xlu0
    %1687 = vxpose.xlu0.b32.start [1/16] %v283, 128
    %1688 = vxpose.xlu0.b32.cont [2/16] %v291, 128
    %1689 = vxpose.xlu0.b32.cont [3/16] %v299, 128
    %1690 = vxpose.xlu0.b32.cont [4/16] %v307, 128
    %1691 = vxpose.xlu0.b32.cont [5/16] %v315, 128
    %1692 = vxpose.xlu0.b32.cont [6/16] %v323, 128
    %1693 = vxpose.xlu0.b32.cont [7/16] %v331, 128
    %1694 = vxpose.xlu0.b32.cont [8/16] %v339, 128
    %1695 = vxpose.xlu0.b32.cont [9/16] %v347, 128
    %1696 = vxpose.xlu0.b32.cont [10/16] %v355, 128
    %1697 = vxpose.xlu0.b32.cont [11/16] %v363, 128
    %1698 = vxpose.xlu0.b32.cont [12/16] %v371, 128
    %1699 = vxpose.xlu0.b32.cont [13/16] %v379, 128
    %1700 = vxpose.xlu0.b32.cont [14/16] %v387, 128
    %1701 = vxpose.xlu0.b32.cont [15/16] %v395, 128
    %1702 = vxpose.xlu0.b32.end [16/16] %v403, 128
    %v1703 = vpop.trf.xlu0
    %v1704 = vpop.trf.xlu0
    %v1705 = vpop.trf.xlu0
    %v1706 = vpop.trf.xlu0
    %v1707 = vpop.trf.xlu0
    %v1708 = vpop.trf.xlu0
    %v1709 = vpop.trf.xlu0
    %v1710 = vpop.trf.xlu0
    %v1711 = vpop.trf.xlu0
    %v1712 = vpop.trf.xlu0
    %v1713 = vpop.trf.xlu0
    %v1714 = vpop.trf.xlu0
    %v1715 = vpop.trf.xlu0
    %v1716 = vpop.trf.xlu0
    %v1717 = vpop.trf.xlu0
    %v1718 = vpop.trf.xlu0
    %1719 = vxpose.xlu0.b32.start [1/16] %v284, 128
    %1720 = vxpose.xlu0.b32.cont [2/16] %v292, 128
    %1721 = vxpose.xlu0.b32.cont [3/16] %v300, 128
    %1722 = vxpose.xlu0.b32.cont [4/16] %v308, 128
    %1723 = vxpose.xlu0.b32.cont [5/16] %v316, 128
    %1724 = vxpose.xlu0.b32.cont [6/16] %v324, 128
    %1725 = vxpose.xlu0.b32.cont [7/16] %v332, 128
    %1726 = vxpose.xlu0.b32.cont [8/16] %v340, 128
    %1727 = vxpose.xlu0.b32.cont [9/16] %v348, 128
    %1728 = vxpose.xlu0.b32.cont [10/16] %v356, 128
    %1729 = vxpose.xlu0.b32.cont [11/16] %v364, 128
    %1730 = vxpose.xlu0.b32.cont [12/16] %v372, 128
    %1731 = vxpose.xlu0.b32.cont [13/16] %v380, 128
    %1732 = vxpose.xlu0.b32.cont [14/16] %v388, 128
    %1733 = vxpose.xlu0.b32.cont [15/16] %v396, 128
    %1734 = vxpose.xlu0.b32.end [16/16] %v404, 128
    %v1735 = vpop.trf.xlu0
    %v1736 = vpop.trf.xlu0
    %v1737 = vpop.trf.xlu0
    %v1738 = vpop.trf.xlu0
    %v1739 = vpop.trf.xlu0
    %v1740 = vpop.trf.xlu0
    %v1741 = vpop.trf.xlu0
    %v1742 = vpop.trf.xlu0
    %v1743 = vpop.trf.xlu0
    %v1744 = vpop.trf.xlu0
    %v1745 = vpop.trf.xlu0
    %v1746 = vpop.trf.xlu0
    %v1747 = vpop.trf.xlu0
    %v1748 = vpop.trf.xlu0
    %v1749 = vpop.trf.xlu0
    %v1750 = vpop.trf.xlu0
    %1751 = vxpose.xlu0.b32.start [1/16] %v285, 128
    %1752 = vxpose.xlu0.b32.cont [2/16] %v293, 128
    %1753 = vxpose.xlu0.b32.cont [3/16] %v301, 128
    %1754 = vxpose.xlu0.b32.cont [4/16] %v309, 128
    %1755 = vxpose.xlu0.b32.cont [5/16] %v317, 128
    %1756 = vxpose.xlu0.b32.cont [6/16] %v325, 128
    %1757 = vxpose.xlu0.b32.cont [7/16] %v333, 128
    %1758 = vxpose.xlu0.b32.cont [8/16] %v341, 128
    %1759 = vxpose.xlu0.b32.cont [9/16] %v349, 128
    %1760 = vxpose.xlu0.b32.cont [10/16] %v357, 128
    %1761 = vxpose.xlu0.b32.cont [11/16] %v365, 128
    %1762 = vxpose.xlu0.b32.cont [12/16] %v373, 128
    %1763 = vxpose.xlu0.b32.cont [13/16] %v381, 128
    %1764 = vxpose.xlu0.b32.cont [14/16] %v389, 128
    %1765 = vxpose.xlu0.b32.cont [15/16] %v397, 128
    %1766 = vxpose.xlu0.b32.end [16/16] %v405, 128
    %v1767 = vpop.trf.xlu0
    %v1768 = vpop.trf.xlu0
    %v1769 = vpop.trf.xlu0
    %v1770 = vpop.trf.xlu0
    %v1771 = vpop.trf.xlu0
    %v1772 = vpop.trf.xlu0
    %v1773 = vpop.trf.xlu0
    %v1774 = vpop.trf.xlu0
    %v1775 = vpop.trf.xlu0
    %v1776 = vpop.trf.xlu0
    %v1777 = vpop.trf.xlu0
    %v1778 = vpop.trf.xlu0
    %v1779 = vpop.trf.xlu0
    %v1780 = vpop.trf.xlu0
    %v1781 = vpop.trf.xlu0
    %v1782 = vpop.trf.xlu0
    %1783 = vxpose.xlu0.b32.start [1/16] %v286, 128
    %1784 = vxpose.xlu0.b32.cont [2/16] %v294, 128
    %1785 = vxpose.xlu0.b32.cont [3/16] %v302, 128
    %1786 = vxpose.xlu0.b32.cont [4/16] %v310, 128
    %1787 = vxpose.xlu0.b32.cont [5/16] %v318, 128
    %1788 = vxpose.xlu0.b32.cont [6/16] %v326, 128
    %1789 = vxpose.xlu0.b32.cont [7/16] %v334, 128
    %1790 = vxpose.xlu0.b32.cont [8/16] %v342, 128
    %1791 = vxpose.xlu0.b32.cont [9/16] %v350, 128
    %1792 = vxpose.xlu0.b32.cont [10/16] %v358, 128
    %1793 = vxpose.xlu0.b32.cont [11/16] %v366, 128
    %1794 = vxpose.xlu0.b32.cont [12/16] %v374, 128
    %1795 = vxpose.xlu0.b32.cont [13/16] %v382, 128
    %1796 = vxpose.xlu0.b32.cont [14/16] %v390, 128
    %1797 = vxpose.xlu0.b32.cont [15/16] %v398, 128
    %1798 = vxpose.xlu0.b32.end [16/16] %v406, 128
    %v1799 = vpop.trf.xlu0
    %v1800 = vpop.trf.xlu0
    %v1801 = vpop.trf.xlu0
    %v1802 = vpop.trf.xlu0
    %v1803 = vpop.trf.xlu0
    %v1804 = vpop.trf.xlu0
    %v1805 = vpop.trf.xlu0
    %v1806 = vpop.trf.xlu0
    %v1807 = vpop.trf.xlu0
    %v1808 = vpop.trf.xlu0
    %v1809 = vpop.trf.xlu0
    %v1810 = vpop.trf.xlu0
    %v1811 = vpop.trf.xlu0
    %v1812 = vpop.trf.xlu0
    %v1813 = vpop.trf.xlu0
    %v1814 = vpop.trf.xlu0
    %1815 = vxpose.xlu0.b32.start [1/16] %v407, 128
    %1816 = vxpose.xlu0.b32.cont [2/16] %v415, 128
    %1817 = vxpose.xlu0.b32.cont [3/16] %v423, 128
    %1818 = vxpose.xlu0.b32.cont [4/16] %v431, 128
    %1819 = vxpose.xlu0.b32.cont [5/16] %v439, 128
    %1820 = vxpose.xlu0.b32.cont [6/16] %v447, 128
    %1821 = vxpose.xlu0.b32.cont [7/16] %v455, 128
    %1822 = vxpose.xlu0.b32.cont [8/16] %v463, 128
    %1823 = vxpose.xlu0.b32.cont [9/16] %v471, 128
    %1824 = vxpose.xlu0.b32.cont [10/16] %v479, 128
    %1825 = vxpose.xlu0.b32.cont [11/16] %v487, 128
    %1826 = vxpose.xlu0.b32.cont [12/16] %v495, 128
    %1827 = vxpose.xlu0.b32.cont [13/16] %v503, 128
    %1828 = vxpose.xlu0.b32.cont [14/16] %v511, 128
    %1829 = vxpose.xlu0.b32.cont [15/16] %v519, 128
    %1830 = vxpose.xlu0.b32.end [16/16] %v527, 128
    %v1831 = vpop.trf.xlu0
    %v1832 = vpop.trf.xlu0
    %v1833 = vpop.trf.xlu0
    %v1834 = vpop.trf.xlu0
    %v1835 = vpop.trf.xlu0
    %v1836 = vpop.trf.xlu0
    %v1837 = vpop.trf.xlu0
    %v1838 = vpop.trf.xlu0
    %v1839 = vpop.trf.xlu0
    %v1840 = vpop.trf.xlu0
    %v1841 = vpop.trf.xlu0
    %v1842 = vpop.trf.xlu0
    %v1843 = vpop.trf.xlu0
    %v1844 = vpop.trf.xlu0
    %v1845 = vpop.trf.xlu0
    %v1846 = vpop.trf.xlu0
    %1847 = vxpose.xlu0.b32.start [1/16] %v408, 128
    %1848 = vxpose.xlu0.b32.cont [2/16] %v416, 128
    %1849 = vxpose.xlu0.b32.cont [3/16] %v424, 128
    %1850 = vxpose.xlu0.b32.cont [4/16] %v432, 128
    %1851 = vxpose.xlu0.b32.cont [5/16] %v440, 128
    %1852 = vxpose.xlu0.b32.cont [6/16] %v448, 128
    %1853 = vxpose.xlu0.b32.cont [7/16] %v456, 128
    %1854 = vxpose.xlu0.b32.cont [8/16] %v464, 128
    %1855 = vxpose.xlu0.b32.cont [9/16] %v472, 128
    %1856 = vxpose.xlu0.b32.cont [10/16] %v480, 128
    %1857 = vxpose.xlu0.b32.cont [11/16] %v488, 128
    %1858 = vxpose.xlu0.b32.cont [12/16] %v496, 128
    %1859 = vxpose.xlu0.b32.cont [13/16] %v504, 128
    %1860 = vxpose.xlu0.b32.cont [14/16] %v512, 128
    %1861 = vxpose.xlu0.b32.cont [15/16] %v520, 128
    %1862 = vxpose.xlu0.b32.end [16/16] %v528, 128
    %v1863 = vpop.trf.xlu0
    %v1864 = vpop.trf.xlu0
    %v1865 = vpop.trf.xlu0
    %v1866 = vpop.trf.xlu0
    %v1867 = vpop.trf.xlu0
    %v1868 = vpop.trf.xlu0
    %v1869 = vpop.trf.xlu0
    %v1870 = vpop.trf.xlu0
    %v1871 = vpop.trf.xlu0
    %v1872 = vpop.trf.xlu0
    %v1873 = vpop.trf.xlu0
    %v1874 = vpop.trf.xlu0
    %v1875 = vpop.trf.xlu0
    %v1876 = vpop.trf.xlu0
    %v1877 = vpop.trf.xlu0
    %v1878 = vpop.trf.xlu0
    %1879 = vxpose.xlu0.b32.start [1/16] %v409, 128
    %1880 = vxpose.xlu0.b32.cont [2/16] %v417, 128
    %1881 = vxpose.xlu0.b32.cont [3/16] %v425, 128
    %1882 = vxpose.xlu0.b32.cont [4/16] %v433, 128
    %1883 = vxpose.xlu0.b32.cont [5/16] %v441, 128
    %1884 = vxpose.xlu0.b32.cont [6/16] %v449, 128
    %1885 = vxpose.xlu0.b32.cont [7/16] %v457, 128
    %1886 = vxpose.xlu0.b32.cont [8/16] %v465, 128
    %1887 = vxpose.xlu0.b32.cont [9/16] %v473, 128
    %1888 = vxpose.xlu0.b32.cont [10/16] %v481, 128
    %1889 = vxpose.xlu0.b32.cont [11/16] %v489, 128
    %1890 = vxpose.xlu0.b32.cont [12/16] %v497, 128
    %1891 = vxpose.xlu0.b32.cont [13/16] %v505, 128
    %1892 = vxpose.xlu0.b32.cont [14/16] %v513, 128
    %1893 = vxpose.xlu0.b32.cont [15/16] %v521, 128
    %1894 = vxpose.xlu0.b32.end [16/16] %v529, 128
    %v1895 = vpop.trf.xlu0
    %v1896 = vpop.trf.xlu0
    %v1897 = vpop.trf.xlu0
    %v1898 = vpop.trf.xlu0
    %v1899 = vpop.trf.xlu0
    %v1900 = vpop.trf.xlu0
    %v1901 = vpop.trf.xlu0
    %v1902 = vpop.trf.xlu0
    %v1903 = vpop.trf.xlu0
    %v1904 = vpop.trf.xlu0
    %v1905 = vpop.trf.xlu0
    %v1906 = vpop.trf.xlu0
    %v1907 = vpop.trf.xlu0
    %v1908 = vpop.trf.xlu0
    %v1909 = vpop.trf.xlu0
    %v1910 = vpop.trf.xlu0
    %1911 = vxpose.xlu0.b32.start [1/16] %v410, 128
    %1912 = vxpose.xlu0.b32.cont [2/16] %v418, 128
    %1913 = vxpose.xlu0.b32.cont [3/16] %v426, 128
    %1914 = vxpose.xlu0.b32.cont [4/16] %v434, 128
    %1915 = vxpose.xlu0.b32.cont [5/16] %v442, 128
    %1916 = vxpose.xlu0.b32.cont [6/16] %v450, 128
    %1917 = vxpose.xlu0.b32.cont [7/16] %v458, 128
    %1918 = vxpose.xlu0.b32.cont [8/16] %v466, 128
    %1919 = vxpose.xlu0.b32.cont [9/16] %v474, 128
    %1920 = vxpose.xlu0.b32.cont [10/16] %v482, 128
    %1921 = vxpose.xlu0.b32.cont [11/16] %v490, 128
    %1922 = vxpose.xlu0.b32.cont [12/16] %v498, 128
    %1923 = vxpose.xlu0.b32.cont [13/16] %v506, 128
    %1924 = vxpose.xlu0.b32.cont [14/16] %v514, 128
    %1925 = vxpose.xlu0.b32.cont [15/16] %v522, 128
    %1926 = vxpose.xlu0.b32.end [16/16] %v530, 128
    %v1927 = vpop.trf.xlu0
    %v1928 = vpop.trf.xlu0
    %v1929 = vpop.trf.xlu0
    %v1930 = vpop.trf.xlu0
    %v1931 = vpop.trf.xlu0
    %v1932 = vpop.trf.xlu0
    %v1933 = vpop.trf.xlu0
    %v1934 = vpop.trf.xlu0
    %v1935 = vpop.trf.xlu0
    %v1936 = vpop.trf.xlu0
    %v1937 = vpop.trf.xlu0
    %v1938 = vpop.trf.xlu0
    %v1939 = vpop.trf.xlu0
    %v1940 = vpop.trf.xlu0
    %v1941 = vpop.trf.xlu0
    %v1942 = vpop.trf.xlu0
    %1943 = vxpose.xlu0.b32.start [1/16] %v411, 128
    %1944 = vxpose.xlu0.b32.cont [2/16] %v419, 128
    %1945 = vxpose.xlu0.b32.cont [3/16] %v427, 128
    %1946 = vxpose.xlu0.b32.cont [4/16] %v435, 128
    %1947 = vxpose.xlu0.b32.cont [5/16] %v443, 128
    %1948 = vxpose.xlu0.b32.cont [6/16] %v451, 128
    %1949 = vxpose.xlu0.b32.cont [7/16] %v459, 128
    %1950 = vxpose.xlu0.b32.cont [8/16] %v467, 128
    %1951 = vxpose.xlu0.b32.cont [9/16] %v475, 128
    %1952 = vxpose.xlu0.b32.cont [10/16] %v483, 128
    %1953 = vxpose.xlu0.b32.cont [11/16] %v491, 128
    %1954 = vxpose.xlu0.b32.cont [12/16] %v499, 128
    %1955 = vxpose.xlu0.b32.cont [13/16] %v507, 128
    %1956 = vxpose.xlu0.b32.cont [14/16] %v515, 128
    %1957 = vxpose.xlu0.b32.cont [15/16] %v523, 128
    %1958 = vxpose.xlu0.b32.end [16/16] %v531, 128
    %v1959 = vpop.trf.xlu0
    %v1960 = vpop.trf.xlu0
    %v1961 = vpop.trf.xlu0
    %v1962 = vpop.trf.xlu0
    %v1963 = vpop.trf.xlu0
    %v1964 = vpop.trf.xlu0
    %v1965 = vpop.trf.xlu0
    %v1966 = vpop.trf.xlu0
    %v1967 = vpop.trf.xlu0
    %v1968 = vpop.trf.xlu0
    %v1969 = vpop.trf.xlu0
    %v1970 = vpop.trf.xlu0
    %v1971 = vpop.trf.xlu0
    %v1972 = vpop.trf.xlu0
    %v1973 = vpop.trf.xlu0
    %v1974 = vpop.trf.xlu0
    %1975 = vxpose.xlu0.b32.start [1/16] %v412, 128
    %1976 = vxpose.xlu0.b32.cont [2/16] %v420, 128
    %1977 = vxpose.xlu0.b32.cont [3/16] %v428, 128
    %1978 = vxpose.xlu0.b32.cont [4/16] %v436, 128
    %1979 = vxpose.xlu0.b32.cont [5/16] %v444, 128
    %1980 = vxpose.xlu0.b32.cont [6/16] %v452, 128
    %1981 = vxpose.xlu0.b32.cont [7/16] %v460, 128
    %1982 = vxpose.xlu0.b32.cont [8/16] %v468, 128
    %1983 = vxpose.xlu0.b32.cont [9/16] %v476, 128
    %1984 = vxpose.xlu0.b32.cont [10/16] %v484, 128
    %1985 = vxpose.xlu0.b32.cont [11/16] %v492, 128
    %1986 = vxpose.xlu0.b32.cont [12/16] %v500, 128
    %1987 = vxpose.xlu0.b32.cont [13/16] %v508, 128
    %1988 = vxpose.xlu0.b32.cont [14/16] %v516, 128
    %1989 = vxpose.xlu0.b32.cont [15/16] %v524, 128
    %1990 = vxpose.xlu0.b32.end [16/16] %v532, 128
    %v1991 = vpop.trf.xlu0
    %v1992 = vpop.trf.xlu0
    %v1993 = vpop.trf.xlu0
    %v1994 = vpop.trf.xlu0
    %v1995 = vpop.trf.xlu0
    %v1996 = vpop.trf.xlu0
    %v1997 = vpop.trf.xlu0
    %v1998 = vpop.trf.xlu0
    %v1999 = vpop.trf.xlu0
    %v2000 = vpop.trf.xlu0
    %v2001 = vpop.trf.xlu0
    %v2002 = vpop.trf.xlu0
    %v2003 = vpop.trf.xlu0
    %v2004 = vpop.trf.xlu0
    %v2005 = vpop.trf.xlu0
    %v2006 = vpop.trf.xlu0
    %2007 = vxpose.xlu0.b32.start [1/16] %v413, 128
    %2008 = vxpose.xlu0.b32.cont [2/16] %v421, 128
    %2009 = vxpose.xlu0.b32.cont [3/16] %v429, 128
    %2010 = vxpose.xlu0.b32.cont [4/16] %v437, 128
    %2011 = vxpose.xlu0.b32.cont [5/16] %v445, 128
    %2012 = vxpose.xlu0.b32.cont [6/16] %v453, 128
    %2013 = vxpose.xlu0.b32.cont [7/16] %v461, 128
    %2014 = vxpose.xlu0.b32.cont [8/16] %v469, 128
    %2015 = vxpose.xlu0.b32.cont [9/16] %v477, 128
    %2016 = vxpose.xlu0.b32.cont [10/16] %v485, 128
    %2017 = vxpose.xlu0.b32.cont [11/16] %v493, 128
    %2018 = vxpose.xlu0.b32.cont [12/16] %v501, 128
    %2019 = vxpose.xlu0.b32.cont [13/16] %v509, 128
    %2020 = vxpose.xlu0.b32.cont [14/16] %v517, 128
    %2021 = vxpose.xlu0.b32.cont [15/16] %v525, 128
    %2022 = vxpose.xlu0.b32.end [16/16] %v533, 128
    %v2023 = vpop.trf.xlu0
    %v2024 = vpop.trf.xlu0
    %v2025 = vpop.trf.xlu0
    %v2026 = vpop.trf.xlu0
    %v2027 = vpop.trf.xlu0
    %v2028 = vpop.trf.xlu0
    %v2029 = vpop.trf.xlu0
    %v2030 = vpop.trf.xlu0
    %v2031 = vpop.trf.xlu0
    %v2032 = vpop.trf.xlu0
    %v2033 = vpop.trf.xlu0
    %v2034 = vpop.trf.xlu0
    %v2035 = vpop.trf.xlu0
    %v2036 = vpop.trf.xlu0
    %v2037 = vpop.trf.xlu0
    %v2038 = vpop.trf.xlu0
    %2039 = vxpose.xlu0.b32.start [1/16] %v414, 128
    %2040 = vxpose.xlu0.b32.cont [2/16] %v422, 128
    %2041 = vxpose.xlu0.b32.cont [3/16] %v430, 128
    %2042 = vxpose.xlu0.b32.cont [4/16] %v438, 128
    %2043 = vxpose.xlu0.b32.cont [5/16] %v446, 128
    %2044 = vxpose.xlu0.b32.cont [6/16] %v454, 128
    %2045 = vxpose.xlu0.b32.cont [7/16] %v462, 128
    %2046 = vxpose.xlu0.b32.cont [8/16] %v470, 128
    %2047 = vxpose.xlu0.b32.cont [9/16] %v478, 128
    %2048 = vxpose.xlu0.b32.cont [10/16] %v486, 128
    %2049 = vxpose.xlu0.b32.cont [11/16] %v494, 128
    %2050 = vxpose.xlu0.b32.cont [12/16] %v502, 128
    %2051 = vxpose.xlu0.b32.cont [13/16] %v510, 128
    %2052 = vxpose.xlu0.b32.cont [14/16] %v518, 128
    %2053 = vxpose.xlu0.b32.cont [15/16] %v526, 128
    %2054 = vxpose.xlu0.b32.end [16/16] %v534, 128
    %v2055 = vpop.trf.xlu0
    %v2056 = vpop.trf.xlu0
    %v2057 = vpop.trf.xlu0
    %v2058 = vpop.trf.xlu0
    %v2059 = vpop.trf.xlu0
    %v2060 = vpop.trf.xlu0
    %v2061 = vpop.trf.xlu0
    %v2062 = vpop.trf.xlu0
    %v2063 = vpop.trf.xlu0
    %v2064 = vpop.trf.xlu0
    %v2065 = vpop.trf.xlu0
    %v2066 = vpop.trf.xlu0
    %v2067 = vpop.trf.xlu0
    %v2068 = vpop.trf.xlu0
    %v2069 = vpop.trf.xlu0
    %v2070 = vpop.trf.xlu0
    %2071 = vxpose.xlu0.b32.start [1/16] %v535, 128
    %2072 = vxpose.xlu0.b32.cont [2/16] %v543, 128
    %2073 = vxpose.xlu0.b32.cont [3/16] %v551, 128
    %2074 = vxpose.xlu0.b32.cont [4/16] %v559, 128
    %2075 = vxpose.xlu0.b32.cont [5/16] %v567, 128
    %2076 = vxpose.xlu0.b32.cont [6/16] %v575, 128
    %2077 = vxpose.xlu0.b32.cont [7/16] %v583, 128
    %2078 = vxpose.xlu0.b32.cont [8/16] %v591, 128
    %2079 = vxpose.xlu0.b32.cont [9/16] %v599, 128
    %2080 = vxpose.xlu0.b32.cont [10/16] %v607, 128
    %2081 = vxpose.xlu0.b32.cont [11/16] %v615, 128
    %2082 = vxpose.xlu0.b32.cont [12/16] %v623, 128
    %2083 = vxpose.xlu0.b32.cont [13/16] %v631, 128
    %2084 = vxpose.xlu0.b32.cont [14/16] %v639, 128
    %2085 = vxpose.xlu0.b32.cont [15/16] %v647, 128
    %2086 = vxpose.xlu0.b32.end [16/16] %v655, 128
    %v2087 = vpop.trf.xlu0
    %v2088 = vpop.trf.xlu0
    %v2089 = vpop.trf.xlu0
    %v2090 = vpop.trf.xlu0
    %v2091 = vpop.trf.xlu0
    %v2092 = vpop.trf.xlu0
    %v2093 = vpop.trf.xlu0
    %v2094 = vpop.trf.xlu0
    %v2095 = vpop.trf.xlu0
    %v2096 = vpop.trf.xlu0
    %v2097 = vpop.trf.xlu0
    %v2098 = vpop.trf.xlu0
    %v2099 = vpop.trf.xlu0
    %v2100 = vpop.trf.xlu0
    %v2101 = vpop.trf.xlu0
    %v2102 = vpop.trf.xlu0
    %2103 = vxpose.xlu0.b32.start [1/16] %v536, 128
    %2104 = vxpose.xlu0.b32.cont [2/16] %v544, 128
    %2105 = vxpose.xlu0.b32.cont [3/16] %v552, 128
    %2106 = vxpose.xlu0.b32.cont [4/16] %v560, 128
    %2107 = vxpose.xlu0.b32.cont [5/16] %v568, 128
    %2108 = vxpose.xlu0.b32.cont [6/16] %v576, 128
    %2109 = vxpose.xlu0.b32.cont [7/16] %v584, 128
    %2110 = vxpose.xlu0.b32.cont [8/16] %v592, 128
    %2111 = vxpose.xlu0.b32.cont [9/16] %v600, 128
    %2112 = vxpose.xlu0.b32.cont [10/16] %v608, 128
    %2113 = vxpose.xlu0.b32.cont [11/16] %v616, 128
    %2114 = vxpose.xlu0.b32.cont [12/16] %v624, 128
    %2115 = vxpose.xlu0.b32.cont [13/16] %v632, 128
    %2116 = vxpose.xlu0.b32.cont [14/16] %v640, 128
    %2117 = vxpose.xlu0.b32.cont [15/16] %v648, 128
    %2118 = vxpose.xlu0.b32.end [16/16] %v656, 128
    %v2119 = vpop.trf.xlu0
    %v2120 = vpop.trf.xlu0
    %v2121 = vpop.trf.xlu0
    %v2122 = vpop.trf.xlu0
    %v2123 = vpop.trf.xlu0
    %v2124 = vpop.trf.xlu0
    %v2125 = vpop.trf.xlu0
    %v2126 = vpop.trf.xlu0
    %v2127 = vpop.trf.xlu0
    %v2128 = vpop.trf.xlu0
    %v2129 = vpop.trf.xlu0
    %v2130 = vpop.trf.xlu0
    %v2131 = vpop.trf.xlu0
    %v2132 = vpop.trf.xlu0
    %v2133 = vpop.trf.xlu0
    %v2134 = vpop.trf.xlu0
    %2135 = vxpose.xlu0.b32.start [1/16] %v537, 128
    %2136 = vxpose.xlu0.b32.cont [2/16] %v545, 128
    %2137 = vxpose.xlu0.b32.cont [3/16] %v553, 128
    %2138 = vxpose.xlu0.b32.cont [4/16] %v561, 128
    %2139 = vxpose.xlu0.b32.cont [5/16] %v569, 128
    %2140 = vxpose.xlu0.b32.cont [6/16] %v577, 128
    %2141 = vxpose.xlu0.b32.cont [7/16] %v585, 128
    %2142 = vxpose.xlu0.b32.cont [8/16] %v593, 128
    %2143 = vxpose.xlu0.b32.cont [9/16] %v601, 128
    %2144 = vxpose.xlu0.b32.cont [10/16] %v609, 128
    %2145 = vxpose.xlu0.b32.cont [11/16] %v617, 128
    %2146 = vxpose.xlu0.b32.cont [12/16] %v625, 128
    %2147 = vxpose.xlu0.b32.cont [13/16] %v633, 128
    %2148 = vxpose.xlu0.b32.cont [14/16] %v641, 128
    %2149 = vxpose.xlu0.b32.cont [15/16] %v649, 128
    %2150 = vxpose.xlu0.b32.end [16/16] %v657, 128
    %v2151 = vpop.trf.xlu0
    %v2152 = vpop.trf.xlu0
    %v2153 = vpop.trf.xlu0
    %v2154 = vpop.trf.xlu0
    %v2155 = vpop.trf.xlu0
    %v2156 = vpop.trf.xlu0
    %v2157 = vpop.trf.xlu0
    %v2158 = vpop.trf.xlu0
    %v2159 = vpop.trf.xlu0
    %v2160 = vpop.trf.xlu0
    %v2161 = vpop.trf.xlu0
    %v2162 = vpop.trf.xlu0
    %v2163 = vpop.trf.xlu0
    %v2164 = vpop.trf.xlu0
    %v2165 = vpop.trf.xlu0
    %v2166 = vpop.trf.xlu0
    %2167 = vxpose.xlu0.b32.start [1/16] %v538, 128
    %2168 = vxpose.xlu0.b32.cont [2/16] %v546, 128
    %2169 = vxpose.xlu0.b32.cont [3/16] %v554, 128
    %2170 = vxpose.xlu0.b32.cont [4/16] %v562, 128
    %2171 = vxpose.xlu0.b32.cont [5/16] %v570, 128
    %2172 = vxpose.xlu0.b32.cont [6/16] %v578, 128
    %2173 = vxpose.xlu0.b32.cont [7/16] %v586, 128
    %2174 = vxpose.xlu0.b32.cont [8/16] %v594, 128
    %2175 = vxpose.xlu0.b32.cont [9/16] %v602, 128
    %2176 = vxpose.xlu0.b32.cont [10/16] %v610, 128
    %2177 = vxpose.xlu0.b32.cont [11/16] %v618, 128
    %2178 = vxpose.xlu0.b32.cont [12/16] %v626, 128
    %2179 = vxpose.xlu0.b32.cont [13/16] %v634, 128
    %2180 = vxpose.xlu0.b32.cont [14/16] %v642, 128
    %2181 = vxpose.xlu0.b32.cont [15/16] %v650, 128
    %2182 = vxpose.xlu0.b32.end [16/16] %v658, 128
    %v2183 = vpop.trf.xlu0
    %v2184 = vpop.trf.xlu0
    %v2185 = vpop.trf.xlu0
    %v2186 = vpop.trf.xlu0
    %v2187 = vpop.trf.xlu0
    %v2188 = vpop.trf.xlu0
    %v2189 = vpop.trf.xlu0
    %v2190 = vpop.trf.xlu0
    %v2191 = vpop.trf.xlu0
    %v2192 = vpop.trf.xlu0
    %v2193 = vpop.trf.xlu0
    %v2194 = vpop.trf.xlu0
    %v2195 = vpop.trf.xlu0
    %v2196 = vpop.trf.xlu0
    %v2197 = vpop.trf.xlu0
    %v2198 = vpop.trf.xlu0
    %2199 = vxpose.xlu0.b32.start [1/16] %v539, 128
    %2200 = vxpose.xlu0.b32.cont [2/16] %v547, 128
    %2201 = vxpose.xlu0.b32.cont [3/16] %v555, 128
    %2202 = vxpose.xlu0.b32.cont [4/16] %v563, 128
    %2203 = vxpose.xlu0.b32.cont [5/16] %v571, 128
    %2204 = vxpose.xlu0.b32.cont [6/16] %v579, 128
    %2205 = vxpose.xlu0.b32.cont [7/16] %v587, 128
    %2206 = vxpose.xlu0.b32.cont [8/16] %v595, 128
    %2207 = vxpose.xlu0.b32.cont [9/16] %v603, 128
    %2208 = vxpose.xlu0.b32.cont [10/16] %v611, 128
    %2209 = vxpose.xlu0.b32.cont [11/16] %v619, 128
    %2210 = vxpose.xlu0.b32.cont [12/16] %v627, 128
    %2211 = vxpose.xlu0.b32.cont [13/16] %v635, 128
    %2212 = vxpose.xlu0.b32.cont [14/16] %v643, 128
    %2213 = vxpose.xlu0.b32.cont [15/16] %v651, 128
    %2214 = vxpose.xlu0.b32.end [16/16] %v659, 128
    %v2215 = vpop.trf.xlu0
    %v2216 = vpop.trf.xlu0
    %v2217 = vpop.trf.xlu0
    %v2218 = vpop.trf.xlu0
    %v2219 = vpop.trf.xlu0
    %v2220 = vpop.trf.xlu0
    %v2221 = vpop.trf.xlu0
    %v2222 = vpop.trf.xlu0
    %v2223 = vpop.trf.xlu0
    %v2224 = vpop.trf.xlu0
    %v2225 = vpop.trf.xlu0
    %v2226 = vpop.trf.xlu0
    %v2227 = vpop.trf.xlu0
    %v2228 = vpop.trf.xlu0
    %v2229 = vpop.trf.xlu0
    %v2230 = vpop.trf.xlu0
    %2231 = vxpose.xlu0.b32.start [1/16] %v540, 128
    %2232 = vxpose.xlu0.b32.cont [2/16] %v548, 128
    %2233 = vxpose.xlu0.b32.cont [3/16] %v556, 128
    %2234 = vxpose.xlu0.b32.cont [4/16] %v564, 128
    %2235 = vxpose.xlu0.b32.cont [5/16] %v572, 128
    %2236 = vxpose.xlu0.b32.cont [6/16] %v580, 128
    %2237 = vxpose.xlu0.b32.cont [7/16] %v588, 128
    %2238 = vxpose.xlu0.b32.cont [8/16] %v596, 128
    %2239 = vxpose.xlu0.b32.cont [9/16] %v604, 128
    %2240 = vxpose.xlu0.b32.cont [10/16] %v612, 128
    %2241 = vxpose.xlu0.b32.cont [11/16] %v620, 128
    %2242 = vxpose.xlu0.b32.cont [12/16] %v628, 128
    %2243 = vxpose.xlu0.b32.cont [13/16] %v636, 128
    %2244 = vxpose.xlu0.b32.cont [14/16] %v644, 128
    %2245 = vxpose.xlu0.b32.cont [15/16] %v652, 128
    %2246 = vxpose.xlu0.b32.end [16/16] %v660, 128
    %v2247 = vpop.trf.xlu0
    %v2248 = vpop.trf.xlu0
    %v2249 = vpop.trf.xlu0
    %v2250 = vpop.trf.xlu0
    %v2251 = vpop.trf.xlu0
    %v2252 = vpop.trf.xlu0
    %v2253 = vpop.trf.xlu0
    %v2254 = vpop.trf.xlu0
    %v2255 = vpop.trf.xlu0
    %v2256 = vpop.trf.xlu0
    %v2257 = vpop.trf.xlu0
    %v2258 = vpop.trf.xlu0
    %v2259 = vpop.trf.xlu0
    %v2260 = vpop.trf.xlu0
    %v2261 = vpop.trf.xlu0
    %v2262 = vpop.trf.xlu0
    %2263 = vxpose.xlu0.b32.start [1/16] %v541, 128
    %2264 = vxpose.xlu0.b32.cont [2/16] %v549, 128
    %2265 = vxpose.xlu0.b32.cont [3/16] %v557, 128
    %2266 = vxpose.xlu0.b32.cont [4/16] %v565, 128
    %2267 = vxpose.xlu0.b32.cont [5/16] %v573, 128
    %2268 = vxpose.xlu0.b32.cont [6/16] %v581, 128
    %2269 = vxpose.xlu0.b32.cont [7/16] %v589, 128
    %2270 = vxpose.xlu0.b32.cont [8/16] %v597, 128
    %2271 = vxpose.xlu0.b32.cont [9/16] %v605, 128
    %2272 = vxpose.xlu0.b32.cont [10/16] %v613, 128
    %2273 = vxpose.xlu0.b32.cont [11/16] %v621, 128
    %2274 = vxpose.xlu0.b32.cont [12/16] %v629, 128
    %2275 = vxpose.xlu0.b32.cont [13/16] %v637, 128
    %2276 = vxpose.xlu0.b32.cont [14/16] %v645, 128
    %2277 = vxpose.xlu0.b32.cont [15/16] %v653, 128
    %2278 = vxpose.xlu0.b32.end [16/16] %v661, 128
    %v2279 = vpop.trf.xlu0
    %v2280 = vpop.trf.xlu0
    %v2281 = vpop.trf.xlu0
    %v2282 = vpop.trf.xlu0
    %v2283 = vpop.trf.xlu0
    %v2284 = vpop.trf.xlu0
    %v2285 = vpop.trf.xlu0
    %v2286 = vpop.trf.xlu0
    %v2287 = vpop.trf.xlu0
    %v2288 = vpop.trf.xlu0
    %v2289 = vpop.trf.xlu0
    %v2290 = vpop.trf.xlu0
    %v2291 = vpop.trf.xlu0
    %v2292 = vpop.trf.xlu0
    %v2293 = vpop.trf.xlu0
    %v2294 = vpop.trf.xlu0
    %2295 = vxpose.xlu0.b32.start [1/16] %v542, 128
    %2296 = vxpose.xlu0.b32.cont [2/16] %v550, 128
    %2297 = vxpose.xlu0.b32.cont [3/16] %v558, 128
    %2298 = vxpose.xlu0.b32.cont [4/16] %v566, 128
    %2299 = vxpose.xlu0.b32.cont [5/16] %v574, 128
    %2300 = vxpose.xlu0.b32.cont [6/16] %v582, 128
    %2301 = vxpose.xlu0.b32.cont [7/16] %v590, 128
    %2302 = vxpose.xlu0.b32.cont [8/16] %v598, 128
    %2303 = vxpose.xlu0.b32.cont [9/16] %v606, 128
    %2304 = vxpose.xlu0.b32.cont [10/16] %v614, 128
    %2305 = vxpose.xlu0.b32.cont [11/16] %v622, 128
    %2306 = vxpose.xlu0.b32.cont [12/16] %v630, 128
    %2307 = vxpose.xlu0.b32.cont [13/16] %v638, 128
    %2308 = vxpose.xlu0.b32.cont [14/16] %v646, 128
    %2309 = vxpose.xlu0.b32.cont [15/16] %v654, 128
    %2310 = vxpose.xlu0.b32.end [16/16] %v662, 128
    %v2311 = vpop.trf.xlu0
    %v2312 = vpop.trf.xlu0
    %v2313 = vpop.trf.xlu0
    %v2314 = vpop.trf.xlu0
    %v2315 = vpop.trf.xlu0
    %v2316 = vpop.trf.xlu0
    %v2317 = vpop.trf.xlu0
    %v2318 = vpop.trf.xlu0
    %v2319 = vpop.trf.xlu0
    %v2320 = vpop.trf.xlu0
    %v2321 = vpop.trf.xlu0
    %v2322 = vpop.trf.xlu0
    %v2323 = vpop.trf.xlu0
    %v2324 = vpop.trf.xlu0
    %v2325 = vpop.trf.xlu0
    %v2326 = vpop.trf.xlu0
    %2327 = vxpose.xlu0.b32.start [1/16] %v663, 128
    %2328 = vxpose.xlu0.b32.cont [2/16] %v671, 128
    %2329 = vxpose.xlu0.b32.cont [3/16] %v679, 128
    %2330 = vxpose.xlu0.b32.cont [4/16] %v687, 128
    %2331 = vxpose.xlu0.b32.cont [5/16] %v695, 128
    %2332 = vxpose.xlu0.b32.cont [6/16] %v703, 128
    %2333 = vxpose.xlu0.b32.cont [7/16] %v711, 128
    %2334 = vxpose.xlu0.b32.cont [8/16] %v719, 128
    %2335 = vxpose.xlu0.b32.cont [9/16] %v727, 128
    %2336 = vxpose.xlu0.b32.cont [10/16] %v735, 128
    %2337 = vxpose.xlu0.b32.cont [11/16] %v743, 128
    %2338 = vxpose.xlu0.b32.cont [12/16] %v751, 128
    %2339 = vxpose.xlu0.b32.cont [13/16] %v759, 128
    %2340 = vxpose.xlu0.b32.cont [14/16] %v767, 128
    %2341 = vxpose.xlu0.b32.cont [15/16] %v775, 128
    %2342 = vxpose.xlu0.b32.end [16/16] %v783, 128
    %v2343 = vpop.trf.xlu0
    %v2344 = vpop.trf.xlu0
    %v2345 = vpop.trf.xlu0
    %v2346 = vpop.trf.xlu0
    %v2347 = vpop.trf.xlu0
    %v2348 = vpop.trf.xlu0
    %v2349 = vpop.trf.xlu0
    %v2350 = vpop.trf.xlu0
    %v2351 = vpop.trf.xlu0
    %v2352 = vpop.trf.xlu0
    %v2353 = vpop.trf.xlu0
    %v2354 = vpop.trf.xlu0
    %v2355 = vpop.trf.xlu0
    %v2356 = vpop.trf.xlu0
    %v2357 = vpop.trf.xlu0
    %v2358 = vpop.trf.xlu0
    %2359 = vxpose.xlu0.b32.start [1/16] %v664, 128
    %2360 = vxpose.xlu0.b32.cont [2/16] %v672, 128
    %2361 = vxpose.xlu0.b32.cont [3/16] %v680, 128
    %2362 = vxpose.xlu0.b32.cont [4/16] %v688, 128
    %2363 = vxpose.xlu0.b32.cont [5/16] %v696, 128
    %2364 = vxpose.xlu0.b32.cont [6/16] %v704, 128
    %2365 = vxpose.xlu0.b32.cont [7/16] %v712, 128
    %2366 = vxpose.xlu0.b32.cont [8/16] %v720, 128
    %2367 = vxpose.xlu0.b32.cont [9/16] %v728, 128
    %2368 = vxpose.xlu0.b32.cont [10/16] %v736, 128
    %2369 = vxpose.xlu0.b32.cont [11/16] %v744, 128
    %2370 = vxpose.xlu0.b32.cont [12/16] %v752, 128
    %2371 = vxpose.xlu0.b32.cont [13/16] %v760, 128
    %2372 = vxpose.xlu0.b32.cont [14/16] %v768, 128
    %2373 = vxpose.xlu0.b32.cont [15/16] %v776, 128
    %2374 = vxpose.xlu0.b32.end [16/16] %v784, 128
    %v2375 = vpop.trf.xlu0
    %v2376 = vpop.trf.xlu0
    %v2377 = vpop.trf.xlu0
    %v2378 = vpop.trf.xlu0
    %v2379 = vpop.trf.xlu0
    %v2380 = vpop.trf.xlu0
    %v2381 = vpop.trf.xlu0
    %v2382 = vpop.trf.xlu0
    %v2383 = vpop.trf.xlu0
    %v2384 = vpop.trf.xlu0
    %v2385 = vpop.trf.xlu0
    %v2386 = vpop.trf.xlu0
    %v2387 = vpop.trf.xlu0
    %v2388 = vpop.trf.xlu0
    %v2389 = vpop.trf.xlu0
    %v2390 = vpop.trf.xlu0
    %2391 = vxpose.xlu0.b32.start [1/16] %v665, 128
    %2392 = vxpose.xlu0.b32.cont [2/16] %v673, 128
    %2393 = vxpose.xlu0.b32.cont [3/16] %v681, 128
    %2394 = vxpose.xlu0.b32.cont [4/16] %v689, 128
    %2395 = vxpose.xlu0.b32.cont [5/16] %v697, 128
    %2396 = vxpose.xlu0.b32.cont [6/16] %v705, 128
    %2397 = vxpose.xlu0.b32.cont [7/16] %v713, 128
    %2398 = vxpose.xlu0.b32.cont [8/16] %v721, 128
    %2399 = vxpose.xlu0.b32.cont [9/16] %v729, 128
    %2400 = vxpose.xlu0.b32.cont [10/16] %v737, 128
    %2401 = vxpose.xlu0.b32.cont [11/16] %v745, 128
    %2402 = vxpose.xlu0.b32.cont [12/16] %v753, 128
    %2403 = vxpose.xlu0.b32.cont [13/16] %v761, 128
    %2404 = vxpose.xlu0.b32.cont [14/16] %v769, 128
    %2405 = vxpose.xlu0.b32.cont [15/16] %v777, 128
    %2406 = vxpose.xlu0.b32.end [16/16] %v785, 128
    %v2407 = vpop.trf.xlu0
    %v2408 = vpop.trf.xlu0
    %v2409 = vpop.trf.xlu0
    %v2410 = vpop.trf.xlu0
    %v2411 = vpop.trf.xlu0
    %v2412 = vpop.trf.xlu0
    %v2413 = vpop.trf.xlu0
    %v2414 = vpop.trf.xlu0
    %v2415 = vpop.trf.xlu0
    %v2416 = vpop.trf.xlu0
    %v2417 = vpop.trf.xlu0
    %v2418 = vpop.trf.xlu0
    %v2419 = vpop.trf.xlu0
    %v2420 = vpop.trf.xlu0
    %v2421 = vpop.trf.xlu0
    %v2422 = vpop.trf.xlu0
    %2423 = vxpose.xlu0.b32.start [1/16] %v666, 128
    %2424 = vxpose.xlu0.b32.cont [2/16] %v674, 128
    %2425 = vxpose.xlu0.b32.cont [3/16] %v682, 128
    %2426 = vxpose.xlu0.b32.cont [4/16] %v690, 128
    %2427 = vxpose.xlu0.b32.cont [5/16] %v698, 128
    %2428 = vxpose.xlu0.b32.cont [6/16] %v706, 128
    %2429 = vxpose.xlu0.b32.cont [7/16] %v714, 128
    %2430 = vxpose.xlu0.b32.cont [8/16] %v722, 128
    %2431 = vxpose.xlu0.b32.cont [9/16] %v730, 128
    %2432 = vxpose.xlu0.b32.cont [10/16] %v738, 128
    %2433 = vxpose.xlu0.b32.cont [11/16] %v746, 128
    %2434 = vxpose.xlu0.b32.cont [12/16] %v754, 128
    %2435 = vxpose.xlu0.b32.cont [13/16] %v762, 128
    %2436 = vxpose.xlu0.b32.cont [14/16] %v770, 128
    %2437 = vxpose.xlu0.b32.cont [15/16] %v778, 128
    %2438 = vxpose.xlu0.b32.end [16/16] %v786, 128
    %v2439 = vpop.trf.xlu0
    %v2440 = vpop.trf.xlu0
    %v2441 = vpop.trf.xlu0
    %v2442 = vpop.trf.xlu0
    %v2443 = vpop.trf.xlu0
    %v2444 = vpop.trf.xlu0
    %v2445 = vpop.trf.xlu0
    %v2446 = vpop.trf.xlu0
    %v2447 = vpop.trf.xlu0
    %v2448 = vpop.trf.xlu0
    %v2449 = vpop.trf.xlu0
    %v2450 = vpop.trf.xlu0
    %v2451 = vpop.trf.xlu0
    %v2452 = vpop.trf.xlu0
    %v2453 = vpop.trf.xlu0
    %v2454 = vpop.trf.xlu0
    %2455 = vxpose.xlu0.b32.start [1/16] %v667, 128
    %2456 = vxpose.xlu0.b32.cont [2/16] %v675, 128
    %2457 = vxpose.xlu0.b32.cont [3/16] %v683, 128
    %2458 = vxpose.xlu0.b32.cont [4/16] %v691, 128
    %2459 = vxpose.xlu0.b32.cont [5/16] %v699, 128
    %2460 = vxpose.xlu0.b32.cont [6/16] %v707, 128
    %2461 = vxpose.xlu0.b32.cont [7/16] %v715, 128
    %2462 = vxpose.xlu0.b32.cont [8/16] %v723, 128
    %2463 = vxpose.xlu0.b32.cont [9/16] %v731, 128
    %2464 = vxpose.xlu0.b32.cont [10/16] %v739, 128
    %2465 = vxpose.xlu0.b32.cont [11/16] %v747, 128
    %2466 = vxpose.xlu0.b32.cont [12/16] %v755, 128
    %2467 = vxpose.xlu0.b32.cont [13/16] %v763, 128
    %2468 = vxpose.xlu0.b32.cont [14/16] %v771, 128
    %2469 = vxpose.xlu0.b32.cont [15/16] %v779, 128
    %2470 = vxpose.xlu0.b32.end [16/16] %v787, 128
    %v2471 = vpop.trf.xlu0
    %v2472 = vpop.trf.xlu0
    %v2473 = vpop.trf.xlu0
    %v2474 = vpop.trf.xlu0
    %v2475 = vpop.trf.xlu0
    %v2476 = vpop.trf.xlu0
    %v2477 = vpop.trf.xlu0
    %v2478 = vpop.trf.xlu0
    %v2479 = vpop.trf.xlu0
    %v2480 = vpop.trf.xlu0
    %v2481 = vpop.trf.xlu0
    %v2482 = vpop.trf.xlu0
    %v2483 = vpop.trf.xlu0
    %v2484 = vpop.trf.xlu0
    %v2485 = vpop.trf.xlu0
    %v2486 = vpop.trf.xlu0
    %2487 = vxpose.xlu0.b32.start [1/16] %v668, 128
    %2488 = vxpose.xlu0.b32.cont [2/16] %v676, 128
    %2489 = vxpose.xlu0.b32.cont [3/16] %v684, 128
    %2490 = vxpose.xlu0.b32.cont [4/16] %v692, 128
    %2491 = vxpose.xlu0.b32.cont [5/16] %v700, 128
    %2492 = vxpose.xlu0.b32.cont [6/16] %v708, 128
    %2493 = vxpose.xlu0.b32.cont [7/16] %v716, 128
    %2494 = vxpose.xlu0.b32.cont [8/16] %v724, 128
    %2495 = vxpose.xlu0.b32.cont [9/16] %v732, 128
    %2496 = vxpose.xlu0.b32.cont [10/16] %v740, 128
    %2497 = vxpose.xlu0.b32.cont [11/16] %v748, 128
    %2498 = vxpose.xlu0.b32.cont [12/16] %v756, 128
    %2499 = vxpose.xlu0.b32.cont [13/16] %v764, 128
    %2500 = vxpose.xlu0.b32.cont [14/16] %v772, 128
    %2501 = vxpose.xlu0.b32.cont [15/16] %v780, 128
    %2502 = vxpose.xlu0.b32.end [16/16] %v788, 128
    %v2503 = vpop.trf.xlu0
    %v2504 = vpop.trf.xlu0
    %v2505 = vpop.trf.xlu0
    %v2506 = vpop.trf.xlu0
    %v2507 = vpop.trf.xlu0
    %v2508 = vpop.trf.xlu0
    %v2509 = vpop.trf.xlu0
    %v2510 = vpop.trf.xlu0
    %v2511 = vpop.trf.xlu0
    %v2512 = vpop.trf.xlu0
    %v2513 = vpop.trf.xlu0
    %v2514 = vpop.trf.xlu0
    %v2515 = vpop.trf.xlu0
    %v2516 = vpop.trf.xlu0
    %v2517 = vpop.trf.xlu0
    %v2518 = vpop.trf.xlu0
    %2519 = vxpose.xlu0.b32.start [1/16] %v669, 128
    %2520 = vxpose.xlu0.b32.cont [2/16] %v677, 128
    %2521 = vxpose.xlu0.b32.cont [3/16] %v685, 128
    %2522 = vxpose.xlu0.b32.cont [4/16] %v693, 128
    %2523 = vxpose.xlu0.b32.cont [5/16] %v701, 128
    %2524 = vxpose.xlu0.b32.cont [6/16] %v709, 128
    %2525 = vxpose.xlu0.b32.cont [7/16] %v717, 128
    %2526 = vxpose.xlu0.b32.cont [8/16] %v725, 128
    %2527 = vxpose.xlu0.b32.cont [9/16] %v733, 128
    %2528 = vxpose.xlu0.b32.cont [10/16] %v741, 128
    %2529 = vxpose.xlu0.b32.cont [11/16] %v749, 128
    %2530 = vxpose.xlu0.b32.cont [12/16] %v757, 128
    %2531 = vxpose.xlu0.b32.cont [13/16] %v765, 128
    %2532 = vxpose.xlu0.b32.cont [14/16] %v773, 128
    %2533 = vxpose.xlu0.b32.cont [15/16] %v781, 128
    %2534 = vxpose.xlu0.b32.end [16/16] %v789, 128
    %v2535 = vpop.trf.xlu0
    %v2536 = vpop.trf.xlu0
    %v2537 = vpop.trf.xlu0
    %v2538 = vpop.trf.xlu0
    %v2539 = vpop.trf.xlu0
    %v2540 = vpop.trf.xlu0
    %v2541 = vpop.trf.xlu0
    %v2542 = vpop.trf.xlu0
    %v2543 = vpop.trf.xlu0
    %v2544 = vpop.trf.xlu0
    %v2545 = vpop.trf.xlu0
    %v2546 = vpop.trf.xlu0
    %v2547 = vpop.trf.xlu0
    %v2548 = vpop.trf.xlu0
    %v2549 = vpop.trf.xlu0
    %v2550 = vpop.trf.xlu0
    %2551 = vxpose.xlu0.b32.start [1/16] %v670, 128
    %2552 = vxpose.xlu0.b32.cont [2/16] %v678, 128
    %2553 = vxpose.xlu0.b32.cont [3/16] %v686, 128
    %2554 = vxpose.xlu0.b32.cont [4/16] %v694, 128
    %2555 = vxpose.xlu0.b32.cont [5/16] %v702, 128
    %2556 = vxpose.xlu0.b32.cont [6/16] %v710, 128
    %2557 = vxpose.xlu0.b32.cont [7/16] %v718, 128
    %2558 = vxpose.xlu0.b32.cont [8/16] %v726, 128
    %2559 = vxpose.xlu0.b32.cont [9/16] %v734, 128
    %2560 = vxpose.xlu0.b32.cont [10/16] %v742, 128
    %2561 = vxpose.xlu0.b32.cont [11/16] %v750, 128
    %2562 = vxpose.xlu0.b32.cont [12/16] %v758, 128
    %2563 = vxpose.xlu0.b32.cont [13/16] %v766, 128
    %2564 = vxpose.xlu0.b32.cont [14/16] %v774, 128
    %2565 = vxpose.xlu0.b32.cont [15/16] %v782, 128
    %2566 = vxpose.xlu0.b32.end [16/16] %v790, 128
    %v2567 = vpop.trf.xlu0
    %v2568 = vpop.trf.xlu0
    %v2569 = vpop.trf.xlu0
    %v2570 = vpop.trf.xlu0
    %v2571 = vpop.trf.xlu0
    %v2572 = vpop.trf.xlu0
    %v2573 = vpop.trf.xlu0
    %v2574 = vpop.trf.xlu0
    %v2575 = vpop.trf.xlu0
    %v2576 = vpop.trf.xlu0
    %v2577 = vpop.trf.xlu0
    %v2578 = vpop.trf.xlu0
    %v2579 = vpop.trf.xlu0
    %v2580 = vpop.trf.xlu0
    %v2581 = vpop.trf.xlu0
    %v2582 = vpop.trf.xlu0
    %2583 = vxpose.xlu0.b32.start [1/16] %v791, 128
    %2584 = vxpose.xlu0.b32.cont [2/16] %v799, 128
    %2585 = vxpose.xlu0.b32.cont [3/16] %v807, 128
    %2586 = vxpose.xlu0.b32.cont [4/16] %v815, 128
    %2587 = vxpose.xlu0.b32.cont [5/16] %v823, 128
    %2588 = vxpose.xlu0.b32.cont [6/16] %v831, 128
    %2589 = vxpose.xlu0.b32.cont [7/16] %v839, 128
    %2590 = vxpose.xlu0.b32.cont [8/16] %v847, 128
    %2591 = vxpose.xlu0.b32.cont [9/16] %v855, 128
    %2592 = vxpose.xlu0.b32.cont [10/16] %v863, 128
    %2593 = vxpose.xlu0.b32.cont [11/16] %v871, 128
    %2594 = vxpose.xlu0.b32.cont [12/16] %v879, 128
    %2595 = vxpose.xlu0.b32.cont [13/16] %v887, 128
    %2596 = vxpose.xlu0.b32.cont [14/16] %v895, 128
    %2597 = vxpose.xlu0.b32.cont [15/16] %v903, 128
    %2598 = vxpose.xlu0.b32.end [16/16] %v911, 128
    %v2599 = vpop.trf.xlu0
    %v2600 = vpop.trf.xlu0
    %v2601 = vpop.trf.xlu0
    %v2602 = vpop.trf.xlu0
    %v2603 = vpop.trf.xlu0
    %v2604 = vpop.trf.xlu0
    %v2605 = vpop.trf.xlu0
    %v2606 = vpop.trf.xlu0
    %v2607 = vpop.trf.xlu0
    %v2608 = vpop.trf.xlu0
    %v2609 = vpop.trf.xlu0
    %v2610 = vpop.trf.xlu0
    %v2611 = vpop.trf.xlu0
    %v2612 = vpop.trf.xlu0
    %v2613 = vpop.trf.xlu0
    %v2614 = vpop.trf.xlu0
    %2615 = vxpose.xlu0.b32.start [1/16] %v792, 128
    %2616 = vxpose.xlu0.b32.cont [2/16] %v800, 128
    %2617 = vxpose.xlu0.b32.cont [3/16] %v808, 128
    %2618 = vxpose.xlu0.b32.cont [4/16] %v816, 128
    %2619 = vxpose.xlu0.b32.cont [5/16] %v824, 128
    %2620 = vxpose.xlu0.b32.cont [6/16] %v832, 128
    %2621 = vxpose.xlu0.b32.cont [7/16] %v840, 128
    %2622 = vxpose.xlu0.b32.cont [8/16] %v848, 128
    %2623 = vxpose.xlu0.b32.cont [9/16] %v856, 128
    %2624 = vxpose.xlu0.b32.cont [10/16] %v864, 128
    %2625 = vxpose.xlu0.b32.cont [11/16] %v872, 128
    %2626 = vxpose.xlu0.b32.cont [12/16] %v880, 128
    %2627 = vxpose.xlu0.b32.cont [13/16] %v888, 128
    %2628 = vxpose.xlu0.b32.cont [14/16] %v896, 128
    %2629 = vxpose.xlu0.b32.cont [15/16] %v904, 128
    %2630 = vxpose.xlu0.b32.end [16/16] %v912, 128
    %v2631 = vpop.trf.xlu0
    %v2632 = vpop.trf.xlu0
    %v2633 = vpop.trf.xlu0
    %v2634 = vpop.trf.xlu0
    %v2635 = vpop.trf.xlu0
    %v2636 = vpop.trf.xlu0
    %v2637 = vpop.trf.xlu0
    %v2638 = vpop.trf.xlu0
    %v2639 = vpop.trf.xlu0
    %v2640 = vpop.trf.xlu0
    %v2641 = vpop.trf.xlu0
    %v2642 = vpop.trf.xlu0
    %v2643 = vpop.trf.xlu0
    %v2644 = vpop.trf.xlu0
    %v2645 = vpop.trf.xlu0
    %v2646 = vpop.trf.xlu0
    %2647 = vxpose.xlu0.b32.start [1/16] %v793, 128
    %2648 = vxpose.xlu0.b32.cont [2/16] %v801, 128
    %2649 = vxpose.xlu0.b32.cont [3/16] %v809, 128
    %2650 = vxpose.xlu0.b32.cont [4/16] %v817, 128
    %2651 = vxpose.xlu0.b32.cont [5/16] %v825, 128
    %2652 = vxpose.xlu0.b32.cont [6/16] %v833, 128
    %2653 = vxpose.xlu0.b32.cont [7/16] %v841, 128
    %2654 = vxpose.xlu0.b32.cont [8/16] %v849, 128
    %2655 = vxpose.xlu0.b32.cont [9/16] %v857, 128
    %2656 = vxpose.xlu0.b32.cont [10/16] %v865, 128
    %2657 = vxpose.xlu0.b32.cont [11/16] %v873, 128
    %2658 = vxpose.xlu0.b32.cont [12/16] %v881, 128
    %2659 = vxpose.xlu0.b32.cont [13/16] %v889, 128
    %2660 = vxpose.xlu0.b32.cont [14/16] %v897, 128
    %2661 = vxpose.xlu0.b32.cont [15/16] %v905, 128
    %2662 = vxpose.xlu0.b32.end [16/16] %v913, 128
    %v2663 = vpop.trf.xlu0
    %v2664 = vpop.trf.xlu0
    %v2665 = vpop.trf.xlu0
    %v2666 = vpop.trf.xlu0
    %v2667 = vpop.trf.xlu0
    %v2668 = vpop.trf.xlu0
    %v2669 = vpop.trf.xlu0
    %v2670 = vpop.trf.xlu0
    %v2671 = vpop.trf.xlu0
    %v2672 = vpop.trf.xlu0
    %v2673 = vpop.trf.xlu0
    %v2674 = vpop.trf.xlu0
    %v2675 = vpop.trf.xlu0
    %v2676 = vpop.trf.xlu0
    %v2677 = vpop.trf.xlu0
    %v2678 = vpop.trf.xlu0
    %2679 = vxpose.xlu0.b32.start [1/16] %v794, 128
    %2680 = vxpose.xlu0.b32.cont [2/16] %v802, 128
    %2681 = vxpose.xlu0.b32.cont [3/16] %v810, 128
    %2682 = vxpose.xlu0.b32.cont [4/16] %v818, 128
    %2683 = vxpose.xlu0.b32.cont [5/16] %v826, 128
    %2684 = vxpose.xlu0.b32.cont [6/16] %v834, 128
    %2685 = vxpose.xlu0.b32.cont [7/16] %v842, 128
    %2686 = vxpose.xlu0.b32.cont [8/16] %v850, 128
    %2687 = vxpose.xlu0.b32.cont [9/16] %v858, 128
    %2688 = vxpose.xlu0.b32.cont [10/16] %v866, 128
    %2689 = vxpose.xlu0.b32.cont [11/16] %v874, 128
    %2690 = vxpose.xlu0.b32.cont [12/16] %v882, 128
    %2691 = vxpose.xlu0.b32.cont [13/16] %v890, 128
    %2692 = vxpose.xlu0.b32.cont [14/16] %v898, 128
    %2693 = vxpose.xlu0.b32.cont [15/16] %v906, 128
    %2694 = vxpose.xlu0.b32.end [16/16] %v914, 128
    %v2695 = vpop.trf.xlu0
    %v2696 = vpop.trf.xlu0
    %v2697 = vpop.trf.xlu0
    %v2698 = vpop.trf.xlu0
    %v2699 = vpop.trf.xlu0
    %v2700 = vpop.trf.xlu0
    %v2701 = vpop.trf.xlu0
    %v2702 = vpop.trf.xlu0
    %v2703 = vpop.trf.xlu0
    %v2704 = vpop.trf.xlu0
    %v2705 = vpop.trf.xlu0
    %v2706 = vpop.trf.xlu0
    %v2707 = vpop.trf.xlu0
    %v2708 = vpop.trf.xlu0
    %v2709 = vpop.trf.xlu0
    %v2710 = vpop.trf.xlu0
    %2711 = vxpose.xlu0.b32.start [1/16] %v795, 128
    %2712 = vxpose.xlu0.b32.cont [2/16] %v803, 128
    %2713 = vxpose.xlu0.b32.cont [3/16] %v811, 128
    %2714 = vxpose.xlu0.b32.cont [4/16] %v819, 128
    %2715 = vxpose.xlu0.b32.cont [5/16] %v827, 128
    %2716 = vxpose.xlu0.b32.cont [6/16] %v835, 128
    %2717 = vxpose.xlu0.b32.cont [7/16] %v843, 128
    %2718 = vxpose.xlu0.b32.cont [8/16] %v851, 128
    %2719 = vxpose.xlu0.b32.cont [9/16] %v859, 128
    %2720 = vxpose.xlu0.b32.cont [10/16] %v867, 128
    %2721 = vxpose.xlu0.b32.cont [11/16] %v875, 128
    %2722 = vxpose.xlu0.b32.cont [12/16] %v883, 128
    %2723 = vxpose.xlu0.b32.cont [13/16] %v891, 128
    %2724 = vxpose.xlu0.b32.cont [14/16] %v899, 128
    %2725 = vxpose.xlu0.b32.cont [15/16] %v907, 128
    %2726 = vxpose.xlu0.b32.end [16/16] %v915, 128
    %v2727 = vpop.trf.xlu0
    %v2728 = vpop.trf.xlu0
    %v2729 = vpop.trf.xlu0
    %v2730 = vpop.trf.xlu0
    %v2731 = vpop.trf.xlu0
    %v2732 = vpop.trf.xlu0
    %v2733 = vpop.trf.xlu0
    %v2734 = vpop.trf.xlu0
    %v2735 = vpop.trf.xlu0
    %v2736 = vpop.trf.xlu0
    %v2737 = vpop.trf.xlu0
    %v2738 = vpop.trf.xlu0
    %v2739 = vpop.trf.xlu0
    %v2740 = vpop.trf.xlu0
    %v2741 = vpop.trf.xlu0
    %v2742 = vpop.trf.xlu0
    %2743 = vxpose.xlu0.b32.start [1/16] %v796, 128
    %2744 = vxpose.xlu0.b32.cont [2/16] %v804, 128
    %2745 = vxpose.xlu0.b32.cont [3/16] %v812, 128
    %2746 = vxpose.xlu0.b32.cont [4/16] %v820, 128
    %2747 = vxpose.xlu0.b32.cont [5/16] %v828, 128
    %2748 = vxpose.xlu0.b32.cont [6/16] %v836, 128
    %2749 = vxpose.xlu0.b32.cont [7/16] %v844, 128
    %2750 = vxpose.xlu0.b32.cont [8/16] %v852, 128
    %2751 = vxpose.xlu0.b32.cont [9/16] %v860, 128
    %2752 = vxpose.xlu0.b32.cont [10/16] %v868, 128
    %2753 = vxpose.xlu0.b32.cont [11/16] %v876, 128
    %2754 = vxpose.xlu0.b32.cont [12/16] %v884, 128
    %2755 = vxpose.xlu0.b32.cont [13/16] %v892, 128
    %2756 = vxpose.xlu0.b32.cont [14/16] %v900, 128
    %2757 = vxpose.xlu0.b32.cont [15/16] %v908, 128
    %2758 = vxpose.xlu0.b32.end [16/16] %v916, 128
    %v2759 = vpop.trf.xlu0
    %v2760 = vpop.trf.xlu0
    %v2761 = vpop.trf.xlu0
    %v2762 = vpop.trf.xlu0
    %v2763 = vpop.trf.xlu0
    %v2764 = vpop.trf.xlu0
    %v2765 = vpop.trf.xlu0
    %v2766 = vpop.trf.xlu0
    %v2767 = vpop.trf.xlu0
    %v2768 = vpop.trf.xlu0
    %v2769 = vpop.trf.xlu0
    %v2770 = vpop.trf.xlu0
    %v2771 = vpop.trf.xlu0
    %v2772 = vpop.trf.xlu0
    %v2773 = vpop.trf.xlu0
    %v2774 = vpop.trf.xlu0
    %2775 = vxpose.xlu0.b32.start [1/16] %v797, 128
    %2776 = vxpose.xlu0.b32.cont [2/16] %v805, 128
    %2777 = vxpose.xlu0.b32.cont [3/16] %v813, 128
    %2778 = vxpose.xlu0.b32.cont [4/16] %v821, 128
    %2779 = vxpose.xlu0.b32.cont [5/16] %v829, 128
    %2780 = vxpose.xlu0.b32.cont [6/16] %v837, 128
    %2781 = vxpose.xlu0.b32.cont [7/16] %v845, 128
    %2782 = vxpose.xlu0.b32.cont [8/16] %v853, 128
    %2783 = vxpose.xlu0.b32.cont [9/16] %v861, 128
    %2784 = vxpose.xlu0.b32.cont [10/16] %v869, 128
    %2785 = vxpose.xlu0.b32.cont [11/16] %v877, 128
    %2786 = vxpose.xlu0.b32.cont [12/16] %v885, 128
    %2787 = vxpose.xlu0.b32.cont [13/16] %v893, 128
    %2788 = vxpose.xlu0.b32.cont [14/16] %v901, 128
    %2789 = vxpose.xlu0.b32.cont [15/16] %v909, 128
    %2790 = vxpose.xlu0.b32.end [16/16] %v917, 128
    %v2791 = vpop.trf.xlu0
    %v2792 = vpop.trf.xlu0
    %v2793 = vpop.trf.xlu0
    %v2794 = vpop.trf.xlu0
    %v2795 = vpop.trf.xlu0
    %v2796 = vpop.trf.xlu0
    %v2797 = vpop.trf.xlu0
    %v2798 = vpop.trf.xlu0
    %v2799 = vpop.trf.xlu0
    %v2800 = vpop.trf.xlu0
    %v2801 = vpop.trf.xlu0
    %v2802 = vpop.trf.xlu0
    %v2803 = vpop.trf.xlu0
    %v2804 = vpop.trf.xlu0
    %v2805 = vpop.trf.xlu0
    %v2806 = vpop.trf.xlu0
    %2807 = vxpose.xlu0.b32.start [1/16] %v798, 128
    %2808 = vxpose.xlu0.b32.cont [2/16] %v806, 128
    %2809 = vxpose.xlu0.b32.cont [3/16] %v814, 128
    %2810 = vxpose.xlu0.b32.cont [4/16] %v822, 128
    %2811 = vxpose.xlu0.b32.cont [5/16] %v830, 128
    %2812 = vxpose.xlu0.b32.cont [6/16] %v838, 128
    %2813 = vxpose.xlu0.b32.cont [7/16] %v846, 128
    %2814 = vxpose.xlu0.b32.cont [8/16] %v854, 128
    %2815 = vxpose.xlu0.b32.cont [9/16] %v862, 128
    %2816 = vxpose.xlu0.b32.cont [10/16] %v870, 128
    %2817 = vxpose.xlu0.b32.cont [11/16] %v878, 128
    %2818 = vxpose.xlu0.b32.cont [12/16] %v886, 128
    %2819 = vxpose.xlu0.b32.cont [13/16] %v894, 128
    %2820 = vxpose.xlu0.b32.cont [14/16] %v902, 128
    %2821 = vxpose.xlu0.b32.cont [15/16] %v910, 128
    %2822 = vxpose.xlu0.b32.end [16/16] %v918, 128
    %v2823 = vpop.trf.xlu0
    %v2824 = vpop.trf.xlu0
    %v2825 = vpop.trf.xlu0
    %v2826 = vpop.trf.xlu0
    %v2827 = vpop.trf.xlu0
    %v2828 = vpop.trf.xlu0
    %v2829 = vpop.trf.xlu0
    %v2830 = vpop.trf.xlu0
    %v2831 = vpop.trf.xlu0
    %v2832 = vpop.trf.xlu0
    %v2833 = vpop.trf.xlu0
    %v2834 = vpop.trf.xlu0
    %v2835 = vpop.trf.xlu0
    %v2836 = vpop.trf.xlu0
    %v2837 = vpop.trf.xlu0
    %v2838 = vpop.trf.xlu0
    %2839 = vxpose.xlu0.b32.start [1/16] %v919, 128
    %2840 = vxpose.xlu0.b32.cont [2/16] %v927, 128
    %2841 = vxpose.xlu0.b32.cont [3/16] %v935, 128
    %2842 = vxpose.xlu0.b32.cont [4/16] %v943, 128
    %2843 = vxpose.xlu0.b32.cont [5/16] %v951, 128
    %2844 = vxpose.xlu0.b32.cont [6/16] %v959, 128
    %2845 = vxpose.xlu0.b32.cont [7/16] %v967, 128
    %2846 = vxpose.xlu0.b32.cont [8/16] %v975, 128
    %2847 = vxpose.xlu0.b32.cont [9/16] %v983, 128
    %2848 = vxpose.xlu0.b32.cont [10/16] %v991, 128
    %2849 = vxpose.xlu0.b32.cont [11/16] %v999, 128
    %2850 = vxpose.xlu0.b32.cont [12/16] %v1007, 128
    %2851 = vxpose.xlu0.b32.cont [13/16] %v1015, 128
    %2852 = vxpose.xlu0.b32.cont [14/16] %v1023, 128
    %2853 = vxpose.xlu0.b32.cont [15/16] %v1031, 128
    %2854 = vxpose.xlu0.b32.end [16/16] %v1039, 128
    %v2855 = vpop.trf.xlu0
    %v2856 = vpop.trf.xlu0
    %v2857 = vpop.trf.xlu0
    %v2858 = vpop.trf.xlu0
    %v2859 = vpop.trf.xlu0
    %v2860 = vpop.trf.xlu0
    %v2861 = vpop.trf.xlu0
    %v2862 = vpop.trf.xlu0
    %v2863 = vpop.trf.xlu0
    %v2864 = vpop.trf.xlu0
    %v2865 = vpop.trf.xlu0
    %v2866 = vpop.trf.xlu0
    %v2867 = vpop.trf.xlu0
    %v2868 = vpop.trf.xlu0
    %v2869 = vpop.trf.xlu0
    %v2870 = vpop.trf.xlu0
    %2871 = vxpose.xlu0.b32.start [1/16] %v920, 128
    %2872 = vxpose.xlu0.b32.cont [2/16] %v928, 128
    %2873 = vxpose.xlu0.b32.cont [3/16] %v936, 128
    %2874 = vxpose.xlu0.b32.cont [4/16] %v944, 128
    %2875 = vxpose.xlu0.b32.cont [5/16] %v952, 128
    %2876 = vxpose.xlu0.b32.cont [6/16] %v960, 128
    %2877 = vxpose.xlu0.b32.cont [7/16] %v968, 128
    %2878 = vxpose.xlu0.b32.cont [8/16] %v976, 128
    %2879 = vxpose.xlu0.b32.cont [9/16] %v984, 128
    %2880 = vxpose.xlu0.b32.cont [10/16] %v992, 128
    %2881 = vxpose.xlu0.b32.cont [11/16] %v1000, 128
    %2882 = vxpose.xlu0.b32.cont [12/16] %v1008, 128
    %2883 = vxpose.xlu0.b32.cont [13/16] %v1016, 128
    %2884 = vxpose.xlu0.b32.cont [14/16] %v1024, 128
    %2885 = vxpose.xlu0.b32.cont [15/16] %v1032, 128
    %2886 = vxpose.xlu0.b32.end [16/16] %v1040, 128
    %v2887 = vpop.trf.xlu0
    %v2888 = vpop.trf.xlu0
    %v2889 = vpop.trf.xlu0
    %v2890 = vpop.trf.xlu0
    %v2891 = vpop.trf.xlu0
    %v2892 = vpop.trf.xlu0
    %v2893 = vpop.trf.xlu0
    %v2894 = vpop.trf.xlu0
    %v2895 = vpop.trf.xlu0
    %v2896 = vpop.trf.xlu0
    %v2897 = vpop.trf.xlu0
    %v2898 = vpop.trf.xlu0
    %v2899 = vpop.trf.xlu0
    %v2900 = vpop.trf.xlu0
    %v2901 = vpop.trf.xlu0
    %v2902 = vpop.trf.xlu0
    %2903 = vxpose.xlu0.b32.start [1/16] %v921, 128
    %2904 = vxpose.xlu0.b32.cont [2/16] %v929, 128
    %2905 = vxpose.xlu0.b32.cont [3/16] %v937, 128
    %2906 = vxpose.xlu0.b32.cont [4/16] %v945, 128
    %2907 = vxpose.xlu0.b32.cont [5/16] %v953, 128
    %2908 = vxpose.xlu0.b32.cont [6/16] %v961, 128
    %2909 = vxpose.xlu0.b32.cont [7/16] %v969, 128
    %2910 = vxpose.xlu0.b32.cont [8/16] %v977, 128
    %2911 = vxpose.xlu0.b32.cont [9/16] %v985, 128
    %2912 = vxpose.xlu0.b32.cont [10/16] %v993, 128
    %2913 = vxpose.xlu0.b32.cont [11/16] %v1001, 128
    %2914 = vxpose.xlu0.b32.cont [12/16] %v1009, 128
    %2915 = vxpose.xlu0.b32.cont [13/16] %v1017, 128
    %2916 = vxpose.xlu0.b32.cont [14/16] %v1025, 128
    %2917 = vxpose.xlu0.b32.cont [15/16] %v1033, 128
    %2918 = vxpose.xlu0.b32.end [16/16] %v1041, 128
    %v2919 = vpop.trf.xlu0
    %v2920 = vpop.trf.xlu0
    %v2921 = vpop.trf.xlu0
    %v2922 = vpop.trf.xlu0
    %v2923 = vpop.trf.xlu0
    %v2924 = vpop.trf.xlu0
    %v2925 = vpop.trf.xlu0
    %v2926 = vpop.trf.xlu0
    %v2927 = vpop.trf.xlu0
    %v2928 = vpop.trf.xlu0
    %v2929 = vpop.trf.xlu0
    %v2930 = vpop.trf.xlu0
    %v2931 = vpop.trf.xlu0
    %v2932 = vpop.trf.xlu0
    %v2933 = vpop.trf.xlu0
    %v2934 = vpop.trf.xlu0
    %2935 = vxpose.xlu0.b32.start [1/16] %v922, 128
    %2936 = vxpose.xlu0.b32.cont [2/16] %v930, 128
    %2937 = vxpose.xlu0.b32.cont [3/16] %v938, 128
    %2938 = vxpose.xlu0.b32.cont [4/16] %v946, 128
    %2939 = vxpose.xlu0.b32.cont [5/16] %v954, 128
    %2940 = vxpose.xlu0.b32.cont [6/16] %v962, 128
    %2941 = vxpose.xlu0.b32.cont [7/16] %v970, 128
    %2942 = vxpose.xlu0.b32.cont [8/16] %v978, 128
    %2943 = vxpose.xlu0.b32.cont [9/16] %v986, 128
    %2944 = vxpose.xlu0.b32.cont [10/16] %v994, 128
    %2945 = vxpose.xlu0.b32.cont [11/16] %v1002, 128
    %2946 = vxpose.xlu0.b32.cont [12/16] %v1010, 128
    %2947 = vxpose.xlu0.b32.cont [13/16] %v1018, 128
    %2948 = vxpose.xlu0.b32.cont [14/16] %v1026, 128
    %2949 = vxpose.xlu0.b32.cont [15/16] %v1034, 128
    %2950 = vxpose.xlu0.b32.end [16/16] %v1042, 128
    %v2951 = vpop.trf.xlu0
    %v2952 = vpop.trf.xlu0
    %v2953 = vpop.trf.xlu0
    %v2954 = vpop.trf.xlu0
    %v2955 = vpop.trf.xlu0
    %v2956 = vpop.trf.xlu0
    %v2957 = vpop.trf.xlu0
    %v2958 = vpop.trf.xlu0
    %v2959 = vpop.trf.xlu0
    %v2960 = vpop.trf.xlu0
    %v2961 = vpop.trf.xlu0
    %v2962 = vpop.trf.xlu0
    %v2963 = vpop.trf.xlu0
    %v2964 = vpop.trf.xlu0
    %v2965 = vpop.trf.xlu0
    %v2966 = vpop.trf.xlu0
    %2967 = vxpose.xlu0.b32.start [1/16] %v923, 128
    %2968 = vxpose.xlu0.b32.cont [2/16] %v931, 128
    %2969 = vxpose.xlu0.b32.cont [3/16] %v939, 128
    %2970 = vxpose.xlu0.b32.cont [4/16] %v947, 128
    %2971 = vxpose.xlu0.b32.cont [5/16] %v955, 128
    %2972 = vxpose.xlu0.b32.cont [6/16] %v963, 128
    %2973 = vxpose.xlu0.b32.cont [7/16] %v971, 128
    %2974 = vxpose.xlu0.b32.cont [8/16] %v979, 128
    %2975 = vxpose.xlu0.b32.cont [9/16] %v987, 128
    %2976 = vxpose.xlu0.b32.cont [10/16] %v995, 128
    %2977 = vxpose.xlu0.b32.cont [11/16] %v1003, 128
    %2978 = vxpose.xlu0.b32.cont [12/16] %v1011, 128
    %2979 = vxpose.xlu0.b32.cont [13/16] %v1019, 128
    %2980 = vxpose.xlu0.b32.cont [14/16] %v1027, 128
    %2981 = vxpose.xlu0.b32.cont [15/16] %v1035, 128
    %2982 = vxpose.xlu0.b32.end [16/16] %v1043, 128
    %v2983 = vpop.trf.xlu0
    %v2984 = vpop.trf.xlu0
    %v2985 = vpop.trf.xlu0
    %v2986 = vpop.trf.xlu0
    %v2987 = vpop.trf.xlu0
    %v2988 = vpop.trf.xlu0
    %v2989 = vpop.trf.xlu0
    %v2990 = vpop.trf.xlu0
    %v2991 = vpop.trf.xlu0
    %v2992 = vpop.trf.xlu0
    %v2993 = vpop.trf.xlu0
    %v2994 = vpop.trf.xlu0
    %v2995 = vpop.trf.xlu0
    %v2996 = vpop.trf.xlu0
    %v2997 = vpop.trf.xlu0
    %v2998 = vpop.trf.xlu0
    %2999 = vxpose.xlu0.b32.start [1/16] %v924, 128
    %3000 = vxpose.xlu0.b32.cont [2/16] %v932, 128
    %3001 = vxpose.xlu0.b32.cont [3/16] %v940, 128
    %3002 = vxpose.xlu0.b32.cont [4/16] %v948, 128
    %3003 = vxpose.xlu0.b32.cont [5/16] %v956, 128
    %3004 = vxpose.xlu0.b32.cont [6/16] %v964, 128
    %3005 = vxpose.xlu0.b32.cont [7/16] %v972, 128
    %3006 = vxpose.xlu0.b32.cont [8/16] %v980, 128
    %3007 = vxpose.xlu0.b32.cont [9/16] %v988, 128
    %3008 = vxpose.xlu0.b32.cont [10/16] %v996, 128
    %3009 = vxpose.xlu0.b32.cont [11/16] %v1004, 128
    %3010 = vxpose.xlu0.b32.cont [12/16] %v1012, 128
    %3011 = vxpose.xlu0.b32.cont [13/16] %v1020, 128
    %3012 = vxpose.xlu0.b32.cont [14/16] %v1028, 128
    %3013 = vxpose.xlu0.b32.cont [15/16] %v1036, 128
    %3014 = vxpose.xlu0.b32.end [16/16] %v1044, 128
    %v3015 = vpop.trf.xlu0
    %v3016 = vpop.trf.xlu0
    %v3017 = vpop.trf.xlu0
    %v3018 = vpop.trf.xlu0
    %v3019 = vpop.trf.xlu0
    %v3020 = vpop.trf.xlu0
    %v3021 = vpop.trf.xlu0
    %v3022 = vpop.trf.xlu0
    %v3023 = vpop.trf.xlu0
    %v3024 = vpop.trf.xlu0
    %v3025 = vpop.trf.xlu0
    %v3026 = vpop.trf.xlu0
    %v3027 = vpop.trf.xlu0
    %v3028 = vpop.trf.xlu0
    %v3029 = vpop.trf.xlu0
    %v3030 = vpop.trf.xlu0
    %3031 = vxpose.xlu0.b32.start [1/16] %v925, 128
    %3032 = vxpose.xlu0.b32.cont [2/16] %v933, 128
    %3033 = vxpose.xlu0.b32.cont [3/16] %v941, 128
    %3034 = vxpose.xlu0.b32.cont [4/16] %v949, 128
    %3035 = vxpose.xlu0.b32.cont [5/16] %v957, 128
    %3036 = vxpose.xlu0.b32.cont [6/16] %v965, 128
    %3037 = vxpose.xlu0.b32.cont [7/16] %v973, 128
    %3038 = vxpose.xlu0.b32.cont [8/16] %v981, 128
    %3039 = vxpose.xlu0.b32.cont [9/16] %v989, 128
    %3040 = vxpose.xlu0.b32.cont [10/16] %v997, 128
    %3041 = vxpose.xlu0.b32.cont [11/16] %v1005, 128
    %3042 = vxpose.xlu0.b32.cont [12/16] %v1013, 128
    %3043 = vxpose.xlu0.b32.cont [13/16] %v1021, 128
    %3044 = vxpose.xlu0.b32.cont [14/16] %v1029, 128
    %3045 = vxpose.xlu0.b32.cont [15/16] %v1037, 128
    %3046 = vxpose.xlu0.b32.end [16/16] %v1045, 128
    %v3047 = vpop.trf.xlu0
    %v3048 = vpop.trf.xlu0
    %v3049 = vpop.trf.xlu0
    %v3050 = vpop.trf.xlu0
    %v3051 = vpop.trf.xlu0
    %v3052 = vpop.trf.xlu0
    %v3053 = vpop.trf.xlu0
    %v3054 = vpop.trf.xlu0
    %v3055 = vpop.trf.xlu0
    %v3056 = vpop.trf.xlu0
    %v3057 = vpop.trf.xlu0
    %v3058 = vpop.trf.xlu0
    %v3059 = vpop.trf.xlu0
    %v3060 = vpop.trf.xlu0
    %v3061 = vpop.trf.xlu0
    %v3062 = vpop.trf.xlu0
    %3063 = vxpose.xlu0.b32.start [1/16] %v926, 128
    %3064 = vxpose.xlu0.b32.cont [2/16] %v934, 128
    %3065 = vxpose.xlu0.b32.cont [3/16] %v942, 128
    %3066 = vxpose.xlu0.b32.cont [4/16] %v950, 128
    %3067 = vxpose.xlu0.b32.cont [5/16] %v958, 128
    %3068 = vxpose.xlu0.b32.cont [6/16] %v966, 128
    %3069 = vxpose.xlu0.b32.cont [7/16] %v974, 128
    %3070 = vxpose.xlu0.b32.cont [8/16] %v982, 128
    %3071 = vxpose.xlu0.b32.cont [9/16] %v990, 128
    %3072 = vxpose.xlu0.b32.cont [10/16] %v998, 128
    %3073 = vxpose.xlu0.b32.cont [11/16] %v1006, 128
    %3074 = vxpose.xlu0.b32.cont [12/16] %v1014, 128
    %3075 = vxpose.xlu0.b32.cont [13/16] %v1022, 128
    %3076 = vxpose.xlu0.b32.cont [14/16] %v1030, 128
    %3077 = vxpose.xlu0.b32.cont [15/16] %v1038, 128
    %3078 = vxpose.xlu0.b32.end [16/16] %v1046, 128
    %v3079 = vpop.trf.xlu0
    %v3080 = vpop.trf.xlu0
    %v3081 = vpop.trf.xlu0
    %v3082 = vpop.trf.xlu0
    %v3083 = vpop.trf.xlu0
    %v3084 = vpop.trf.xlu0
    %v3085 = vpop.trf.xlu0
    %v3086 = vpop.trf.xlu0
    %v3087 = vpop.trf.xlu0
    %v3088 = vpop.trf.xlu0
    %v3089 = vpop.trf.xlu0
    %v3090 = vpop.trf.xlu0
    %v3091 = vpop.trf.xlu0
    %v3092 = vpop.trf.xlu0
    %v3093 = vpop.trf.xlu0
    %v3094 = vpop.trf.xlu0
    %3095 = vst [vmem:[#allocation5] sm:$0xff] %v1063
    %3096 = vst [vmem:[#allocation5 + $0x8] sm:$0xff] %v1319
    %3097 = vst [vmem:[#allocation5 + $0x10] sm:$0xff] %v1064
    %3098 = vst [vmem:[#allocation5 + $0x18] sm:$0xff] %v1320
    %3099 = vst [vmem:[#allocation5 + $0x20] sm:$0xff] %v1065
    %3100 = vst [vmem:[#allocation5 + $0x28] sm:$0xff] %v1321
    %3101 = vst [vmem:[#allocation5 + $0x30] sm:$0xff] %v1066
    %3102 = vst [vmem:[#allocation5 + $0x38] sm:$0xff] %v1322
    %3103 = vst [vmem:[#allocation5 + $0x40] sm:$0xff] %v1067
    %3104 = vst [vmem:[#allocation5 + $0x48] sm:$0xff] %v1323
    %3105 = vst [vmem:[#allocation5 + $0x50] sm:$0xff] %v1068
    %3106 = vst [vmem:[#allocation5 + $0x58] sm:$0xff] %v1324
    %3107 = vst [vmem:[#allocation5 + $0x60] sm:$0xff] %v1069
    %3108 = vst [vmem:[#allocation5 + $0x68] sm:$0xff] %v1325
    %3109 = vst [vmem:[#allocation5 + $0x70] sm:$0xff] %v1070
    %3110 = vst [vmem:[#allocation5 + $0x78] sm:$0xff] %v1326
    %3111 = vst [vmem:[#allocation5 + $0x80] sm:$0xff] %v1071
    %3112 = vst [vmem:[#allocation5 + $0x88] sm:$0xff] %v1327
    %3113 = vst [vmem:[#allocation5 + $0x90] sm:$0xff] %v1072
    %3114 = vst [vmem:[#allocation5 + $0x98] sm:$0xff] %v1328
    %3115 = vst [vmem:[#allocation5 + $0xa0] sm:$0xff] %v1073
    %3116 = vst [vmem:[#allocation5 + $0xa8] sm:$0xff] %v1329
    %3117 = vst [vmem:[#allocation5 + $0xb0] sm:$0xff] %v1074
    %3118 = vst [vmem:[#allocation5 + $0xb8] sm:$0xff] %v1330
    %3119 = vst [vmem:[#allocation5 + $0xc0] sm:$0xff] %v1075
    %3120 = vst [vmem:[#allocation5 + $0xc8] sm:$0xff] %v1331
    %3121 = vst [vmem:[#allocation5 + $0xd0] sm:$0xff] %v1076
    %3122 = vst [vmem:[#allocation5 + $0xd8] sm:$0xff] %v1332
    %3123 = vst [vmem:[#allocation5 + $0xe0] sm:$0xff] %v1077
    %3124 = vst [vmem:[#allocation5 + $0xe8] sm:$0xff] %v1333
    %3125 = vst [vmem:[#allocation5 + $0xf0] sm:$0xff] %v1078
    %3126 = vst [vmem:[#allocation5 + $0xf8] sm:$0xff] %v1334
    %3127 = vst [vmem:[#allocation5 + $0x100] sm:$0xff] %v1095
    %3128 = vst [vmem:[#allocation5 + $0x108] sm:$0xff] %v1351
    %3129 = vst [vmem:[#allocation5 + $0x110] sm:$0xff] %v1096
    %3130 = vst [vmem:[#allocation5 + $0x118] sm:$0xff] %v1352
    %3131 = vst [vmem:[#allocation5 + $0x120] sm:$0xff] %v1097
    %3132 = vst [vmem:[#allocation5 + $0x128] sm:$0xff] %v1353
    %3133 = vst [vmem:[#allocation5 + $0x130] sm:$0xff] %v1098
    %3134 = vst [vmem:[#allocation5 + $0x138] sm:$0xff] %v1354
    %3135 = vst [vmem:[#allocation5 + $0x140] sm:$0xff] %v1099
    %3136 = vst [vmem:[#allocation5 + $0x148] sm:$0xff] %v1355
    %3137 = vst [vmem:[#allocation5 + $0x150] sm:$0xff] %v1100
    %3138 = vst [vmem:[#allocation5 + $0x158] sm:$0xff] %v1356
    %3139 = vst [vmem:[#allocation5 + $0x160] sm:$0xff] %v1101
    %3140 = vst [vmem:[#allocation5 + $0x168] sm:$0xff] %v1357
    %3141 = vst [vmem:[#allocation5 + $0x170] sm:$0xff] %v1102
    %3142 = vst [vmem:[#allocation5 + $0x178] sm:$0xff] %v1358
    %3143 = vst [vmem:[#allocation5 + $0x180] sm:$0xff] %v1103
    %3144 = vst [vmem:[#allocation5 + $0x188] sm:$0xff] %v1359
    %3145 = vst [vmem:[#allocation5 + $0x190] sm:$0xff] %v1104
    %3146 = vst [vmem:[#allocation5 + $0x198] sm:$0xff] %v1360
    %3147 = vst [vmem:[#allocation5 + $0x1a0] sm:$0xff] %v1105
    %3148 = vst [vmem:[#allocation5 + $0x1a8] sm:$0xff] %v1361
    %3149 = vst [vmem:[#allocation5 + $0x1b0] sm:$0xff] %v1106
    %3150 = vst [vmem:[#allocation5 + $0x1b8] sm:$0xff] %v1362
    %3151 = vst [vmem:[#allocation5 + $0x1c0] sm:$0xff] %v1107
    %3152 = vst [vmem:[#allocation5 + $0x1c8] sm:$0xff] %v1363
    %3153 = vst [vmem:[#allocation5 + $0x1d0] sm:$0xff] %v1108
    %3154 = vst [vmem:[#allocation5 + $0x1d8] sm:$0xff] %v1364
    %3155 = vst [vmem:[#allocation5 + $0x1e0] sm:$0xff] %v1109
    %3156 = vst [vmem:[#allocation5 + $0x1e8] sm:$0xff] %v1365
    %3157 = vst [vmem:[#allocation5 + $0x1f0] sm:$0xff] %v1110
    %3158 = vst [vmem:[#allocation5 + $0x1f8] sm:$0xff] %v1366
    %3159 = vst [vmem:[#allocation5 + $0x200] sm:$0xff] %v1127
    %3160 = vst [vmem:[#allocation5 + $0x208] sm:$0xff] %v1383
    %3161 = vst [vmem:[#allocation5 + $0x210] sm:$0xff] %v1128
    %3162 = vst [vmem:[#allocation5 + $0x218] sm:$0xff] %v1384
    %3163 = vst [vmem:[#allocation5 + $0x220] sm:$0xff] %v1129
    %3164 = vst [vmem:[#allocation5 + $0x228] sm:$0xff] %v1385
    %3165 = vst [vmem:[#allocation5 + $0x230] sm:$0xff] %v1130
    %3166 = vst [vmem:[#allocation5 + $0x238] sm:$0xff] %v1386
    %3167 = vst [vmem:[#allocation5 + $0x240] sm:$0xff] %v1131
    %3168 = vst [vmem:[#allocation5 + $0x248] sm:$0xff] %v1387
    %3169 = vst [vmem:[#allocation5 + $0x250] sm:$0xff] %v1132
    %3170 = vst [vmem:[#allocation5 + $0x258] sm:$0xff] %v1388
    %3171 = vst [vmem:[#allocation5 + $0x260] sm:$0xff] %v1133
    %3172 = vst [vmem:[#allocation5 + $0x268] sm:$0xff] %v1389
    %3173 = vst [vmem:[#allocation5 + $0x270] sm:$0xff] %v1134
    %3174 = vst [vmem:[#allocation5 + $0x278] sm:$0xff] %v1390
    %3175 = vst [vmem:[#allocation5 + $0x280] sm:$0xff] %v1135
    %3176 = vst [vmem:[#allocation5 + $0x288] sm:$0xff] %v1391
    %3177 = vst [vmem:[#allocation5 + $0x290] sm:$0xff] %v1136
    %3178 = vst [vmem:[#allocation5 + $0x298] sm:$0xff] %v1392
    %3179 = vst [vmem:[#allocation5 + $0x2a0] sm:$0xff] %v1137
    %3180 = vst [vmem:[#allocation5 + $0x2a8] sm:$0xff] %v1393
    %3181 = vst [vmem:[#allocation5 + $0x2b0] sm:$0xff] %v1138
    %3182 = vst [vmem:[#allocation5 + $0x2b8] sm:$0xff] %v1394
    %3183 = vst [vmem:[#allocation5 + $0x2c0] sm:$0xff] %v1139
    %3184 = vst [vmem:[#allocation5 + $0x2c8] sm:$0xff] %v1395
    %3185 = vst [vmem:[#allocation5 + $0x2d0] sm:$0xff] %v1140
    %3186 = vst [vmem:[#allocation5 + $0x2d8] sm:$0xff] %v1396
    %3187 = vst [vmem:[#allocation5 + $0x2e0] sm:$0xff] %v1141
    %3188 = vst [vmem:[#allocation5 + $0x2e8] sm:$0xff] %v1397
    %3189 = vst [vmem:[#allocation5 + $0x2f0] sm:$0xff] %v1142
    %3190 = vst [vmem:[#allocation5 + $0x2f8] sm:$0xff] %v1398
    %3191 = vst [vmem:[#allocation5 + $0x300] sm:$0xff] %v1159
    %3192 = vst [vmem:[#allocation5 + $0x308] sm:$0xff] %v1415
    %3193 = vst [vmem:[#allocation5 + $0x310] sm:$0xff] %v1160
    %3194 = vst [vmem:[#allocation5 + $0x318] sm:$0xff] %v1416
    %3195 = vst [vmem:[#allocation5 + $0x320] sm:$0xff] %v1161
    %3196 = vst [vmem:[#allocation5 + $0x328] sm:$0xff] %v1417
    %3197 = vst [vmem:[#allocation5 + $0x330] sm:$0xff] %v1162
    %3198 = vst [vmem:[#allocation5 + $0x338] sm:$0xff] %v1418
    %3199 = vst [vmem:[#allocation5 + $0x340] sm:$0xff] %v1163
    %3200 = vst [vmem:[#allocation5 + $0x348] sm:$0xff] %v1419
    %3201 = vst [vmem:[#allocation5 + $0x350] sm:$0xff] %v1164
    %3202 = vst [vmem:[#allocation5 + $0x358] sm:$0xff] %v1420
    %3203 = vst [vmem:[#allocation5 + $0x360] sm:$0xff] %v1165
    %3204 = vst [vmem:[#allocation5 + $0x368] sm:$0xff] %v1421
    %3205 = vst [vmem:[#allocation5 + $0x370] sm:$0xff] %v1166
    %3206 = vst [vmem:[#allocation5 + $0x378] sm:$0xff] %v1422
    %3207 = vst [vmem:[#allocation5 + $0x380] sm:$0xff] %v1167
    %3208 = vst [vmem:[#allocation5 + $0x388] sm:$0xff] %v1423
    %3209 = vst [vmem:[#allocation5 + $0x390] sm:$0xff] %v1168
    %3210 = vst [vmem:[#allocation5 + $0x398] sm:$0xff] %v1424
    %3211 = vst [vmem:[#allocation5 + $0x3a0] sm:$0xff] %v1169
    %3212 = vst [vmem:[#allocation5 + $0x3a8] sm:$0xff] %v1425
    %3213 = vst [vmem:[#allocation5 + $0x3b0] sm:$0xff] %v1170
    %3214 = vst [vmem:[#allocation5 + $0x3b8] sm:$0xff] %v1426
    %3215 = vst [vmem:[#allocation5 + $0x3c0] sm:$0xff] %v1171
    %3216 = vst [vmem:[#allocation5 + $0x3c8] sm:$0xff] %v1427
    %3217 = vst [vmem:[#allocation5 + $0x3d0] sm:$0xff] %v1172
    %3218 = vst [vmem:[#allocation5 + $0x3d8] sm:$0xff] %v1428
    %3219 = vst [vmem:[#allocation5 + $0x3e0] sm:$0xff] %v1173
    %3220 = vst [vmem:[#allocation5 + $0x3e8] sm:$0xff] %v1429
    %3221 = vst [vmem:[#allocation5 + $0x3f0] sm:$0xff] %v1174
    %3222 = vst [vmem:[#allocation5 + $0x3f8] sm:$0xff] %v1430
    %3223 = vst [vmem:[#allocation5 + $0x400] sm:$0xff] %v1191
    %3224 = vst [vmem:[#allocation5 + $0x408] sm:$0xff] %v1447
    %3225 = vst [vmem:[#allocation5 + $0x410] sm:$0xff] %v1192
    %3226 = vst [vmem:[#allocation5 + $0x418] sm:$0xff] %v1448
    %3227 = vst [vmem:[#allocation5 + $0x420] sm:$0xff] %v1193
    %3228 = vst [vmem:[#allocation5 + $0x428] sm:$0xff] %v1449
    %3229 = vst [vmem:[#allocation5 + $0x430] sm:$0xff] %v1194
    %3230 = vst [vmem:[#allocation5 + $0x438] sm:$0xff] %v1450
    %3231 = vst [vmem:[#allocation5 + $0x440] sm:$0xff] %v1195
    %3232 = vst [vmem:[#allocation5 + $0x448] sm:$0xff] %v1451
    %3233 = vst [vmem:[#allocation5 + $0x450] sm:$0xff] %v1196
    %3234 = vst [vmem:[#allocation5 + $0x458] sm:$0xff] %v1452
    %3235 = vst [vmem:[#allocation5 + $0x460] sm:$0xff] %v1197
    %3236 = vst [vmem:[#allocation5 + $0x468] sm:$0xff] %v1453
    %3237 = vst [vmem:[#allocation5 + $0x470] sm:$0xff] %v1198
    %3238 = vst [vmem:[#allocation5 + $0x478] sm:$0xff] %v1454
    %3239 = vst [vmem:[#allocation5 + $0x480] sm:$0xff] %v1199
    %3240 = vst [vmem:[#allocation5 + $0x488] sm:$0xff] %v1455
    %3241 = vst [vmem:[#allocation5 + $0x490] sm:$0xff] %v1200
    %3242 = vst [vmem:[#allocation5 + $0x498] sm:$0xff] %v1456
    %3243 = vst [vmem:[#allocation5 + $0x4a0] sm:$0xff] %v1201
    %3244 = vst [vmem:[#allocation5 + $0x4a8] sm:$0xff] %v1457
    %3245 = vst [vmem:[#allocation5 + $0x4b0] sm:$0xff] %v1202
    %3246 = vst [vmem:[#allocation5 + $0x4b8] sm:$0xff] %v1458
    %3247 = vst [vmem:[#allocation5 + $0x4c0] sm:$0xff] %v1203
    %3248 = vst [vmem:[#allocation5 + $0x4c8] sm:$0xff] %v1459
    %3249 = vst [vmem:[#allocation5 + $0x4d0] sm:$0xff] %v1204
    %3250 = vst [vmem:[#allocation5 + $0x4d8] sm:$0xff] %v1460
    %3251 = vst [vmem:[#allocation5 + $0x4e0] sm:$0xff] %v1205
    %3252 = vst [vmem:[#allocation5 + $0x4e8] sm:$0xff] %v1461
    %3253 = vst [vmem:[#allocation5 + $0x4f0] sm:$0xff] %v1206
    %3254 = vst [vmem:[#allocation5 + $0x4f8] sm:$0xff] %v1462
    %3255 = vst [vmem:[#allocation5 + $0x500] sm:$0xff] %v1223
    %3256 = vst [vmem:[#allocation5 + $0x508] sm:$0xff] %v1479
    %3257 = vst [vmem:[#allocation5 + $0x510] sm:$0xff] %v1224
    %3258 = vst [vmem:[#allocation5 + $0x518] sm:$0xff] %v1480
    %3259 = vst [vmem:[#allocation5 + $0x520] sm:$0xff] %v1225
    %3260 = vst [vmem:[#allocation5 + $0x528] sm:$0xff] %v1481
    %3261 = vst [vmem:[#allocation5 + $0x530] sm:$0xff] %v1226
    %3262 = vst [vmem:[#allocation5 + $0x538] sm:$0xff] %v1482
    %3263 = vst [vmem:[#allocation5 + $0x540] sm:$0xff] %v1227
    %3264 = vst [vmem:[#allocation5 + $0x548] sm:$0xff] %v1483
    %3265 = vst [vmem:[#allocation5 + $0x550] sm:$0xff] %v1228
    %3266 = vst [vmem:[#allocation5 + $0x558] sm:$0xff] %v1484
    %3267 = vst [vmem:[#allocation5 + $0x560] sm:$0xff] %v1229
    %3268 = vst [vmem:[#allocation5 + $0x568] sm:$0xff] %v1485
    %3269 = vst [vmem:[#allocation5 + $0x570] sm:$0xff] %v1230
    %3270 = vst [vmem:[#allocation5 + $0x578] sm:$0xff] %v1486
    %3271 = vst [vmem:[#allocation5 + $0x580] sm:$0xff] %v1231
    %3272 = vst [vmem:[#allocation5 + $0x588] sm:$0xff] %v1487
    %3273 = vst [vmem:[#allocation5 + $0x590] sm:$0xff] %v1232
    %3274 = vst [vmem:[#allocation5 + $0x598] sm:$0xff] %v1488
    %3275 = vst [vmem:[#allocation5 + $0x5a0] sm:$0xff] %v1233
    %3276 = vst [vmem:[#allocation5 + $0x5a8] sm:$0xff] %v1489
    %3277 = vst [vmem:[#allocation5 + $0x5b0] sm:$0xff] %v1234
    %3278 = vst [vmem:[#allocation5 + $0x5b8] sm:$0xff] %v1490
    %3279 = vst [vmem:[#allocation5 + $0x5c0] sm:$0xff] %v1235
    %3280 = vst [vmem:[#allocation5 + $0x5c8] sm:$0xff] %v1491
    %3281 = vst [vmem:[#allocation5 + $0x5d0] sm:$0xff] %v1236
    %3282 = vst [vmem:[#allocation5 + $0x5d8] sm:$0xff] %v1492
    %3283 = vst [vmem:[#allocation5 + $0x5e0] sm:$0xff] %v1237
    %3284 = vst [vmem:[#allocation5 + $0x5e8] sm:$0xff] %v1493
    %3285 = vst [vmem:[#allocation5 + $0x5f0] sm:$0xff] %v1238
    %3286 = vst [vmem:[#allocation5 + $0x5f8] sm:$0xff] %v1494
    %3287 = vst [vmem:[#allocation5 + $0x600] sm:$0xff] %v1255
    %3288 = vst [vmem:[#allocation5 + $0x608] sm:$0xff] %v1511
    %3289 = vst [vmem:[#allocation5 + $0x610] sm:$0xff] %v1256
    %3290 = vst [vmem:[#allocation5 + $0x618] sm:$0xff] %v1512
    %3291 = vst [vmem:[#allocation5 + $0x620] sm:$0xff] %v1257
    %3292 = vst [vmem:[#allocation5 + $0x628] sm:$0xff] %v1513
    %3293 = vst [vmem:[#allocation5 + $0x630] sm:$0xff] %v1258
    %3294 = vst [vmem:[#allocation5 + $0x638] sm:$0xff] %v1514
    %3295 = vst [vmem:[#allocation5 + $0x640] sm:$0xff] %v1259
    %3296 = vst [vmem:[#allocation5 + $0x648] sm:$0xff] %v1515
    %3297 = vst [vmem:[#allocation5 + $0x650] sm:$0xff] %v1260
    %3298 = vst [vmem:[#allocation5 + $0x658] sm:$0xff] %v1516
    %3299 = vst [vmem:[#allocation5 + $0x660] sm:$0xff] %v1261
    %3300 = vst [vmem:[#allocation5 + $0x668] sm:$0xff] %v1517
    %3301 = vst [vmem:[#allocation5 + $0x670] sm:$0xff] %v1262
    %3302 = vst [vmem:[#allocation5 + $0x678] sm:$0xff] %v1518
    %3303 = vst [vmem:[#allocation5 + $0x680] sm:$0xff] %v1263
    %3304 = vst [vmem:[#allocation5 + $0x688] sm:$0xff] %v1519
    %3305 = vst [vmem:[#allocation5 + $0x690] sm:$0xff] %v1264
    %3306 = vst [vmem:[#allocation5 + $0x698] sm:$0xff] %v1520
    %3307 = vst [vmem:[#allocation5 + $0x6a0] sm:$0xff] %v1265
    %3308 = vst [vmem:[#allocation5 + $0x6a8] sm:$0xff] %v1521
    %3309 = vst [vmem:[#allocation5 + $0x6b0] sm:$0xff] %v1266
    %3310 = vst [vmem:[#allocation5 + $0x6b8] sm:$0xff] %v1522
    %3311 = vst [vmem:[#allocation5 + $0x6c0] sm:$0xff] %v1267
    %3312 = vst [vmem:[#allocation5 + $0x6c8] sm:$0xff] %v1523
    %3313 = vst [vmem:[#allocation5 + $0x6d0] sm:$0xff] %v1268
    %3314 = vst [vmem:[#allocation5 + $0x6d8] sm:$0xff] %v1524
    %3315 = vst [vmem:[#allocation5 + $0x6e0] sm:$0xff] %v1269
    %3316 = vst [vmem:[#allocation5 + $0x6e8] sm:$0xff] %v1525
    %3317 = vst [vmem:[#allocation5 + $0x6f0] sm:$0xff] %v1270
    %3318 = vst [vmem:[#allocation5 + $0x6f8] sm:$0xff] %v1526
    %3319 = vst [vmem:[#allocation5 + $0x700] sm:$0xff] %v1287
    %3320 = vst [vmem:[#allocation5 + $0x708] sm:$0xff] %v1543
    %3321 = vst [vmem:[#allocation5 + $0x710] sm:$0xff] %v1288
    %3322 = vst [vmem:[#allocation5 + $0x718] sm:$0xff] %v1544
    %3323 = vst [vmem:[#allocation5 + $0x720] sm:$0xff] %v1289
    %3324 = vst [vmem:[#allocation5 + $0x728] sm:$0xff] %v1545
    %3325 = vst [vmem:[#allocation5 + $0x730] sm:$0xff] %v1290
    %3326 = vst [vmem:[#allocation5 + $0x738] sm:$0xff] %v1546
    %3327 = vst [vmem:[#allocation5 + $0x740] sm:$0xff] %v1291
    %3328 = vst [vmem:[#allocation5 + $0x748] sm:$0xff] %v1547
    %3329 = vst [vmem:[#allocation5 + $0x750] sm:$0xff] %v1292
    %3330 = vst [vmem:[#allocation5 + $0x758] sm:$0xff] %v1548
    %3331 = vst [vmem:[#allocation5 + $0x760] sm:$0xff] %v1293
    %3332 = vst [vmem:[#allocation5 + $0x768] sm:$0xff] %v1549
    %3333 = vst [vmem:[#allocation5 + $0x770] sm:$0xff] %v1294
    %3334 = vst [vmem:[#allocation5 + $0x778] sm:$0xff] %v1550
    %3335 = vst [vmem:[#allocation5 + $0x780] sm:$0xff] %v1295
    %3336 = vst [vmem:[#allocation5 + $0x788] sm:$0xff] %v1551
    %3337 = vst [vmem:[#allocation5 + $0x790] sm:$0xff] %v1296
    %3338 = vst [vmem:[#allocation5 + $0x798] sm:$0xff] %v1552
    %3339 = vst [vmem:[#allocation5 + $0x7a0] sm:$0xff] %v1297
    %3340 = vst [vmem:[#allocation5 + $0x7a8] sm:$0xff] %v1553
    %3341 = vst [vmem:[#allocation5 + $0x7b0] sm:$0xff] %v1298
    %3342 = vst [vmem:[#allocation5 + $0x7b8] sm:$0xff] %v1554
    %3343 = vst [vmem:[#allocation5 + $0x7c0] sm:$0xff] %v1299
    %3344 = vst [vmem:[#allocation5 + $0x7c8] sm:$0xff] %v1555
    %3345 = vst [vmem:[#allocation5 + $0x7d0] sm:$0xff] %v1300
    %3346 = vst [vmem:[#allocation5 + $0x7d8] sm:$0xff] %v1556
    %3347 = vst [vmem:[#allocation5 + $0x7e0] sm:$0xff] %v1301
    %3348 = vst [vmem:[#allocation5 + $0x7e8] sm:$0xff] %v1557
    %3349 = vst [vmem:[#allocation5 + $0x7f0] sm:$0xff] %v1302
    %3350 = vst [vmem:[#allocation5 + $0x7f8] sm:$0xff] %v1558
    %3351 = vst [vmem:[#allocation5 + $0x800] sm:$0xff] %v1575
    %3352 = vst [vmem:[#allocation5 + $0x808] sm:$0xff] %v1831
    %3353 = vst [vmem:[#allocation5 + $0x810] sm:$0xff] %v1576
    %3354 = vst [vmem:[#allocation5 + $0x818] sm:$0xff] %v1832
    %3355 = vst [vmem:[#allocation5 + $0x820] sm:$0xff] %v1577
    %3356 = vst [vmem:[#allocation5 + $0x828] sm:$0xff] %v1833
    %3357 = vst [vmem:[#allocation5 + $0x830] sm:$0xff] %v1578
    %3358 = vst [vmem:[#allocation5 + $0x838] sm:$0xff] %v1834
    %3359 = vst [vmem:[#allocation5 + $0x840] sm:$0xff] %v1579
    %3360 = vst [vmem:[#allocation5 + $0x848] sm:$0xff] %v1835
    %3361 = vst [vmem:[#allocation5 + $0x850] sm:$0xff] %v1580
    %3362 = vst [vmem:[#allocation5 + $0x858] sm:$0xff] %v1836
    %3363 = vst [vmem:[#allocation5 + $0x860] sm:$0xff] %v1581
    %3364 = vst [vmem:[#allocation5 + $0x868] sm:$0xff] %v1837
    %3365 = vst [vmem:[#allocation5 + $0x870] sm:$0xff] %v1582
    %3366 = vst [vmem:[#allocation5 + $0x878] sm:$0xff] %v1838
    %3367 = vst [vmem:[#allocation5 + $0x880] sm:$0xff] %v1583
    %3368 = vst [vmem:[#allocation5 + $0x888] sm:$0xff] %v1839
    %3369 = vst [vmem:[#allocation5 + $0x890] sm:$0xff] %v1584
    %3370 = vst [vmem:[#allocation5 + $0x898] sm:$0xff] %v1840
    %3371 = vst [vmem:[#allocation5 + $0x8a0] sm:$0xff] %v1585
    %3372 = vst [vmem:[#allocation5 + $0x8a8] sm:$0xff] %v1841
    %3373 = vst [vmem:[#allocation5 + $0x8b0] sm:$0xff] %v1586
    %3374 = vst [vmem:[#allocation5 + $0x8b8] sm:$0xff] %v1842
    %3375 = vst [vmem:[#allocation5 + $0x8c0] sm:$0xff] %v1587
    %3376 = vst [vmem:[#allocation5 + $0x8c8] sm:$0xff] %v1843
    %3377 = vst [vmem:[#allocation5 + $0x8d0] sm:$0xff] %v1588
    %3378 = vst [vmem:[#allocation5 + $0x8d8] sm:$0xff] %v1844
    %3379 = vst [vmem:[#allocation5 + $0x8e0] sm:$0xff] %v1589
    %3380 = vst [vmem:[#allocation5 + $0x8e8] sm:$0xff] %v1845
    %3381 = vst [vmem:[#allocation5 + $0x8f0] sm:$0xff] %v1590
    %3382 = vst [vmem:[#allocation5 + $0x8f8] sm:$0xff] %v1846
    %3383 = vst [vmem:[#allocation5 + $0x900] sm:$0xff] %v1607
    %3384 = vst [vmem:[#allocation5 + $0x908] sm:$0xff] %v1863
    %3385 = vst [vmem:[#allocation5 + $0x910] sm:$0xff] %v1608
    %3386 = vst [vmem:[#allocation5 + $0x918] sm:$0xff] %v1864
    %3387 = vst [vmem:[#allocation5 + $0x920] sm:$0xff] %v1609
    %3388 = vst [vmem:[#allocation5 + $0x928] sm:$0xff] %v1865
    %3389 = vst [vmem:[#allocation5 + $0x930] sm:$0xff] %v1610
    %3390 = vst [vmem:[#allocation5 + $0x938] sm:$0xff] %v1866
    %3391 = vst [vmem:[#allocation5 + $0x940] sm:$0xff] %v1611
    %3392 = vst [vmem:[#allocation5 + $0x948] sm:$0xff] %v1867
    %3393 = vst [vmem:[#allocation5 + $0x950] sm:$0xff] %v1612
    %3394 = vst [vmem:[#allocation5 + $0x958] sm:$0xff] %v1868
    %3395 = vst [vmem:[#allocation5 + $0x960] sm:$0xff] %v1613
    %3396 = vst [vmem:[#allocation5 + $0x968] sm:$0xff] %v1869
    %3397 = vst [vmem:[#allocation5 + $0x970] sm:$0xff] %v1614
    %3398 = vst [vmem:[#allocation5 + $0x978] sm:$0xff] %v1870
    %3399 = vst [vmem:[#allocation5 + $0x980] sm:$0xff] %v1615
    %3400 = vst [vmem:[#allocation5 + $0x988] sm:$0xff] %v1871
    %3401 = vst [vmem:[#allocation5 + $0x990] sm:$0xff] %v1616
    %3402 = vst [vmem:[#allocation5 + $0x998] sm:$0xff] %v1872
    %3403 = vst [vmem:[#allocation5 + $0x9a0] sm:$0xff] %v1617
    %3404 = vst [vmem:[#allocation5 + $0x9a8] sm:$0xff] %v1873
    %3405 = vst [vmem:[#allocation5 + $0x9b0] sm:$0xff] %v1618
    %3406 = vst [vmem:[#allocation5 + $0x9b8] sm:$0xff] %v1874
    %3407 = vst [vmem:[#allocation5 + $0x9c0] sm:$0xff] %v1619
    %3408 = vst [vmem:[#allocation5 + $0x9c8] sm:$0xff] %v1875
    %3409 = vst [vmem:[#allocation5 + $0x9d0] sm:$0xff] %v1620
    %3410 = vst [vmem:[#allocation5 + $0x9d8] sm:$0xff] %v1876
    %3411 = vst [vmem:[#allocation5 + $0x9e0] sm:$0xff] %v1621
    %3412 = vst [vmem:[#allocation5 + $0x9e8] sm:$0xff] %v1877
    %3413 = vst [vmem:[#allocation5 + $0x9f0] sm:$0xff] %v1622
    %3414 = vst [vmem:[#allocation5 + $0x9f8] sm:$0xff] %v1878
    %3415 = vst [vmem:[#allocation5 + $0xa00] sm:$0xff] %v1639
    %3416 = vst [vmem:[#allocation5 + $0xa08] sm:$0xff] %v1895
    %3417 = vst [vmem:[#allocation5 + $0xa10] sm:$0xff] %v1640
    %3418 = vst [vmem:[#allocation5 + $0xa18] sm:$0xff] %v1896
    %3419 = vst [vmem:[#allocation5 + $0xa20] sm:$0xff] %v1641
    %3420 = vst [vmem:[#allocation5 + $0xa28] sm:$0xff] %v1897
    %3421 = vst [vmem:[#allocation5 + $0xa30] sm:$0xff] %v1642
    %3422 = vst [vmem:[#allocation5 + $0xa38] sm:$0xff] %v1898
    %3423 = vst [vmem:[#allocation5 + $0xa40] sm:$0xff] %v1643
    %3424 = vst [vmem:[#allocation5 + $0xa48] sm:$0xff] %v1899
    %3425 = vst [vmem:[#allocation5 + $0xa50] sm:$0xff] %v1644
    %3426 = vst [vmem:[#allocation5 + $0xa58] sm:$0xff] %v1900
    %3427 = vst [vmem:[#allocation5 + $0xa60] sm:$0xff] %v1645
    %3428 = vst [vmem:[#allocation5 + $0xa68] sm:$0xff] %v1901
    %3429 = vst [vmem:[#allocation5 + $0xa70] sm:$0xff] %v1646
    %3430 = vst [vmem:[#allocation5 + $0xa78] sm:$0xff] %v1902
    %3431 = vst [vmem:[#allocation5 + $0xa80] sm:$0xff] %v1647
    %3432 = vst [vmem:[#allocation5 + $0xa88] sm:$0xff] %v1903
    %3433 = vst [vmem:[#allocation5 + $0xa90] sm:$0xff] %v1648
    %3434 = vst [vmem:[#allocation5 + $0xa98] sm:$0xff] %v1904
    %3435 = vst [vmem:[#allocation5 + $0xaa0] sm:$0xff] %v1649
    %3436 = vst [vmem:[#allocation5 + $0xaa8] sm:$0xff] %v1905
    %3437 = vst [vmem:[#allocation5 + $0xab0] sm:$0xff] %v1650
    %3438 = vst [vmem:[#allocation5 + $0xab8] sm:$0xff] %v1906
    %3439 = vst [vmem:[#allocation5 + $0xac0] sm:$0xff] %v1651
    %3440 = vst [vmem:[#allocation5 + $0xac8] sm:$0xff] %v1907
    %3441 = vst [vmem:[#allocation5 + $0xad0] sm:$0xff] %v1652
    %3442 = vst [vmem:[#allocation5 + $0xad8] sm:$0xff] %v1908
    %3443 = vst [vmem:[#allocation5 + $0xae0] sm:$0xff] %v1653
    %3444 = vst [vmem:[#allocation5 + $0xae8] sm:$0xff] %v1909
    %3445 = vst [vmem:[#allocation5 + $0xaf0] sm:$0xff] %v1654
    %3446 = vst [vmem:[#allocation5 + $0xaf8] sm:$0xff] %v1910
    %3447 = vst [vmem:[#allocation5 + $0xb00] sm:$0xff] %v1671
    %3448 = vst [vmem:[#allocation5 + $0xb08] sm:$0xff] %v1927
    %3449 = vst [vmem:[#allocation5 + $0xb10] sm:$0xff] %v1672
    %3450 = vst [vmem:[#allocation5 + $0xb18] sm:$0xff] %v1928
    %3451 = vst [vmem:[#allocation5 + $0xb20] sm:$0xff] %v1673
    %3452 = vst [vmem:[#allocation5 + $0xb28] sm:$0xff] %v1929
    %3453 = vst [vmem:[#allocation5 + $0xb30] sm:$0xff] %v1674
    %3454 = vst [vmem:[#allocation5 + $0xb38] sm:$0xff] %v1930
    %3455 = vst [vmem:[#allocation5 + $0xb40] sm:$0xff] %v1675
    %3456 = vst [vmem:[#allocation5 + $0xb48] sm:$0xff] %v1931
    %3457 = vst [vmem:[#allocation5 + $0xb50] sm:$0xff] %v1676
    %3458 = vst [vmem:[#allocation5 + $0xb58] sm:$0xff] %v1932
    %3459 = vst [vmem:[#allocation5 + $0xb60] sm:$0xff] %v1677
    %3460 = vst [vmem:[#allocation5 + $0xb68] sm:$0xff] %v1933
    %3461 = vst [vmem:[#allocation5 + $0xb70] sm:$0xff] %v1678
    %3462 = vst [vmem:[#allocation5 + $0xb78] sm:$0xff] %v1934
    %3463 = vst [vmem:[#allocation5 + $0xb80] sm:$0xff] %v1679
    %3464 = vst [vmem:[#allocation5 + $0xb88] sm:$0xff] %v1935
    %3465 = vst [vmem:[#allocation5 + $0xb90] sm:$0xff] %v1680
    %3466 = vst [vmem:[#allocation5 + $0xb98] sm:$0xff] %v1936
    %3467 = vst [vmem:[#allocation5 + $0xba0] sm:$0xff] %v1681
    %3468 = vst [vmem:[#allocation5 + $0xba8] sm:$0xff] %v1937
    %3469 = vst [vmem:[#allocation5 + $0xbb0] sm:$0xff] %v1682
    %3470 = vst [vmem:[#allocation5 + $0xbb8] sm:$0xff] %v1938
    %3471 = vst [vmem:[#allocation5 + $0xbc0] sm:$0xff] %v1683
    %3472 = vst [vmem:[#allocation5 + $0xbc8] sm:$0xff] %v1939
    %3473 = vst [vmem:[#allocation5 + $0xbd0] sm:$0xff] %v1684
    %3474 = vst [vmem:[#allocation5 + $0xbd8] sm:$0xff] %v1940
    %3475 = vst [vmem:[#allocation5 + $0xbe0] sm:$0xff] %v1685
    %3476 = vst [vmem:[#allocation5 + $0xbe8] sm:$0xff] %v1941
    %3477 = vst [vmem:[#allocation5 + $0xbf0] sm:$0xff] %v1686
    %3478 = vst [vmem:[#allocation5 + $0xbf8] sm:$0xff] %v1942
    %3479 = vst [vmem:[#allocation5 + $0xc00] sm:$0xff] %v1703
    %3480 = vst [vmem:[#allocation5 + $0xc08] sm:$0xff] %v1959
    %3481 = vst [vmem:[#allocation5 + $0xc10] sm:$0xff] %v1704
    %3482 = vst [vmem:[#allocation5 + $0xc18] sm:$0xff] %v1960
    %3483 = vst [vmem:[#allocation5 + $0xc20] sm:$0xff] %v1705
    %3484 = vst [vmem:[#allocation5 + $0xc28] sm:$0xff] %v1961
    %3485 = vst [vmem:[#allocation5 + $0xc30] sm:$0xff] %v1706
    %3486 = vst [vmem:[#allocation5 + $0xc38] sm:$0xff] %v1962
    %3487 = vst [vmem:[#allocation5 + $0xc40] sm:$0xff] %v1707
    %3488 = vst [vmem:[#allocation5 + $0xc48] sm:$0xff] %v1963
    %3489 = vst [vmem:[#allocation5 + $0xc50] sm:$0xff] %v1708
    %3490 = vst [vmem:[#allocation5 + $0xc58] sm:$0xff] %v1964
    %3491 = vst [vmem:[#allocation5 + $0xc60] sm:$0xff] %v1709
    %3492 = vst [vmem:[#allocation5 + $0xc68] sm:$0xff] %v1965
    %3493 = vst [vmem:[#allocation5 + $0xc70] sm:$0xff] %v1710
    %3494 = vst [vmem:[#allocation5 + $0xc78] sm:$0xff] %v1966
    %3495 = vst [vmem:[#allocation5 + $0xc80] sm:$0xff] %v1711
    %3496 = vst [vmem:[#allocation5 + $0xc88] sm:$0xff] %v1967
    %3497 = vst [vmem:[#allocation5 + $0xc90] sm:$0xff] %v1712
    %3498 = vst [vmem:[#allocation5 + $0xc98] sm:$0xff] %v1968
    %3499 = vst [vmem:[#allocation5 + $0xca0] sm:$0xff] %v1713
    %3500 = vst [vmem:[#allocation5 + $0xca8] sm:$0xff] %v1969
    %3501 = vst [vmem:[#allocation5 + $0xcb0] sm:$0xff] %v1714
    %3502 = vst [vmem:[#allocation5 + $0xcb8] sm:$0xff] %v1970
    %3503 = vst [vmem:[#allocation5 + $0xcc0] sm:$0xff] %v1715
    %3504 = vst [vmem:[#allocation5 + $0xcc8] sm:$0xff] %v1971
    %3505 = vst [vmem:[#allocation5 + $0xcd0] sm:$0xff] %v1716
    %3506 = vst [vmem:[#allocation5 + $0xcd8] sm:$0xff] %v1972
    %3507 = vst [vmem:[#allocation5 + $0xce0] sm:$0xff] %v1717
    %3508 = vst [vmem:[#allocation5 + $0xce8] sm:$0xff] %v1973
    %3509 = vst [vmem:[#allocation5 + $0xcf0] sm:$0xff] %v1718
    %3510 = vst [vmem:[#allocation5 + $0xcf8] sm:$0xff] %v1974
    %3511 = vst [vmem:[#allocation5 + $0xd00] sm:$0xff] %v1735
    %3512 = vst [vmem:[#allocation5 + $0xd08] sm:$0xff] %v1991
    %3513 = vst [vmem:[#allocation5 + $0xd10] sm:$0xff] %v1736
    %3514 = vst [vmem:[#allocation5 + $0xd18] sm:$0xff] %v1992
    %3515 = vst [vmem:[#allocation5 + $0xd20] sm:$0xff] %v1737
    %3516 = vst [vmem:[#allocation5 + $0xd28] sm:$0xff] %v1993
    %3517 = vst [vmem:[#allocation5 + $0xd30] sm:$0xff] %v1738
    %3518 = vst [vmem:[#allocation5 + $0xd38] sm:$0xff] %v1994
    %3519 = vst [vmem:[#allocation5 + $0xd40] sm:$0xff] %v1739
    %3520 = vst [vmem:[#allocation5 + $0xd48] sm:$0xff] %v1995
    %3521 = vst [vmem:[#allocation5 + $0xd50] sm:$0xff] %v1740
    %3522 = vst [vmem:[#allocation5 + $0xd58] sm:$0xff] %v1996
    %3523 = vst [vmem:[#allocation5 + $0xd60] sm:$0xff] %v1741
    %3524 = vst [vmem:[#allocation5 + $0xd68] sm:$0xff] %v1997
    %3525 = vst [vmem:[#allocation5 + $0xd70] sm:$0xff] %v1742
    %3526 = vst [vmem:[#allocation5 + $0xd78] sm:$0xff] %v1998
    %3527 = vst [vmem:[#allocation5 + $0xd80] sm:$0xff] %v1743
    %3528 = vst [vmem:[#allocation5 + $0xd88] sm:$0xff] %v1999
    %3529 = vst [vmem:[#allocation5 + $0xd90] sm:$0xff] %v1744
    %3530 = vst [vmem:[#allocation5 + $0xd98] sm:$0xff] %v2000
    %3531 = vst [vmem:[#allocation5 + $0xda0] sm:$0xff] %v1745
    %3532 = vst [vmem:[#allocation5 + $0xda8] sm:$0xff] %v2001
    %3533 = vst [vmem:[#allocation5 + $0xdb0] sm:$0xff] %v1746
    %3534 = vst [vmem:[#allocation5 + $0xdb8] sm:$0xff] %v2002
    %3535 = vst [vmem:[#allocation5 + $0xdc0] sm:$0xff] %v1747
    %3536 = vst [vmem:[#allocation5 + $0xdc8] sm:$0xff] %v2003
    %3537 = vst [vmem:[#allocation5 + $0xdd0] sm:$0xff] %v1748
    %3538 = vst [vmem:[#allocation5 + $0xdd8] sm:$0xff] %v2004
    %3539 = vst [vmem:[#allocation5 + $0xde0] sm:$0xff] %v1749
    %3540 = vst [vmem:[#allocation5 + $0xde8] sm:$0xff] %v2005
    %3541 = vst [vmem:[#allocation5 + $0xdf0] sm:$0xff] %v1750
    %3542 = vst [vmem:[#allocation5 + $0xdf8] sm:$0xff] %v2006
    %3543 = vst [vmem:[#allocation5 + $0xe00] sm:$0xff] %v1767
    %3544 = vst [vmem:[#allocation5 + $0xe08] sm:$0xff] %v2023
    %3545 = vst [vmem:[#allocation5 + $0xe10] sm:$0xff] %v1768
    %3546 = vst [vmem:[#allocation5 + $0xe18] sm:$0xff] %v2024
    %3547 = vst [vmem:[#allocation5 + $0xe20] sm:$0xff] %v1769
    %3548 = vst [vmem:[#allocation5 + $0xe28] sm:$0xff] %v2025
    %3549 = vst [vmem:[#allocation5 + $0xe30] sm:$0xff] %v1770
    %3550 = vst [vmem:[#allocation5 + $0xe38] sm:$0xff] %v2026
    %3551 = vst [vmem:[#allocation5 + $0xe40] sm:$0xff] %v1771
    %3552 = vst [vmem:[#allocation5 + $0xe48] sm:$0xff] %v2027
    %3553 = vst [vmem:[#allocation5 + $0xe50] sm:$0xff] %v1772
    %3554 = vst [vmem:[#allocation5 + $0xe58] sm:$0xff] %v2028
    %3555 = vst [vmem:[#allocation5 + $0xe60] sm:$0xff] %v1773
    %3556 = vst [vmem:[#allocation5 + $0xe68] sm:$0xff] %v2029
    %3557 = vst [vmem:[#allocation5 + $0xe70] sm:$0xff] %v1774
    %3558 = vst [vmem:[#allocation5 + $0xe78] sm:$0xff] %v2030
    %3559 = vst [vmem:[#allocation5 + $0xe80] sm:$0xff] %v1775
    %3560 = vst [vmem:[#allocation5 + $0xe88] sm:$0xff] %v2031
    %3561 = vst [vmem:[#allocation5 + $0xe90] sm:$0xff] %v1776
    %3562 = vst [vmem:[#allocation5 + $0xe98] sm:$0xff] %v2032
    %3563 = vst [vmem:[#allocation5 + $0xea0] sm:$0xff] %v1777
    %3564 = vst [vmem:[#allocation5 + $0xea8] sm:$0xff] %v2033
    %3565 = vst [vmem:[#allocation5 + $0xeb0] sm:$0xff] %v1778
    %3566 = vst [vmem:[#allocation5 + $0xeb8] sm:$0xff] %v2034
    %3567 = vst [vmem:[#allocation5 + $0xec0] sm:$0xff] %v1779
    %3568 = vst [vmem:[#allocation5 + $0xec8] sm:$0xff] %v2035
    %3569 = vst [vmem:[#allocation5 + $0xed0] sm:$0xff] %v1780
    %3570 = vst [vmem:[#allocation5 + $0xed8] sm:$0xff] %v2036
    %3571 = vst [vmem:[#allocation5 + $0xee0] sm:$0xff] %v1781
    %3572 = vst [vmem:[#allocation5 + $0xee8] sm:$0xff] %v2037
    %3573 = vst [vmem:[#allocation5 + $0xef0] sm:$0xff] %v1782
    %3574 = vst [vmem:[#allocation5 + $0xef8] sm:$0xff] %v2038
    %3575 = vst [vmem:[#allocation5 + $0xf00] sm:$0xff] %v1799
    %3576 = vst [vmem:[#allocation5 + $0xf08] sm:$0xff] %v2055
    %3577 = vst [vmem:[#allocation5 + $0xf10] sm:$0xff] %v1800
    %3578 = vst [vmem:[#allocation5 + $0xf18] sm:$0xff] %v2056
    %3579 = vst [vmem:[#allocation5 + $0xf20] sm:$0xff] %v1801
    %3580 = vst [vmem:[#allocation5 + $0xf28] sm:$0xff] %v2057
    %3581 = vst [vmem:[#allocation5 + $0xf30] sm:$0xff] %v1802
    %3582 = vst [vmem:[#allocation5 + $0xf38] sm:$0xff] %v2058
    %3583 = vst [vmem:[#allocation5 + $0xf40] sm:$0xff] %v1803
    %3584 = vst [vmem:[#allocation5 + $0xf48] sm:$0xff] %v2059
    %3585 = vst [vmem:[#allocation5 + $0xf50] sm:$0xff] %v1804
    %3586 = vst [vmem:[#allocation5 + $0xf58] sm:$0xff] %v2060
    %3587 = vst [vmem:[#allocation5 + $0xf60] sm:$0xff] %v1805
    %3588 = vst [vmem:[#allocation5 + $0xf68] sm:$0xff] %v2061
    %3589 = vst [vmem:[#allocation5 + $0xf70] sm:$0xff] %v1806
    %3590 = vst [vmem:[#allocation5 + $0xf78] sm:$0xff] %v2062
    %3591 = vst [vmem:[#allocation5 + $0xf80] sm:$0xff] %v1807
    %3592 = vst [vmem:[#allocation5 + $0xf88] sm:$0xff] %v2063
    %3593 = vst [vmem:[#allocation5 + $0xf90] sm:$0xff] %v1808
    %3594 = vst [vmem:[#allocation5 + $0xf98] sm:$0xff] %v2064
    %3595 = vst [vmem:[#allocation5 + $0xfa0] sm:$0xff] %v1809
    %3596 = vst [vmem:[#allocation5 + $0xfa8] sm:$0xff] %v2065
    %3597 = vst [vmem:[#allocation5 + $0xfb0] sm:$0xff] %v1810
    %3598 = vst [vmem:[#allocation5 + $0xfb8] sm:$0xff] %v2066
    %3599 = vst [vmem:[#allocation5 + $0xfc0] sm:$0xff] %v1811
    %3600 = vst [vmem:[#allocation5 + $0xfc8] sm:$0xff] %v2067
    %3601 = vst [vmem:[#allocation5 + $0xfd0] sm:$0xff] %v1812
    %3602 = vst [vmem:[#allocation5 + $0xfd8] sm:$0xff] %v2068
    %3603 = vst [vmem:[#allocation5 + $0xfe0] sm:$0xff] %v1813
    %3604 = vst [vmem:[#allocation5 + $0xfe8] sm:$0xff] %v2069
    %3605 = vst [vmem:[#allocation5 + $0xff0] sm:$0xff] %v1814
    %3606 = vst [vmem:[#allocation5 + $0xff8] sm:$0xff] %v2070
    %3607 = vst [vmem:[#allocation5 + $0x1000] sm:$0xff] %v2087
    %3608 = vst [vmem:[#allocation5 + $0x1008] sm:$0xff] %v2343
    %3609 = vst [vmem:[#allocation5 + $0x1010] sm:$0xff] %v2088
    %3610 = vst [vmem:[#allocation5 + $0x1018] sm:$0xff] %v2344
    %3611 = vst [vmem:[#allocation5 + $0x1020] sm:$0xff] %v2089
    %3612 = vst [vmem:[#allocation5 + $0x1028] sm:$0xff] %v2345
    %3613 = vst [vmem:[#allocation5 + $0x1030] sm:$0xff] %v2090
    %3614 = vst [vmem:[#allocation5 + $0x1038] sm:$0xff] %v2346
    %3615 = vst [vmem:[#allocation5 + $0x1040] sm:$0xff] %v2091
    %3616 = vst [vmem:[#allocation5 + $0x1048] sm:$0xff] %v2347
    %3617 = vst [vmem:[#allocation5 + $0x1050] sm:$0xff] %v2092
    %3618 = vst [vmem:[#allocation5 + $0x1058] sm:$0xff] %v2348
    %3619 = vst [vmem:[#allocation5 + $0x1060] sm:$0xff] %v2093
    %3620 = vst [vmem:[#allocation5 + $0x1068] sm:$0xff] %v2349
    %3621 = vst [vmem:[#allocation5 + $0x1070] sm:$0xff] %v2094
    %3622 = vst [vmem:[#allocation5 + $0x1078] sm:$0xff] %v2350
    %3623 = vst [vmem:[#allocation5 + $0x1080] sm:$0xff] %v2095
    %3624 = vst [vmem:[#allocation5 + $0x1088] sm:$0xff] %v2351
    %3625 = vst [vmem:[#allocation5 + $0x1090] sm:$0xff] %v2096
    %3626 = vst [vmem:[#allocation5 + $0x1098] sm:$0xff] %v2352
    %3627 = vst [vmem:[#allocation5 + $0x10a0] sm:$0xff] %v2097
    %3628 = vst [vmem:[#allocation5 + $0x10a8] sm:$0xff] %v2353
    %3629 = vst [vmem:[#allocation5 + $0x10b0] sm:$0xff] %v2098
    %3630 = vst [vmem:[#allocation5 + $0x10b8] sm:$0xff] %v2354
    %3631 = vst [vmem:[#allocation5 + $0x10c0] sm:$0xff] %v2099
    %3632 = vst [vmem:[#allocation5 + $0x10c8] sm:$0xff] %v2355
    %3633 = vst [vmem:[#allocation5 + $0x10d0] sm:$0xff] %v2100
    %3634 = vst [vmem:[#allocation5 + $0x10d8] sm:$0xff] %v2356
    %3635 = vst [vmem:[#allocation5 + $0x10e0] sm:$0xff] %v2101
    %3636 = vst [vmem:[#allocation5 + $0x10e8] sm:$0xff] %v2357
    %3637 = vst [vmem:[#allocation5 + $0x10f0] sm:$0xff] %v2102
    %3638 = vst [vmem:[#allocation5 + $0x10f8] sm:$0xff] %v2358
    %3639 = vst [vmem:[#allocation5 + $0x1100] sm:$0xff] %v2119
    %3640 = vst [vmem:[#allocation5 + $0x1108] sm:$0xff] %v2375
    %3641 = vst [vmem:[#allocation5 + $0x1110] sm:$0xff] %v2120
    %3642 = vst [vmem:[#allocation5 + $0x1118] sm:$0xff] %v2376
    %3643 = vst [vmem:[#allocation5 + $0x1120] sm:$0xff] %v2121
    %3644 = vst [vmem:[#allocation5 + $0x1128] sm:$0xff] %v2377
    %3645 = vst [vmem:[#allocation5 + $0x1130] sm:$0xff] %v2122
    %3646 = vst [vmem:[#allocation5 + $0x1138] sm:$0xff] %v2378
    %3647 = vst [vmem:[#allocation5 + $0x1140] sm:$0xff] %v2123
    %3648 = vst [vmem:[#allocation5 + $0x1148] sm:$0xff] %v2379
    %3649 = vst [vmem:[#allocation5 + $0x1150] sm:$0xff] %v2124
    %3650 = vst [vmem:[#allocation5 + $0x1158] sm:$0xff] %v2380
    %3651 = vst [vmem:[#allocation5 + $0x1160] sm:$0xff] %v2125
    %3652 = vst [vmem:[#allocation5 + $0x1168] sm:$0xff] %v2381
    %3653 = vst [vmem:[#allocation5 + $0x1170] sm:$0xff] %v2126
    %3654 = vst [vmem:[#allocation5 + $0x1178] sm:$0xff] %v2382
    %3655 = vst [vmem:[#allocation5 + $0x1180] sm:$0xff] %v2127
    %3656 = vst [vmem:[#allocation5 + $0x1188] sm:$0xff] %v2383
    %3657 = vst [vmem:[#allocation5 + $0x1190] sm:$0xff] %v2128
    %3658 = vst [vmem:[#allocation5 + $0x1198] sm:$0xff] %v2384
    %3659 = vst [vmem:[#allocation5 + $0x11a0] sm:$0xff] %v2129
    %3660 = vst [vmem:[#allocation5 + $0x11a8] sm:$0xff] %v2385
    %3661 = vst [vmem:[#allocation5 + $0x11b0] sm:$0xff] %v2130
    %3662 = vst [vmem:[#allocation5 + $0x11b8] sm:$0xff] %v2386
    %3663 = vst [vmem:[#allocation5 + $0x11c0] sm:$0xff] %v2131
    %3664 = vst [vmem:[#allocation5 + $0x11c8] sm:$0xff] %v2387
    %3665 = vst [vmem:[#allocation5 + $0x11d0] sm:$0xff] %v2132
    %3666 = vst [vmem:[#allocation5 + $0x11d8] sm:$0xff] %v2388
    %3667 = vst [vmem:[#allocation5 + $0x11e0] sm:$0xff] %v2133
    %3668 = vst [vmem:[#allocation5 + $0x11e8] sm:$0xff] %v2389
    %3669 = vst [vmem:[#allocation5 + $0x11f0] sm:$0xff] %v2134
    %3670 = vst [vmem:[#allocation5 + $0x11f8] sm:$0xff] %v2390
    %3671 = vst [vmem:[#allocation5 + $0x1200] sm:$0xff] %v2151
    %3672 = vst [vmem:[#allocation5 + $0x1208] sm:$0xff] %v2407
    %3673 = vst [vmem:[#allocation5 + $0x1210] sm:$0xff] %v2152
    %3674 = vst [vmem:[#allocation5 + $0x1218] sm:$0xff] %v2408
    %3675 = vst [vmem:[#allocation5 + $0x1220] sm:$0xff] %v2153
    %3676 = vst [vmem:[#allocation5 + $0x1228] sm:$0xff] %v2409
    %3677 = vst [vmem:[#allocation5 + $0x1230] sm:$0xff] %v2154
    %3678 = vst [vmem:[#allocation5 + $0x1238] sm:$0xff] %v2410
    %3679 = vst [vmem:[#allocation5 + $0x1240] sm:$0xff] %v2155
    %3680 = vst [vmem:[#allocation5 + $0x1248] sm:$0xff] %v2411
    %3681 = vst [vmem:[#allocation5 + $0x1250] sm:$0xff] %v2156
    %3682 = vst [vmem:[#allocation5 + $0x1258] sm:$0xff] %v2412
    %3683 = vst [vmem:[#allocation5 + $0x1260] sm:$0xff] %v2157
    %3684 = vst [vmem:[#allocation5 + $0x1268] sm:$0xff] %v2413
    %3685 = vst [vmem:[#allocation5 + $0x1270] sm:$0xff] %v2158
    %3686 = vst [vmem:[#allocation5 + $0x1278] sm:$0xff] %v2414
    %3687 = vst [vmem:[#allocation5 + $0x1280] sm:$0xff] %v2159
    %3688 = vst [vmem:[#allocation5 + $0x1288] sm:$0xff] %v2415
    %3689 = vst [vmem:[#allocation5 + $0x1290] sm:$0xff] %v2160
    %3690 = vst [vmem:[#allocation5 + $0x1298] sm:$0xff] %v2416
    %3691 = vst [vmem:[#allocation5 + $0x12a0] sm:$0xff] %v2161
    %3692 = vst [vmem:[#allocation5 + $0x12a8] sm:$0xff] %v2417
    %3693 = vst [vmem:[#allocation5 + $0x12b0] sm:$0xff] %v2162
    %3694 = vst [vmem:[#allocation5 + $0x12b8] sm:$0xff] %v2418
    %3695 = vst [vmem:[#allocation5 + $0x12c0] sm:$0xff] %v2163
    %3696 = vst [vmem:[#allocation5 + $0x12c8] sm:$0xff] %v2419
    %3697 = vst [vmem:[#allocation5 + $0x12d0] sm:$0xff] %v2164
    %3698 = vst [vmem:[#allocation5 + $0x12d8] sm:$0xff] %v2420
    %3699 = vst [vmem:[#allocation5 + $0x12e0] sm:$0xff] %v2165
    %3700 = vst [vmem:[#allocation5 + $0x12e8] sm:$0xff] %v2421
    %3701 = vst [vmem:[#allocation5 + $0x12f0] sm:$0xff] %v2166
    %3702 = vst [vmem:[#allocation5 + $0x12f8] sm:$0xff] %v2422
    %3703 = vst [vmem:[#allocation5 + $0x1300] sm:$0xff] %v2183
    %3704 = vst [vmem:[#allocation5 + $0x1308] sm:$0xff] %v2439
    %3705 = vst [vmem:[#allocation5 + $0x1310] sm:$0xff] %v2184
    %3706 = vst [vmem:[#allocation5 + $0x1318] sm:$0xff] %v2440
    %3707 = vst [vmem:[#allocation5 + $0x1320] sm:$0xff] %v2185
    %3708 = vst [vmem:[#allocation5 + $0x1328] sm:$0xff] %v2441
    %3709 = vst [vmem:[#allocation5 + $0x1330] sm:$0xff] %v2186
    %3710 = vst [vmem:[#allocation5 + $0x1338] sm:$0xff] %v2442
    %3711 = vst [vmem:[#allocation5 + $0x1340] sm:$0xff] %v2187
    %3712 = vst [vmem:[#allocation5 + $0x1348] sm:$0xff] %v2443
    %3713 = vst [vmem:[#allocation5 + $0x1350] sm:$0xff] %v2188
    %3714 = vst [vmem:[#allocation5 + $0x1358] sm:$0xff] %v2444
    %3715 = vst [vmem:[#allocation5 + $0x1360] sm:$0xff] %v2189
    %3716 = vst [vmem:[#allocation5 + $0x1368] sm:$0xff] %v2445
    %3717 = vst [vmem:[#allocation5 + $0x1370] sm:$0xff] %v2190
    %3718 = vst [vmem:[#allocation5 + $0x1378] sm:$0xff] %v2446
    %3719 = vst [vmem:[#allocation5 + $0x1380] sm:$0xff] %v2191
    %3720 = vst [vmem:[#allocation5 + $0x1388] sm:$0xff] %v2447
    %3721 = vst [vmem:[#allocation5 + $0x1390] sm:$0xff] %v2192
    %3722 = vst [vmem:[#allocation5 + $0x1398] sm:$0xff] %v2448
    %3723 = vst [vmem:[#allocation5 + $0x13a0] sm:$0xff] %v2193
    %3724 = vst [vmem:[#allocation5 + $0x13a8] sm:$0xff] %v2449
    %3725 = vst [vmem:[#allocation5 + $0x13b0] sm:$0xff] %v2194
    %3726 = vst [vmem:[#allocation5 + $0x13b8] sm:$0xff] %v2450
    %3727 = vst [vmem:[#allocation5 + $0x13c0] sm:$0xff] %v2195
    %3728 = vst [vmem:[#allocation5 + $0x13c8] sm:$0xff] %v2451
    %3729 = vst [vmem:[#allocation5 + $0x13d0] sm:$0xff] %v2196
    %3730 = vst [vmem:[#allocation5 + $0x13d8] sm:$0xff] %v2452
    %3731 = vst [vmem:[#allocation5 + $0x13e0] sm:$0xff] %v2197
    %3732 = vst [vmem:[#allocation5 + $0x13e8] sm:$0xff] %v2453
    %3733 = vst [vmem:[#allocation5 + $0x13f0] sm:$0xff] %v2198
    %3734 = vst [vmem:[#allocation5 + $0x13f8] sm:$0xff] %v2454
    %3735 = vst [vmem:[#allocation5 + $0x1400] sm:$0xff] %v2215
    %3736 = vst [vmem:[#allocation5 + $0x1408] sm:$0xff] %v2471
    %3737 = vst [vmem:[#allocation5 + $0x1410] sm:$0xff] %v2216
    %3738 = vst [vmem:[#allocation5 + $0x1418] sm:$0xff] %v2472
    %3739 = vst [vmem:[#allocation5 + $0x1420] sm:$0xff] %v2217
    %3740 = vst [vmem:[#allocation5 + $0x1428] sm:$0xff] %v2473
    %3741 = vst [vmem:[#allocation5 + $0x1430] sm:$0xff] %v2218
    %3742 = vst [vmem:[#allocation5 + $0x1438] sm:$0xff] %v2474
    %3743 = vst [vmem:[#allocation5 + $0x1440] sm:$0xff] %v2219
    %3744 = vst [vmem:[#allocation5 + $0x1448] sm:$0xff] %v2475
    %3745 = vst [vmem:[#allocation5 + $0x1450] sm:$0xff] %v2220
    %3746 = vst [vmem:[#allocation5 + $0x1458] sm:$0xff] %v2476
    %3747 = vst [vmem:[#allocation5 + $0x1460] sm:$0xff] %v2221
    %3748 = vst [vmem:[#allocation5 + $0x1468] sm:$0xff] %v2477
    %3749 = vst [vmem:[#allocation5 + $0x1470] sm:$0xff] %v2222
    %3750 = vst [vmem:[#allocation5 + $0x1478] sm:$0xff] %v2478
    %3751 = vst [vmem:[#allocation5 + $0x1480] sm:$0xff] %v2223
    %3752 = vst [vmem:[#allocation5 + $0x1488] sm:$0xff] %v2479
    %3753 = vst [vmem:[#allocation5 + $0x1490] sm:$0xff] %v2224
    %3754 = vst [vmem:[#allocation5 + $0x1498] sm:$0xff] %v2480
    %3755 = vst [vmem:[#allocation5 + $0x14a0] sm:$0xff] %v2225
    %3756 = vst [vmem:[#allocation5 + $0x14a8] sm:$0xff] %v2481
    %3757 = vst [vmem:[#allocation5 + $0x14b0] sm:$0xff] %v2226
    %3758 = vst [vmem:[#allocation5 + $0x14b8] sm:$0xff] %v2482
    %3759 = vst [vmem:[#allocation5 + $0x14c0] sm:$0xff] %v2227
    %3760 = vst [vmem:[#allocation5 + $0x14c8] sm:$0xff] %v2483
    %3761 = vst [vmem:[#allocation5 + $0x14d0] sm:$0xff] %v2228
    %3762 = vst [vmem:[#allocation5 + $0x14d8] sm:$0xff] %v2484
    %3763 = vst [vmem:[#allocation5 + $0x14e0] sm:$0xff] %v2229
    %3764 = vst [vmem:[#allocation5 + $0x14e8] sm:$0xff] %v2485
    %3765 = vst [vmem:[#allocation5 + $0x14f0] sm:$0xff] %v2230
    %3766 = vst [vmem:[#allocation5 + $0x14f8] sm:$0xff] %v2486
    %3767 = vst [vmem:[#allocation5 + $0x1500] sm:$0xff] %v2247
    %3768 = vst [vmem:[#allocation5 + $0x1508] sm:$0xff] %v2503
    %3769 = vst [vmem:[#allocation5 + $0x1510] sm:$0xff] %v2248
    %3770 = vst [vmem:[#allocation5 + $0x1518] sm:$0xff] %v2504
    %3771 = vst [vmem:[#allocation5 + $0x1520] sm:$0xff] %v2249
    %3772 = vst [vmem:[#allocation5 + $0x1528] sm:$0xff] %v2505
    %3773 = vst [vmem:[#allocation5 + $0x1530] sm:$0xff] %v2250
    %3774 = vst [vmem:[#allocation5 + $0x1538] sm:$0xff] %v2506
    %3775 = vst [vmem:[#allocation5 + $0x1540] sm:$0xff] %v2251
    %3776 = vst [vmem:[#allocation5 + $0x1548] sm:$0xff] %v2507
    %3777 = vst [vmem:[#allocation5 + $0x1550] sm:$0xff] %v2252
    %3778 = vst [vmem:[#allocation5 + $0x1558] sm:$0xff] %v2508
    %3779 = vst [vmem:[#allocation5 + $0x1560] sm:$0xff] %v2253
    %3780 = vst [vmem:[#allocation5 + $0x1568] sm:$0xff] %v2509
    %3781 = vst [vmem:[#allocation5 + $0x1570] sm:$0xff] %v2254
    %3782 = vst [vmem:[#allocation5 + $0x1578] sm:$0xff] %v2510
    %3783 = vst [vmem:[#allocation5 + $0x1580] sm:$0xff] %v2255
    %3784 = vst [vmem:[#allocation5 + $0x1588] sm:$0xff] %v2511
    %3785 = vst [vmem:[#allocation5 + $0x1590] sm:$0xff] %v2256
    %3786 = vst [vmem:[#allocation5 + $0x1598] sm:$0xff] %v2512
    %3787 = vst [vmem:[#allocation5 + $0x15a0] sm:$0xff] %v2257
    %3788 = vst [vmem:[#allocation5 + $0x15a8] sm:$0xff] %v2513
    %3789 = vst [vmem:[#allocation5 + $0x15b0] sm:$0xff] %v2258
    %3790 = vst [vmem:[#allocation5 + $0x15b8] sm:$0xff] %v2514
    %3791 = vst [vmem:[#allocation5 + $0x15c0] sm:$0xff] %v2259
    %3792 = vst [vmem:[#allocation5 + $0x15c8] sm:$0xff] %v2515
    %3793 = vst [vmem:[#allocation5 + $0x15d0] sm:$0xff] %v2260
    %3794 = vst [vmem:[#allocation5 + $0x15d8] sm:$0xff] %v2516
    %3795 = vst [vmem:[#allocation5 + $0x15e0] sm:$0xff] %v2261
    %3796 = vst [vmem:[#allocation5 + $0x15e8] sm:$0xff] %v2517
    %3797 = vst [vmem:[#allocation5 + $0x15f0] sm:$0xff] %v2262
    %3798 = vst [vmem:[#allocation5 + $0x15f8] sm:$0xff] %v2518
    %3799 = vst [vmem:[#allocation5 + $0x1600] sm:$0xff] %v2279
    %3800 = vst [vmem:[#allocation5 + $0x1608] sm:$0xff] %v2535
    %3801 = vst [vmem:[#allocation5 + $0x1610] sm:$0xff] %v2280
    %3802 = vst [vmem:[#allocation5 + $0x1618] sm:$0xff] %v2536
    %3803 = vst [vmem:[#allocation5 + $0x1620] sm:$0xff] %v2281
    %3804 = vst [vmem:[#allocation5 + $0x1628] sm:$0xff] %v2537
    %3805 = vst [vmem:[#allocation5 + $0x1630] sm:$0xff] %v2282
    %3806 = vst [vmem:[#allocation5 + $0x1638] sm:$0xff] %v2538
    %3807 = vst [vmem:[#allocation5 + $0x1640] sm:$0xff] %v2283
    %3808 = vst [vmem:[#allocation5 + $0x1648] sm:$0xff] %v2539
    %3809 = vst [vmem:[#allocation5 + $0x1650] sm:$0xff] %v2284
    %3810 = vst [vmem:[#allocation5 + $0x1658] sm:$0xff] %v2540
    %3811 = vst [vmem:[#allocation5 + $0x1660] sm:$0xff] %v2285
    %3812 = vst [vmem:[#allocation5 + $0x1668] sm:$0xff] %v2541
    %3813 = vst [vmem:[#allocation5 + $0x1670] sm:$0xff] %v2286
    %3814 = vst [vmem:[#allocation5 + $0x1678] sm:$0xff] %v2542
    %3815 = vst [vmem:[#allocation5 + $0x1680] sm:$0xff] %v2287
    %3816 = vst [vmem:[#allocation5 + $0x1688] sm:$0xff] %v2543
    %3817 = vst [vmem:[#allocation5 + $0x1690] sm:$0xff] %v2288
    %3818 = vst [vmem:[#allocation5 + $0x1698] sm:$0xff] %v2544
    %3819 = vst [vmem:[#allocation5 + $0x16a0] sm:$0xff] %v2289
    %3820 = vst [vmem:[#allocation5 + $0x16a8] sm:$0xff] %v2545
    %3821 = vst [vmem:[#allocation5 + $0x16b0] sm:$0xff] %v2290
    %3822 = vst [vmem:[#allocation5 + $0x16b8] sm:$0xff] %v2546
    %3823 = vst [vmem:[#allocation5 + $0x16c0] sm:$0xff] %v2291
    %3824 = vst [vmem:[#allocation5 + $0x16c8] sm:$0xff] %v2547
    %3825 = vst [vmem:[#allocation5 + $0x16d0] sm:$0xff] %v2292
    %3826 = vst [vmem:[#allocation5 + $0x16d8] sm:$0xff] %v2548
    %3827 = vst [vmem:[#allocation5 + $0x16e0] sm:$0xff] %v2293
    %3828 = vst [vmem:[#allocation5 + $0x16e8] sm:$0xff] %v2549
    %3829 = vst [vmem:[#allocation5 + $0x16f0] sm:$0xff] %v2294
    %3830 = vst [vmem:[#allocation5 + $0x16f8] sm:$0xff] %v2550
    %3831 = vst [vmem:[#allocation5 + $0x1700] sm:$0xff] %v2311
    %3832 = vst [vmem:[#allocation5 + $0x1708] sm:$0xff] %v2567
    %3833 = vst [vmem:[#allocation5 + $0x1710] sm:$0xff] %v2312
    %3834 = vst [vmem:[#allocation5 + $0x1718] sm:$0xff] %v2568
    %3835 = vst [vmem:[#allocation5 + $0x1720] sm:$0xff] %v2313
    %3836 = vst [vmem:[#allocation5 + $0x1728] sm:$0xff] %v2569
    %3837 = vst [vmem:[#allocation5 + $0x1730] sm:$0xff] %v2314
    %3838 = vst [vmem:[#allocation5 + $0x1738] sm:$0xff] %v2570
    %3839 = vst [vmem:[#allocation5 + $0x1740] sm:$0xff] %v2315
    %3840 = vst [vmem:[#allocation5 + $0x1748] sm:$0xff] %v2571
    %3841 = vst [vmem:[#allocation5 + $0x1750] sm:$0xff] %v2316
    %3842 = vst [vmem:[#allocation5 + $0x1758] sm:$0xff] %v2572
    %3843 = vst [vmem:[#allocation5 + $0x1760] sm:$0xff] %v2317
    %3844 = vst [vmem:[#allocation5 + $0x1768] sm:$0xff] %v2573
    %3845 = vst [vmem:[#allocation5 + $0x1770] sm:$0xff] %v2318
    %3846 = vst [vmem:[#allocation5 + $0x1778] sm:$0xff] %v2574
    %3847 = vst [vmem:[#allocation5 + $0x1780] sm:$0xff] %v2319
    %3848 = vst [vmem:[#allocation5 + $0x1788] sm:$0xff] %v2575
    %3849 = vst [vmem:[#allocation5 + $0x1790] sm:$0xff] %v2320
    %3850 = vst [vmem:[#allocation5 + $0x1798] sm:$0xff] %v2576
    %3851 = vst [vmem:[#allocation5 + $0x17a0] sm:$0xff] %v2321
    %3852 = vst [vmem:[#allocation5 + $0x17a8] sm:$0xff] %v2577
    %3853 = vst [vmem:[#allocation5 + $0x17b0] sm:$0xff] %v2322
    %3854 = vst [vmem:[#allocation5 + $0x17b8] sm:$0xff] %v2578
    %3855 = vst [vmem:[#allocation5 + $0x17c0] sm:$0xff] %v2323
    %3856 = vst [vmem:[#allocation5 + $0x17c8] sm:$0xff] %v2579
    %3857 = vst [vmem:[#allocation5 + $0x17d0] sm:$0xff] %v2324
    %3858 = vst [vmem:[#allocation5 + $0x17d8] sm:$0xff] %v2580
    %3859 = vst [vmem:[#allocation5 + $0x17e0] sm:$0xff] %v2325
    %3860 = vst [vmem:[#allocation5 + $0x17e8] sm:$0xff] %v2581
    %3861 = vst [vmem:[#allocation5 + $0x17f0] sm:$0xff] %v2326
    %3862 = vst [vmem:[#allocation5 + $0x17f8] sm:$0xff] %v2582
    %3863 = vst [vmem:[#allocation5 + $0x1800] sm:$0xff] %v2599
    %3864 = vst [vmem:[#allocation5 + $0x1808] sm:$0xff] %v2855
    %3865 = vst [vmem:[#allocation5 + $0x1810] sm:$0xff] %v2600
    %3866 = vst [vmem:[#allocation5 + $0x1818] sm:$0xff] %v2856
    %3867 = vst [vmem:[#allocation5 + $0x1820] sm:$0xff] %v2601
    %3868 = vst [vmem:[#allocation5 + $0x1828] sm:$0xff] %v2857
    %3869 = vst [vmem:[#allocation5 + $0x1830] sm:$0xff] %v2602
    %3870 = vst [vmem:[#allocation5 + $0x1838] sm:$0xff] %v2858
    %3871 = vst [vmem:[#allocation5 + $0x1840] sm:$0xff] %v2603
    %3872 = vst [vmem:[#allocation5 + $0x1848] sm:$0xff] %v2859
    %3873 = vst [vmem:[#allocation5 + $0x1850] sm:$0xff] %v2604
    %3874 = vst [vmem:[#allocation5 + $0x1858] sm:$0xff] %v2860
    %3875 = vst [vmem:[#allocation5 + $0x1860] sm:$0xff] %v2605
    %3876 = vst [vmem:[#allocation5 + $0x1868] sm:$0xff] %v2861
    %3877 = vst [vmem:[#allocation5 + $0x1870] sm:$0xff] %v2606
    %3878 = vst [vmem:[#allocation5 + $0x1878] sm:$0xff] %v2862
    %3879 = vst [vmem:[#allocation5 + $0x1880] sm:$0xff] %v2607
    %3880 = vst [vmem:[#allocation5 + $0x1888] sm:$0xff] %v2863
    %3881 = vst [vmem:[#allocation5 + $0x1890] sm:$0xff] %v2608
    %3882 = vst [vmem:[#allocation5 + $0x1898] sm:$0xff] %v2864
    %3883 = vst [vmem:[#allocation5 + $0x18a0] sm:$0xff] %v2609
    %3884 = vst [vmem:[#allocation5 + $0x18a8] sm:$0xff] %v2865
    %3885 = vst [vmem:[#allocation5 + $0x18b0] sm:$0xff] %v2610
    %3886 = vst [vmem:[#allocation5 + $0x18b8] sm:$0xff] %v2866
    %3887 = vst [vmem:[#allocation5 + $0x18c0] sm:$0xff] %v2611
    %3888 = vst [vmem:[#allocation5 + $0x18c8] sm:$0xff] %v2867
    %3889 = vst [vmem:[#allocation5 + $0x18d0] sm:$0xff] %v2612
    %3890 = vst [vmem:[#allocation5 + $0x18d8] sm:$0xff] %v2868
    %3891 = vst [vmem:[#allocation5 + $0x18e0] sm:$0xff] %v2613
    %3892 = vst [vmem:[#allocation5 + $0x18e8] sm:$0xff] %v2869
    %3893 = vst [vmem:[#allocation5 + $0x18f0] sm:$0xff] %v2614
    %3894 = vst [vmem:[#allocation5 + $0x18f8] sm:$0xff] %v2870
    %3895 = vst [vmem:[#allocation5 + $0x1900] sm:$0xff] %v2631
    %3896 = vst [vmem:[#allocation5 + $0x1908] sm:$0xff] %v2887
    %3897 = vst [vmem:[#allocation5 + $0x1910] sm:$0xff] %v2632
    %3898 = vst [vmem:[#allocation5 + $0x1918] sm:$0xff] %v2888
    %3899 = vst [vmem:[#allocation5 + $0x1920] sm:$0xff] %v2633
    %3900 = vst [vmem:[#allocation5 + $0x1928] sm:$0xff] %v2889
    %3901 = vst [vmem:[#allocation5 + $0x1930] sm:$0xff] %v2634
    %3902 = vst [vmem:[#allocation5 + $0x1938] sm:$0xff] %v2890
    %3903 = vst [vmem:[#allocation5 + $0x1940] sm:$0xff] %v2635
    %3904 = vst [vmem:[#allocation5 + $0x1948] sm:$0xff] %v2891
    %3905 = vst [vmem:[#allocation5 + $0x1950] sm:$0xff] %v2636
    %3906 = vst [vmem:[#allocation5 + $0x1958] sm:$0xff] %v2892
    %3907 = vst [vmem:[#allocation5 + $0x1960] sm:$0xff] %v2637
    %3908 = vst [vmem:[#allocation5 + $0x1968] sm:$0xff] %v2893
    %3909 = vst [vmem:[#allocation5 + $0x1970] sm:$0xff] %v2638
    %3910 = vst [vmem:[#allocation5 + $0x1978] sm:$0xff] %v2894
    %3911 = vst [vmem:[#allocation5 + $0x1980] sm:$0xff] %v2639
    %3912 = vst [vmem:[#allocation5 + $0x1988] sm:$0xff] %v2895
    %3913 = vst [vmem:[#allocation5 + $0x1990] sm:$0xff] %v2640
    %3914 = vst [vmem:[#allocation5 + $0x1998] sm:$0xff] %v2896
    %3915 = vst [vmem:[#allocation5 + $0x19a0] sm:$0xff] %v2641
    %3916 = vst [vmem:[#allocation5 + $0x19a8] sm:$0xff] %v2897
    %3917 = vst [vmem:[#allocation5 + $0x19b0] sm:$0xff] %v2642
    %3918 = vst [vmem:[#allocation5 + $0x19b8] sm:$0xff] %v2898
    %3919 = vst [vmem:[#allocation5 + $0x19c0] sm:$0xff] %v2643
    %3920 = vst [vmem:[#allocation5 + $0x19c8] sm:$0xff] %v2899
    %3921 = vst [vmem:[#allocation5 + $0x19d0] sm:$0xff] %v2644
    %3922 = vst [vmem:[#allocation5 + $0x19d8] sm:$0xff] %v2900
    %3923 = vst [vmem:[#allocation5 + $0x19e0] sm:$0xff] %v2645
    %3924 = vst [vmem:[#allocation5 + $0x19e8] sm:$0xff] %v2901
    %3925 = vst [vmem:[#allocation5 + $0x19f0] sm:$0xff] %v2646
    %3926 = vst [vmem:[#allocation5 + $0x19f8] sm:$0xff] %v2902
    %3927 = vst [vmem:[#allocation5 + $0x1a00] sm:$0xff] %v2663
    %3928 = vst [vmem:[#allocation5 + $0x1a08] sm:$0xff] %v2919
    %3929 = vst [vmem:[#allocation5 + $0x1a10] sm:$0xff] %v2664
    %3930 = vst [vmem:[#allocation5 + $0x1a18] sm:$0xff] %v2920
    %3931 = vst [vmem:[#allocation5 + $0x1a20] sm:$0xff] %v2665
    %3932 = vst [vmem:[#allocation5 + $0x1a28] sm:$0xff] %v2921
    %3933 = vst [vmem:[#allocation5 + $0x1a30] sm:$0xff] %v2666
    %3934 = vst [vmem:[#allocation5 + $0x1a38] sm:$0xff] %v2922
    %3935 = vst [vmem:[#allocation5 + $0x1a40] sm:$0xff] %v2667
    %3936 = vst [vmem:[#allocation5 + $0x1a48] sm:$0xff] %v2923
    %3937 = vst [vmem:[#allocation5 + $0x1a50] sm:$0xff] %v2668
    %3938 = vst [vmem:[#allocation5 + $0x1a58] sm:$0xff] %v2924
    %3939 = vst [vmem:[#allocation5 + $0x1a60] sm:$0xff] %v2669
    %3940 = vst [vmem:[#allocation5 + $0x1a68] sm:$0xff] %v2925
    %3941 = vst [vmem:[#allocation5 + $0x1a70] sm:$0xff] %v2670
    %3942 = vst [vmem:[#allocation5 + $0x1a78] sm:$0xff] %v2926
    %3943 = vst [vmem:[#allocation5 + $0x1a80] sm:$0xff] %v2671
    %3944 = vst [vmem:[#allocation5 + $0x1a88] sm:$0xff] %v2927
    %3945 = vst [vmem:[#allocation5 + $0x1a90] sm:$0xff] %v2672
    %3946 = vst [vmem:[#allocation5 + $0x1a98] sm:$0xff] %v2928
    %3947 = vst [vmem:[#allocation5 + $0x1aa0] sm:$0xff] %v2673
    %3948 = vst [vmem:[#allocation5 + $0x1aa8] sm:$0xff] %v2929
    %3949 = vst [vmem:[#allocation5 + $0x1ab0] sm:$0xff] %v2674
    %3950 = vst [vmem:[#allocation5 + $0x1ab8] sm:$0xff] %v2930
    %3951 = vst [vmem:[#allocation5 + $0x1ac0] sm:$0xff] %v2675
    %3952 = vst [vmem:[#allocation5 + $0x1ac8] sm:$0xff] %v2931
    %3953 = vst [vmem:[#allocation5 + $0x1ad0] sm:$0xff] %v2676
    %3954 = vst [vmem:[#allocation5 + $0x1ad8] sm:$0xff] %v2932
    %3955 = vst [vmem:[#allocation5 + $0x1ae0] sm:$0xff] %v2677
    %3956 = vst [vmem:[#allocation5 + $0x1ae8] sm:$0xff] %v2933
    %3957 = vst [vmem:[#allocation5 + $0x1af0] sm:$0xff] %v2678
    %3958 = vst [vmem:[#allocation5 + $0x1af8] sm:$0xff] %v2934
    %3959 = vst [vmem:[#allocation5 + $0x1b00] sm:$0xff] %v2695
    %3960 = vst [vmem:[#allocation5 + $0x1b08] sm:$0xff] %v2951
    %3961 = vst [vmem:[#allocation5 + $0x1b10] sm:$0xff] %v2696
    %3962 = vst [vmem:[#allocation5 + $0x1b18] sm:$0xff] %v2952
    %3963 = vst [vmem:[#allocation5 + $0x1b20] sm:$0xff] %v2697
    %3964 = vst [vmem:[#allocation5 + $0x1b28] sm:$0xff] %v2953
    %3965 = vst [vmem:[#allocation5 + $0x1b30] sm:$0xff] %v2698
    %3966 = vst [vmem:[#allocation5 + $0x1b38] sm:$0xff] %v2954
    %3967 = vst [vmem:[#allocation5 + $0x1b40] sm:$0xff] %v2699
    %3968 = vst [vmem:[#allocation5 + $0x1b48] sm:$0xff] %v2955
    %3969 = vst [vmem:[#allocation5 + $0x1b50] sm:$0xff] %v2700
    %3970 = vst [vmem:[#allocation5 + $0x1b58] sm:$0xff] %v2956
    %3971 = vst [vmem:[#allocation5 + $0x1b60] sm:$0xff] %v2701
    %3972 = vst [vmem:[#allocation5 + $0x1b68] sm:$0xff] %v2957
    %3973 = vst [vmem:[#allocation5 + $0x1b70] sm:$0xff] %v2702
    %3974 = vst [vmem:[#allocation5 + $0x1b78] sm:$0xff] %v2958
    %3975 = vst [vmem:[#allocation5 + $0x1b80] sm:$0xff] %v2703
    %3976 = vst [vmem:[#allocation5 + $0x1b88] sm:$0xff] %v2959
    %3977 = vst [vmem:[#allocation5 + $0x1b90] sm:$0xff] %v2704
    %3978 = vst [vmem:[#allocation5 + $0x1b98] sm:$0xff] %v2960
    %3979 = vst [vmem:[#allocation5 + $0x1ba0] sm:$0xff] %v2705
    %3980 = vst [vmem:[#allocation5 + $0x1ba8] sm:$0xff] %v2961
    %3981 = vst [vmem:[#allocation5 + $0x1bb0] sm:$0xff] %v2706
    %3982 = vst [vmem:[#allocation5 + $0x1bb8] sm:$0xff] %v2962
    %3983 = vst [vmem:[#allocation5 + $0x1bc0] sm:$0xff] %v2707
    %3984 = vst [vmem:[#allocation5 + $0x1bc8] sm:$0xff] %v2963
    %3985 = vst [vmem:[#allocation5 + $0x1bd0] sm:$0xff] %v2708
    %3986 = vst [vmem:[#allocation5 + $0x1bd8] sm:$0xff] %v2964
    %3987 = vst [vmem:[#allocation5 + $0x1be0] sm:$0xff] %v2709
    %3988 = vst [vmem:[#allocation5 + $0x1be8] sm:$0xff] %v2965
    %3989 = vst [vmem:[#allocation5 + $0x1bf0] sm:$0xff] %v2710
    %3990 = vst [vmem:[#allocation5 + $0x1bf8] sm:$0xff] %v2966
    %3991 = vst [vmem:[#allocation5 + $0x1c00] sm:$0xff] %v2727
    %3992 = vst [vmem:[#allocation5 + $0x1c08] sm:$0xff] %v2983
    %3993 = vst [vmem:[#allocation5 + $0x1c10] sm:$0xff] %v2728
    %3994 = vst [vmem:[#allocation5 + $0x1c18] sm:$0xff] %v2984
    %3995 = vst [vmem:[#allocation5 + $0x1c20] sm:$0xff] %v2729
    %3996 = vst [vmem:[#allocation5 + $0x1c28] sm:$0xff] %v2985
    %3997 = vst [vmem:[#allocation5 + $0x1c30] sm:$0xff] %v2730
    %3998 = vst [vmem:[#allocation5 + $0x1c38] sm:$0xff] %v2986
    %3999 = vst [vmem:[#allocation5 + $0x1c40] sm:$0xff] %v2731
    %4000 = vst [vmem:[#allocation5 + $0x1c48] sm:$0xff] %v2987
    %4001 = vst [vmem:[#allocation5 + $0x1c50] sm:$0xff] %v2732
    %4002 = vst [vmem:[#allocation5 + $0x1c58] sm:$0xff] %v2988
    %4003 = vst [vmem:[#allocation5 + $0x1c60] sm:$0xff] %v2733
    %4004 = vst [vmem:[#allocation5 + $0x1c68] sm:$0xff] %v2989
    %4005 = vst [vmem:[#allocation5 + $0x1c70] sm:$0xff] %v2734
    %4006 = vst [vmem:[#allocation5 + $0x1c78] sm:$0xff] %v2990
    %4007 = vst [vmem:[#allocation5 + $0x1c80] sm:$0xff] %v2735
    %4008 = vst [vmem:[#allocation5 + $0x1c88] sm:$0xff] %v2991
    %4009 = vst [vmem:[#allocation5 + $0x1c90] sm:$0xff] %v2736
    %4010 = vst [vmem:[#allocation5 + $0x1c98] sm:$0xff] %v2992
    %4011 = vst [vmem:[#allocation5 + $0x1ca0] sm:$0xff] %v2737
    %4012 = vst [vmem:[#allocation5 + $0x1ca8] sm:$0xff] %v2993
    %4013 = vst [vmem:[#allocation5 + $0x1cb0] sm:$0xff] %v2738
    %4014 = vst [vmem:[#allocation5 + $0x1cb8] sm:$0xff] %v2994
    %4015 = vst [vmem:[#allocation5 + $0x1cc0] sm:$0xff] %v2739
    %4016 = vst [vmem:[#allocation5 + $0x1cc8] sm:$0xff] %v2995
    %4017 = vst [vmem:[#allocation5 + $0x1cd0] sm:$0xff] %v2740
    %4018 = vst [vmem:[#allocation5 + $0x1cd8] sm:$0xff] %v2996
    %4019 = vst [vmem:[#allocation5 + $0x1ce0] sm:$0xff] %v2741
    %4020 = vst [vmem:[#allocation5 + $0x1ce8] sm:$0xff] %v2997
    %4021 = vst [vmem:[#allocation5 + $0x1cf0] sm:$0xff] %v2742
    %4022 = vst [vmem:[#allocation5 + $0x1cf8] sm:$0xff] %v2998
    %4023 = vst [vmem:[#allocation5 + $0x1d00] sm:$0xff] %v2759
    %4024 = vst [vmem:[#allocation5 + $0x1d08] sm:$0xff] %v3015
    %4025 = vst [vmem:[#allocation5 + $0x1d10] sm:$0xff] %v2760
    %4026 = vst [vmem:[#allocation5 + $0x1d18] sm:$0xff] %v3016
    %4027 = vst [vmem:[#allocation5 + $0x1d20] sm:$0xff] %v2761
    %4028 = vst [vmem:[#allocation5 + $0x1d28] sm:$0xff] %v3017
    %4029 = vst [vmem:[#allocation5 + $0x1d30] sm:$0xff] %v2762
    %4030 = vst [vmem:[#allocation5 + $0x1d38] sm:$0xff] %v3018
    %4031 = vst [vmem:[#allocation5 + $0x1d40] sm:$0xff] %v2763
    %4032 = vst [vmem:[#allocation5 + $0x1d48] sm:$0xff] %v3019
    %4033 = vst [vmem:[#allocation5 + $0x1d50] sm:$0xff] %v2764
    %4034 = vst [vmem:[#allocation5 + $0x1d58] sm:$0xff] %v3020
    %4035 = vst [vmem:[#allocation5 + $0x1d60] sm:$0xff] %v2765
    %4036 = vst [vmem:[#allocation5 + $0x1d68] sm:$0xff] %v3021
    %4037 = vst [vmem:[#allocation5 + $0x1d70] sm:$0xff] %v2766
    %4038 = vst [vmem:[#allocation5 + $0x1d78] sm:$0xff] %v3022
    %4039 = vst [vmem:[#allocation5 + $0x1d80] sm:$0xff] %v2767
    %4040 = vst [vmem:[#allocation5 + $0x1d88] sm:$0xff] %v3023
    %4041 = vst [vmem:[#allocation5 + $0x1d90] sm:$0xff] %v2768
    %4042 = vst [vmem:[#allocation5 + $0x1d98] sm:$0xff] %v3024
    %4043 = vst [vmem:[#allocation5 + $0x1da0] sm:$0xff] %v2769
    %4044 = vst [vmem:[#allocation5 + $0x1da8] sm:$0xff] %v3025
    %4045 = vst [vmem:[#allocation5 + $0x1db0] sm:$0xff] %v2770
    %4046 = vst [vmem:[#allocation5 + $0x1db8] sm:$0xff] %v3026
    %4047 = vst [vmem:[#allocation5 + $0x1dc0] sm:$0xff] %v2771
    %4048 = vst [vmem:[#allocation5 + $0x1dc8] sm:$0xff] %v3027
    %4049 = vst [vmem:[#allocation5 + $0x1dd0] sm:$0xff] %v2772
    %4050 = vst [vmem:[#allocation5 + $0x1dd8] sm:$0xff] %v3028
    %4051 = vst [vmem:[#allocation5 + $0x1de0] sm:$0xff] %v2773
    %4052 = vst [vmem:[#allocation5 + $0x1de8] sm:$0xff] %v3029
    %4053 = vst [vmem:[#allocation5 + $0x1df0] sm:$0xff] %v2774
    %4054 = vst [vmem:[#allocation5 + $0x1df8] sm:$0xff] %v3030
    %4055 = vst [vmem:[#allocation5 + $0x1e00] sm:$0xff] %v2791
    %4056 = vst [vmem:[#allocation5 + $0x1e08] sm:$0xff] %v3047
    %4057 = vst [vmem:[#allocation5 + $0x1e10] sm:$0xff] %v2792
    %4058 = vst [vmem:[#allocation5 + $0x1e18] sm:$0xff] %v3048
    %4059 = vst [vmem:[#allocation5 + $0x1e20] sm:$0xff] %v2793
    %4060 = vst [vmem:[#allocation5 + $0x1e28] sm:$0xff] %v3049
    %4061 = vst [vmem:[#allocation5 + $0x1e30] sm:$0xff] %v2794
    %4062 = vst [vmem:[#allocation5 + $0x1e38] sm:$0xff] %v3050
    %4063 = vst [vmem:[#allocation5 + $0x1e40] sm:$0xff] %v2795
    %4064 = vst [vmem:[#allocation5 + $0x1e48] sm:$0xff] %v3051
    %4065 = vst [vmem:[#allocation5 + $0x1e50] sm:$0xff] %v2796
    %4066 = vst [vmem:[#allocation5 + $0x1e58] sm:$0xff] %v3052
    %4067 = vst [vmem:[#allocation5 + $0x1e60] sm:$0xff] %v2797
    %4068 = vst [vmem:[#allocation5 + $0x1e68] sm:$0xff] %v3053
    %4069 = vst [vmem:[#allocation5 + $0x1e70] sm:$0xff] %v2798
    %4070 = vst [vmem:[#allocation5 + $0x1e78] sm:$0xff] %v3054
    %4071 = vst [vmem:[#allocation5 + $0x1e80] sm:$0xff] %v2799
    %4072 = vst [vmem:[#allocation5 + $0x1e88] sm:$0xff] %v3055
    %4073 = vst [vmem:[#allocation5 + $0x1e90] sm:$0xff] %v2800
    %4074 = vst [vmem:[#allocation5 + $0x1e98] sm:$0xff] %v3056
    %4075 = vst [vmem:[#allocation5 + $0x1ea0] sm:$0xff] %v2801
    %4076 = vst [vmem:[#allocation5 + $0x1ea8] sm:$0xff] %v3057
    %4077 = vst [vmem:[#allocation5 + $0x1eb0] sm:$0xff] %v2802
    %4078 = vst [vmem:[#allocation5 + $0x1eb8] sm:$0xff] %v3058
    %4079 = vst [vmem:[#allocation5 + $0x1ec0] sm:$0xff] %v2803
    %4080 = vst [vmem:[#allocation5 + $0x1ec8] sm:$0xff] %v3059
    %4081 = vst [vmem:[#allocation5 + $0x1ed0] sm:$0xff] %v2804
    %4082 = vst [vmem:[#allocation5 + $0x1ed8] sm:$0xff] %v3060
    %4083 = vst [vmem:[#allocation5 + $0x1ee0] sm:$0xff] %v2805
    %4084 = vst [vmem:[#allocation5 + $0x1ee8] sm:$0xff] %v3061
    %4085 = vst [vmem:[#allocation5 + $0x1ef0] sm:$0xff] %v2806
    %4086 = vst [vmem:[#allocation5 + $0x1ef8] sm:$0xff] %v3062
    %4087 = vst [vmem:[#allocation5 + $0x1f00] sm:$0xff] %v2823
    %4088 = vst [vmem:[#allocation5 + $0x1f08] sm:$0xff] %v3079
    %4089 = vst [vmem:[#allocation5 + $0x1f10] sm:$0xff] %v2824
    %4090 = vst [vmem:[#allocation5 + $0x1f18] sm:$0xff] %v3080
    %4091 = vst [vmem:[#allocation5 + $0x1f20] sm:$0xff] %v2825
    %4092 = vst [vmem:[#allocation5 + $0x1f28] sm:$0xff] %v3081
    %4093 = vst [vmem:[#allocation5 + $0x1f30] sm:$0xff] %v2826
    %4094 = vst [vmem:[#allocation5 + $0x1f38] sm:$0xff] %v3082
    %4095 = vst [vmem:[#allocation5 + $0x1f40] sm:$0xff] %v2827
    %4096 = vst [vmem:[#allocation5 + $0x1f48] sm:$0xff] %v3083
    %4097 = vst [vmem:[#allocation5 + $0x1f50] sm:$0xff] %v2828
    %4098 = vst [vmem:[#allocation5 + $0x1f58] sm:$0xff] %v3084
    %4099 = vst [vmem:[#allocation5 + $0x1f60] sm:$0xff] %v2829
    %4100 = vst [vmem:[#allocation5 + $0x1f68] sm:$0xff] %v3085
    %4101 = vst [vmem:[#allocation5 + $0x1f70] sm:$0xff] %v2830
    %4102 = vst [vmem:[#allocation5 + $0x1f78] sm:$0xff] %v3086
    %4103 = vst [vmem:[#allocation5 + $0x1f80] sm:$0xff] %v2831
    %4104 = vst [vmem:[#allocation5 + $0x1f88] sm:$0xff] %v3087
    %4105 = vst [vmem:[#allocation5 + $0x1f90] sm:$0xff] %v2832
    %4106 = vst [vmem:[#allocation5 + $0x1f98] sm:$0xff] %v3088
    %4107 = vst [vmem:[#allocation5 + $0x1fa0] sm:$0xff] %v2833
    %4108 = vst [vmem:[#allocation5 + $0x1fa8] sm:$0xff] %v3089
    %4109 = vst [vmem:[#allocation5 + $0x1fb0] sm:$0xff] %v2834
    %4110 = vst [vmem:[#allocation5 + $0x1fb8] sm:$0xff] %v3090
    %4111 = vst [vmem:[#allocation5 + $0x1fc0] sm:$0xff] %v2835
    %4112 = vst [vmem:[#allocation5 + $0x1fc8] sm:$0xff] %v3091
    %4113 = vst [vmem:[#allocation5 + $0x1fd0] sm:$0xff] %v2836
    %4114 = vst [vmem:[#allocation5 + $0x1fd8] sm:$0xff] %v3092
    %4115 = vst [vmem:[#allocation5 + $0x1fe0] sm:$0xff] %v2837
    %4116 = vst [vmem:[#allocation5 + $0x1fe8] sm:$0xff] %v3093
    %4117 = vst [vmem:[#allocation5 + $0x1ff0] sm:$0xff] %v2838
    %4118 = vst [vmem:[#allocation5 + $0x1ff8] sm:$0xff] %v3094
    // Predicated region
    $region10: #{tpu_custom_call.1} parent=1 // pred_check
      _
    $region11: #{tpu_custom_call.1} parent=1 // pred_check_branch
      %4120 = sbr.rel (0) target = $region13
    $region12: #{tpu_custom_call.1} parent=1 // pred_region
      %s4122 = ssub.s32 131072, 131072
      %4123 = vsyncadd [#allocation4], %s4122
      %s4124 = sshll.u32 [#allocation5], 4
      %s4125 = int_to_ptr.vmem [resolvable:$true] %s4124
      %4130 = dma.vmem_to_hbm [thread:$0]  %s4125, 131072, %s1, [#allocation4], 256, 256, 16
    $region13: #{tpu_custom_call.1} parent=1 // pred_fallthru
      _
    // Predicated region
    $region14: #{tpu_custom_call.1} parent=1 // pred_check
      _
    $region15: #{tpu_custom_call.1} parent=1 // pred_check_branch
      %4132 = sbr.rel (0) target = $region17
    $region16: #{tpu_custom_call.1} parent=1 // pred_region
      %4133 = dma.done [#allocation4], 131072
    $region17: #{tpu_custom_call.1} parent=1 // pred_fallthru
      _
    %4134 = vsyncpa [#allocation3], 1
    %4135 = vsyncpa [#allocation4], 1

</llo_original>
